<compile_context>
chip_gen: v5e
topology: v5e:2x2
jax: 0.10.0
libtpu: 0.0.40
codegen_flags: <defaults>
</compile_context>

<pallas_src>
import jax
import jax.numpy as jnp
from jax.experimental import pallas as pl
from jax.experimental.pallas import tpu as pltpu

BN_EPS = 1e-5
LANE = 128


def _round_up(x, m):
    return (x + m - 1) // m * m


# ----------------------------------------------------------------------------
# Kernel 1: f32 matmul + bias epilogue (p_conv, the 3x3 pad=1 offset conv).
# Kept f32 so sampling coordinates match an f32 reference (tiny matmul).
# ----------------------------------------------------------------------------
def _matmul_bias_kernel(a_ref, w_ref, b_ref, o_ref):
    o_ref[...] = (
        jnp.dot(a_ref[...], w_ref[...], preferred_element_type=jnp.float32)
        + b_ref[...]
    )


def matmul_bias(a, w, bias):
    """a: (M, K) f32, w: (K, N) f32, bias: (1, N) f32 -> (M, N) f32.
    K and N must be lane-aligned (multiples of 128)."""
    M, K = a.shape
    K2, N = w.shape
    assert K == K2 and bias.shape == (1, N)
    tm = min(256, _round_up(M, 8))
    Mp = _round_up(M, tm)
    if Mp != M:
        a = jnp.pad(a, ((0, Mp - M), (0, 0)))
    out = pl.pallas_call(
        _matmul_bias_kernel,
        out_shape=jax.ShapeDtypeStruct((Mp, N), jnp.float32),
        grid=(Mp // tm,),
        in_specs=[
            pl.BlockSpec((tm, K), lambda i: (i, 0)),
            pl.BlockSpec((K, N), lambda i: (0, 0)),
            pl.BlockSpec((1, N), lambda i: (0, 0)),
        ],
        out_specs=pl.BlockSpec((tm, N), lambda i: (i, 0)),
        compiler_params=pltpu.CompilerParams(dimension_semantics=("parallel",)),
    )(a, w, bias)
    return out[:M] if Mp != M else out


# ----------------------------------------------------------------------------
# Kernel 2: fused deformable gather (as MXU matmul) + main-conv tap + BN stats.
# grid = (B, N_taps): image axis "parallel" (megacore), tap axis "arbitrary".
# Transposed layout: channels on sublanes, H*W on lanes (all loads/stores are
# lane-dense).
# ----------------------------------------------------------------------------
def _deform_conv_kernel(xT_ref, g_ref, idx_ref, w_ref,
                        y_ref, sum_ref, sq_ref, acc_ref):
    # xT_ref:  (1, Cp, HW)    f32   image, channel rows zero-padded to 128
    # g_ref:   (1, 1, 4, HW)  f32   bilinear weights of the 4 corners, this tap
    # idx_ref: (1, 1, 4, HW)  i32   clamped linear corner indices into HW
    # w_ref:   (1, OCp, Cp)   bf16  main-conv weight for this tap
    # y_ref:   (1, OCp, HW)   f32   raw conv output (written at last tap)
    # sum_ref: (1, OCp, 1)    f32   per-channel sum over HW (BN batch stats)
    # sq_ref:  (1, OCp, 1)    f32   per-channel sum of squares over HW
    # acc_ref: (OCp, HW)      f32   VMEM accumulator (persists across taps)
    n = pl.program_id(1)
    hw = xT_ref.shape[2]

    @pl.when(n == 0)
    def _():
        acc_ref[...] = jnp.zeros_like(acc_ref)

    # One-hot interpolation matrix, transposed:
    #   S_T[q, m] = sum_k g_k[m] * (q == idx_k[m])
    # idx/g rows are lane-dense; broadcasting them along the sublane (q) axis is
    # the cheap direction.
    row = jax.lax.broadcasted_iota(jnp.int32, (hw, hw), 0)
    g = g_ref[0, 0]        # (4, HW) f32
    idx = idx_ref[0, 0]    # (4, HW) i32
    s_t = jnp.zeros((hw, hw), jnp.float32)
    for k in range(4):
        s_t = s_t + jnp.where(row == idx[k:k + 1, :], g[k:k + 1, :], 0.0)

    # Gather-as-matmul (bf16 operands, f32 accumulation):
    #   xo_T[c, m] = sum_q x_T[c, q] * S_T[q, m]
    xo_t = jnp.dot(xT_ref[0].astype(jnp.bfloat16), s_t.astype(jnp.bfloat16),
                   preferred_element_type=jnp.float32)            # (Cp, HW)
    # Conv tap: acc[oc, m] += sum_c w[oc, c] * xo_T[c, m]
    acc_ref[...] += jnp.dot(w_ref[0], xo_t.astype(jnp.bfloat16),
                            preferred_element_type=jnp.float32)   # (OCp, HW)

    @pl.when(n == pl.num_programs(1) - 1)
    def _():
        acc = acc_ref[...]
        y_ref[0] = acc
        sum_ref[0] = jnp.sum(acc, axis=1, keepdims=True)
        sq_ref[0] = jnp.sum(acc * acc, axis=1, keepdims=True)


# ----------------------------------------------------------------------------
# Kernel 3: fused BatchNorm (precomputed per-channel scale/shift) + ReLU.
# ----------------------------------------------------------------------------
def _scale_shift_relu_kernel(y_ref, scale_ref, shift_ref, o_ref):
    o_ref[0] = jnp.maximum(y_ref[0] * scale_ref[0] + shift_ref[0], 0.0)


def scale_shift_relu(y, scale, shift):
    """y: (B, OCp, HW) f32; scale/shift: (1, OCp, 1) f32 -> relu(y*scale+shift)."""
    B, OCp, HW = y.shape
    return pl.pallas_call(
        _scale_shift_relu_kernel,
        out_shape=jax.ShapeDtypeStruct((B, OCp, HW), jnp.float32),
        grid=(B,),
        in_specs=[
            pl.BlockSpec((1, OCp, HW), lambda b: (b, 0, 0)),
            pl.BlockSpec((1, OCp, 1), lambda b: (0, 0, 0)),
            pl.BlockSpec((1, OCp, 1), lambda b: (0, 0, 0)),
        ],
        out_specs=pl.BlockSpec((1, OCp, HW), lambda b: (b, 0, 0)),
        compiler_params=pltpu.CompilerParams(dimension_semantics=("parallel",)),
    )(y, scale, shift)


# ----------------------------------------------------------------------------
# One (DeformConv2d(k=3, padding=0) -> BatchNorm2d(train) -> ReLU) layer.
# xT: (B, Cp, H*W) f32 with channel rows >= C zero-padded -> (B, OCp, H*W) f32.
# ----------------------------------------------------------------------------
def deform_conv_bn_relu(xT, C, H, W, layer):
    B, Cp, HW = xT.shape
    assert HW == H * W and HW % LANE == 0, "H*W must be lane-aligned (mult of 128)"
    ks = 3
    N = ks * ks
    OC = layer["conv_w"].shape[0]
    OCp = _round_up(OC, LANE)
    M = B * HW
    f32, i32 = jnp.float32, jnp.int32

    # ---- p_conv (3x3, pad=1, stride=1): im2col (tiny XLA glue) + f32 Pallas matmul ----
    x_cl = jnp.transpose(xT[:, :C, :].reshape(B, C, H, W), (0, 2, 3, 1))  # (B,H,W,C)
    xpad = jnp.pad(x_cl, ((0, 0), (1, 1), (1, 1), (0, 0)))
    cols = [xpad[:, dy:dy + H, dx:dx + W, :] for dy in range(ks) for dx in range(ks)]
    Kraw = N * C
    Kp = _round_up(Kraw, LANE)
    a1 = jnp.concatenate(cols, axis=-1).reshape(M, Kraw)          # taps major, ch minor
    a1 = jnp.pad(a1, ((0, 0), (0, Kp - Kraw)))
    w1 = layer["p_w"].transpose(2, 3, 1, 0).reshape(Kraw, 2 * N)  # matches a1 ordering
    w1 = jnp.pad(w1, ((0, Kp - Kraw), (0, LANE - 2 * N)))
    b1 = jnp.pad(layer["p_b"], (0, LANE - 2 * N))[None, :]
    off = matmul_bias(a1, w1, b1)[:, :2 * N].reshape(B, H, W, 2 * N)

    # ---- sampling coordinates & bilinear corner weights (tiny, f32, XLA glue) ----
    r = jnp.arange(-(ks - 1) // 2, (ks - 1) // 2 + 1, dtype=f32)
    pnx, pny = jnp.meshgrid(r, r, indexing="ij")
    p_n_x, p_n_y = pnx.reshape(-1), pny.reshape(-1)                # (N,)
    i0, j0 = jnp.meshgrid(jnp.arange(1, H + 1, dtype=f32),
                          jnp.arange(1, W + 1, dtype=f32), indexing="ij")
    px = off[..., :N] + p_n_x + i0[..., None]                      # (B,H,W,N)
    py = off[..., N:] + p_n_y + j0[..., None]
    fx, fy = jnp.floor(px), jnp.floor(py)
    # padding=0 in the module -> clamp against the *unpadded* extents; out-of-range
    # taps read edge-clamped values (reference-module behaviour kept).
    qlt_x = jnp.clip(fx, 0, H - 1)
    qlt_y = jnp.clip(fy, 0, W - 1)
    qrb_x = jnp.clip(fx + 1, 0, H - 1)
    qrb_y = jnp.clip(fy + 1, 0, W - 1)
    pxc = jnp.clip(px, 0, H - 1)
    pyc = jnp.clip(py, 0, W - 1)
    g_lt = (1 + (qlt_x - pxc)) * (1 + (qlt_y - pyc))
    g_rb = (1 - (qrb_x - pxc)) * (1 - (qrb_y - pyc))
    g_lb = (1 + (qlt_x - pxc)) * (1 - (qrb_y - pyc))
    g_rt = (1 - (qrb_x - pxc)) * (1 + (qlt_y - pyc))
    idx_lt = qlt_x.astype(i32) * W + qlt_y.astype(i32)
    idx_rb = qrb_x.astype(i32) * W + qrb_y.astype(i32)
    idx_lb = qlt_x.astype(i32) * W + qrb_y.astype(i32)
    idx_rt = qrb_x.astype(i32) * W + qlt_y.astype(i32)
    # Lane-dense kernel layout: (B, tap, corner, HW).
    g_all = jnp.stack([g_lt, g_rb, g_lb, g_rt], axis=-1)           # (B,H,W,N,4)
    idx_all = jnp.stack([idx_lt, idx_rb, idx_lb, idx_rt], axis=-1)
    g_all = g_all.reshape(B, HW, N, 4).transpose(0, 2, 3, 1)       # (B,N,4,HW)
    idx_all = idx_all.reshape(B, HW, N, 4).transpose(0, 2, 3, 1)

    # ---- main conv weight per tap, transposed + bf16 (f32 accumulation in-kernel) ----
    # tap n <-> kernel position (n // ks, n % ks): matches _reshape_x_offset followed
    # by the stride=ks conv in the reference module.
    wT = layer["conv_w"].transpose(2, 3, 0, 1).reshape(N, OC, C)
    wT = jnp.pad(wT, ((0, 0), (0, OCp - OC), (0, Cp - C))).astype(jnp.bfloat16)

    y, ssum_b, ssq_b = pl.pallas_call(
        _deform_conv_kernel,
        out_shape=(jax.ShapeDtypeStruct((B, OCp, HW), f32),
                   jax.ShapeDtypeStruct((B, OCp, 1), f32),
                   jax.ShapeDtypeStruct((B, OCp, 1), f32)),
        grid=(B, N),
        in_specs=[
            pl.BlockSpec((1, Cp, HW), lambda b, n: (b, 0, 0)),
            pl.BlockSpec((1, 1, 4, HW), lambda b, n: (b, n, 0, 0)),
            pl.BlockSpec((1, 1, 4, HW), lambda b, n: (b, n, 0, 0)),
            pl.BlockSpec((1, OCp, Cp), lambda b, n: (n, 0, 0)),
        ],
        out_specs=(pl.BlockSpec((1, OCp, HW), lambda b, n: (b, 0, 0)),
                   pl.BlockSpec((1, OCp, 1), lambda b, n: (b, 0, 0)),
                   pl.BlockSpec((1, OCp, 1), lambda b, n: (b, 0, 0))),
        scratch_shapes=[pltpu.VMEM((OCp, HW), f32)],
        compiler_params=pltpu.CompilerParams(
            dimension_semantics=("parallel", "arbitrary")),
    )(xT, g_all, idx_all, wT)

    # ---- BatchNorm2d (training-mode batch stats) folded to scale/shift -------
    # TODO(synk): E[x^2]-E[x]^2 in f32 can cancel when |mean| >> std; use a
    # two-pass / Welford reduction if bit-tight parity with torch is required.
    ssum = jnp.sum(ssum_b[:, :, 0], axis=0)
    ssq = jnp.sum(ssq_b[:, :, 0], axis=0)
    mean = ssum / M
    var = jnp.maximum(ssq / M - mean * mean, 0.0)
    inv = jax.lax.rsqrt(var + BN_EPS)
    gamma = jnp.pad(layer["gamma"], (0, OCp - OC))   # pad channels: scale 0 -> output 0
    beta = jnp.pad(layer["beta"], (0, OCp - OC))
    scale = (gamma * inv).reshape(1, OCp, 1)
    shift = (beta - mean * gamma * inv).reshape(1, OCp, 1)
    return scale_shift_relu(y, scale, shift)


# ----------------------------------------------------------------------------
# double_deform_conv
# ----------------------------------------------------------------------------
def init_deform_layer(key, in_ch, out_ch, ks=3):
    k1, k2 = jax.random.split(key)
    N = ks * ks
    bound = 1.0 / float((in_ch * ks * ks) ** 0.5)
    return {
        # p_conv: weight explicitly zeroed by the module, bias default-init
        "p_w": jnp.zeros((2 * N, in_ch, ks, ks), jnp.float32),
        "p_b": jax.random.uniform(k1, (2 * N,), jnp.float32, -bound, bound),
        # main conv: bias=None in the module
        "conv_w": jax.random.normal(k2, (out_ch, in_ch, ks, ks), jnp.float32) * 0.1,
        # BatchNorm2d defaults
        "gamma": jnp.ones((out_ch,), jnp.float32),
        "beta": jnp.zeros((out_ch,), jnp.float32),
    }


def init_double_deform_conv_params(key, in_ch, out_ch):
    k1, k2 = jax.random.split(key)
    return [init_deform_layer(k1, in_ch, out_ch),
            init_deform_layer(k2, out_ch, out_ch)]


def double_deform_conv_forward(x_nchw, params):
    """x: (B, in_ch, H, W) f32 -> (B, out_ch, H, W) f32 (NCHW in/out)."""
    B, C, H, W = x_nchw.shape
    Cp = _round_up(C, LANE)
    # The internal "transposed" layout (channels on sublanes, H*W on lanes) is
    # just flattened NCHW — layout conversion in/out is free.
    xT = jnp.pad(x_nchw.reshape(B, C, H * W), ((0, 0), (0, Cp - C), (0, 0)))
    cur_c = C
    for layer in params:
        xT = deform_conv_bn_relu(xT, cur_c, H, W, layer)
        cur_c = layer["conv_w"].shape[0]
    return xT[:, :cur_c, :].reshape(B, cur_c, H, W)


if __name__ == "__main__":
    key = jax.random.PRNGKey(0)
    kx, kp = jax.random.split(key)
    B, in_ch, out_ch, H, W = 2, 4, 8, 16, 16
    x = jax.random.normal(kx, (B, in_ch, H, W), dtype=jnp.float32)
    params = init_double_deform_conv_params(kp, in_ch, out_ch)

    fwd = jax.jit(double_deform_conv_forward)
    out = fwd(x, params)
    jax.block_until_ready(out)
    assert out.shape == (B, out_ch, H, W)
    assert bool(jnp.all(out >= 0.0))  # ReLU epilogue
    print("KERNEL_OK")
</pallas_src>

<mosaic_0001>
module attributes {stable_mosaic.version = 11 : i64} {
  func.func @_matmul_bias_kernel(%arg0: i32, %arg1: memref<256x128xf32, #tpu.memory_space<vmem>>, %arg2: memref<128x128xf32, #tpu.memory_space<vmem>>, %arg3: memref<1x128xf32, #tpu.memory_space<vmem>>, %arg4: memref<256x128xf32, #tpu.memory_space<vmem>>) attributes {dimension_semantics = [#tpu.dimension_semantics<parallel>], iteration_bounds = array<i64: 2>, scalar_prefetch = 0 : i64, scratch_operands = 0 : i64, tpu.core_type = #tpu.core_type<tc>, window_params = [{transform_indices = @transform_0, window_bounds = array<i64: 256, 128>}, {pipeline_mode = #tpu.pipeline_mode<synchronous>, transform_indices = @transform_1, window_bounds = array<i64: 128, 128>}, {pipeline_mode = #tpu.pipeline_mode<synchronous>, transform_indices = @transform_2, window_bounds = array<i64: 1, 128>}, {transform_indices = @transform_3, window_bounds = array<i64: 256, 128>}]} {
    %c0 = arith.constant 0 : index
    %c0_0 = arith.constant 0 : index
    %0 = vector.load %arg1[%c0, %c0_0] : memref<256x128xf32, #tpu.memory_space<vmem>>, vector<256x128xf32>
    %c0_1 = arith.constant 0 : index
    %c0_2 = arith.constant 0 : index
    %1 = vector.load %arg2[%c0_1, %c0_2] : memref<128x128xf32, #tpu.memory_space<vmem>>, vector<128x128xf32>
    %cst = arith.constant dense<0.000000e+00> : vector<256x128xf32>
    %2 = tpu.matmul %0, %1, %cst {dimension_numbers = #tpu.dot_dimension_numbers<[1], [0], [0], [1], [0, 0, 1, 1], [], []>} : vector<256x128xf32>, vector<128x128xf32>, vector<256x128xf32> -> vector<256x128xf32>
    %c0_3 = arith.constant 0 : index
    %c0_4 = arith.constant 0 : index
    %3 = vector.load %arg3[%c0_3, %c0_4] : memref<1x128xf32, #tpu.memory_space<vmem>>, vector<1x128xf32>
    %4 = vector.broadcast %3 : vector<1x128xf32> to vector<256x128xf32>
    %5 = arith.addf %2, %4 : vector<256x128xf32>
    %c0_5 = arith.constant 0 : index
    %c0_6 = arith.constant 0 : index
    %6 = vector.load %arg4[%c0_5, %c0_6] : memref<256x128xf32, #tpu.memory_space<vmem>>, vector<256x128xf32>
    tpu.vector_store %arg4[%c0_5, %c0_6], %5 {strides = array<i32>} : memref<256x128xf32, #tpu.memory_space<vmem>>, vector<256x128xf32>,
    return
  }
  func.func @transform_0(%arg0: i32) -> (i32, i32) {
    %c0_i32 = arith.constant 0 : i32
    %c0_i32_0 = arith.constant 0 : i32
    return %arg0, %c0_i32 : i32, i32
  }
  func.func @transform_1(%arg0: i32) -> (i32, i32) {
    %c0_i32 = arith.constant 0 : i32
    %c0_i32_0 = arith.constant 0 : i32
    %c0_i32_1 = arith.constant 0 : i32
    return %c0_i32, %c0_i32_0 : i32, i32
  }
  func.func @transform_2(%arg0: i32) -> (i32, i32) {
    %c0_i32 = arith.constant 0 : i32
    %c0_i32_0 = arith.constant 0 : i32
    %c0_i32_1 = arith.constant 0 : i32
    return %c0_i32, %c0_i32_0 : i32, i32
  }
  func.func @transform_3(%arg0: i32) -> (i32, i32) {
    %c0_i32 = arith.constant 0 : i32
    %c0_i32_0 = arith.constant 0 : i32
    return %arg0, %c0_i32 : i32, i32
  }
}

module attributes {stable_mosaic.version = 11 : i64} {
  func.func @_scale_shift_relu_kernel(%arg0: i32, %arg1: memref<1x128x256xf32, #tpu.memory_space<vmem>>, %arg2: memref<1x128x1xf32, #tpu.memory_space<vmem>>, %arg3: memref<1x128x1xf32, #tpu.memory_space<vmem>>, %arg4: memref<1x128x256xf32, #tpu.memory_space<vmem>>) attributes {dimension_semantics = [#tpu.dimension_semantics<parallel>], iteration_bounds = array<i64: 2>, scalar_prefetch = 0 : i64, scratch_operands = 0 : i64, tpu.core_type = #tpu.core_type<tc>, window_params = [{transform_indices = @transform_0, window_bounds = array<i64: 1, 128, 256>}, {pipeline_mode = #tpu.pipeline_mode<synchronous>, transform_indices = @transform_1, window_bounds = array<i64: 1, 128, 1>}, {pipeline_mode = #tpu.pipeline_mode<synchronous>, transform_indices = @transform_2, window_bounds = array<i64: 1, 128, 1>}, {transform_indices = @transform_3, window_bounds = array<i64: 1, 128, 256>}]} {
    %c0 = arith.constant 0 : index
    %c0_0 = arith.constant 0 : index
    %c0_1 = arith.constant 0 : index
    %0 = vector.load %arg1[%c0, %c0_0, %c0_1] : memref<1x128x256xf32, #tpu.memory_space<vmem>>, vector<1x128x256xf32>
    %1 = vector.shape_cast %0 : vector<1x128x256xf32> to vector<128x256xf32>
    %c0_2 = arith.constant 0 : index
    %c0_3 = arith.constant 0 : index
    %c0_4 = arith.constant 0 : index
    %2 = vector.load %arg2[%c0_2, %c0_3, %c0_4] : memref<1x128x1xf32, #tpu.memory_space<vmem>>, vector<1x128x1xf32>
    %3 = vector.shape_cast %2 : vector<1x128x1xf32> to vector<128x1xf32>
    %4 = vector.broadcast %3 : vector<128x1xf32> to vector<128x256xf32>
    %5 = arith.mulf %1, %4 : vector<128x256xf32>
    %c0_5 = arith.constant 0 : index
    %c0_6 = arith.constant 0 : index
    %c0_7 = arith.constant 0 : index
    %6 = vector.load %arg3[%c0_5, %c0_6, %c0_7] : memref<1x128x1xf32, #tpu.memory_space<vmem>>, vector<1x128x1xf32>
    %7 = vector.shape_cast %6 : vector<1x128x1xf32> to vector<128x1xf32>
    %8 = vector.broadcast %7 : vector<128x1xf32> to vector<128x256xf32>
    %9 = arith.addf %5, %8 : vector<128x256xf32>
    %cst = arith.constant 0.000000e+00 : f32
    %10 = vector.broadcast %cst : f32 to vector<128x256xf32>
    %11 = arith.maximumf %9, %10 : vector<128x256xf32>
    %c0_8 = arith.constant 0 : index
    %c0_9 = arith.constant 0 : index
    %c0_10 = arith.constant 0 : index
    %12 = vector.load %arg4[%c0_8, %c0_9, %c0_10] : memref<1x128x256xf32, #tpu.memory_space<vmem>>, vector<1x128x256xf32>
    %13 = vector.shape_cast %12 : vector<1x128x256xf32> to vector<128x256xf32>
    %14 = vector.shape_cast %11 : vector<128x256xf32> to vector<1x128x256xf32>
    tpu.vector_store %arg4[%c0_8, %c0_9, %c0_10], %14 {strides = array<i32>} : memref<1x128x256xf32, #tpu.memory_space<vmem>>, vector<1x128x256xf32>,
    return
  }
  func.func @transform_0(%arg0: i32) -> (i32, i32, i32) {
    %c0_i32 = arith.constant 0 : i32
    %c0_i32_0 = arith.constant 0 : i32
    %c0_i32_1 = arith.constant 0 : i32
    return %arg0, %c0_i32, %c0_i32_0 : i32, i32, i32
  }
  func.func @transform_1(%arg0: i32) -> (i32, i32, i32) {
    %c0_i32 = arith.constant 0 : i32
    %c0_i32_0 = arith.constant 0 : i32
    %c0_i32_1 = arith.constant 0 : i32
    %c0_i32_2 = arith.constant 0 : i32
    return %c0_i32, %c0_i32_0, %c0_i32_1 : i32, i32, i32
  }
  func.func @transform_2(%arg0: i32) -> (i32, i32, i32) {
    %c0_i32 = arith.constant 0 : i32
    %c0_i32_0 = arith.constant 0 : i32
    %c0_i32_1 = arith.constant 0 : i32
    %c0_i32_2 = arith.constant 0 : i32
    return %c0_i32, %c0_i32_0, %c0_i32_1 : i32, i32, i32
  }
  func.func @transform_3(%arg0: i32) -> (i32, i32, i32) {
    %c0_i32 = arith.constant 0 : i32
    %c0_i32_0 = arith.constant 0 : i32
    %c0_i32_1 = arith.constant 0 : i32
    return %arg0, %c0_i32, %c0_i32_0 : i32, i32, i32
  }
}

module attributes {stable_mosaic.version = 11 : i64} {
  func.func @_deform_conv_kernel(%arg0: i32, %arg1: i32, %arg2: memref<1x128x256xf32, #tpu.memory_space<vmem>>, %arg3: memref<1x1x4x256xf32, #tpu.memory_space<vmem>>, %arg4: memref<1x1x4x256xi32, #tpu.memory_space<vmem>>, %arg5: memref<1x128x128xbf16, #tpu.memory_space<vmem>>, %arg6: memref<1x128x256xf32, #tpu.memory_space<vmem>>, %arg7: memref<1x128x1xf32, #tpu.memory_space<vmem>>, %arg8: memref<1x128x1xf32, #tpu.memory_space<vmem>>, %arg9: memref<128x256xf32, #tpu.memory_space<vmem>>) attributes {dimension_semantics = [#tpu.dimension_semantics<parallel>, #tpu.dimension_semantics<arbitrary>], iteration_bounds = array<i64: 2, 9>, scalar_prefetch = 0 : i64, scratch_operands = 1 : i64, tpu.core_type = #tpu.core_type<tc>, window_params = [{transform_indices = @transform_0, window_bounds = array<i64: 1, 128, 256>}, {transform_indices = @transform_1, window_bounds = array<i64: 1, 1, 4, 256>}, {transform_indices = @transform_2, window_bounds = array<i64: 1, 1, 4, 256>}, {transform_indices = @transform_3, window_bounds = array<i64: 1, 128, 128>}, {transform_indices = @transform_4, window_bounds = array<i64: 1, 128, 256>}, {transform_indices = @transform_5, window_bounds = array<i64: 1, 128, 1>}, {transform_indices = @transform_6, window_bounds = array<i64: 1, 128, 1>}]} {
    %c0_i32 = arith.constant 0 : i32
    %0 = arith.cmpi eq, %arg1, %c0_i32 : i32
    %1 = arith.extui %0 : i1 to i32
    %c0_i32_0 = arith.constant 0 : i32
    %2 = arith.cmpi ne, %1, %c0_i32_0 : i32
    scf.if %2 {
      %cst_25 = arith.constant 0.000000e+00 : f32
      %60 = vector.broadcast %cst_25 : f32 to vector<128x256xf32>
      %c0_26 = arith.constant 0 : index
      %c0_27 = arith.constant 0 : index
      %61 = vector.load %arg9[%c0_26, %c0_27] : memref<128x256xf32, #tpu.memory_space<vmem>>, vector<128x256xf32>
      tpu.vector_store %arg9[%c0_26, %c0_27], %60 {strides = array<i32>} : memref<128x256xf32, #tpu.memory_space<vmem>>, vector<128x256xf32>,
    } else {
    }
    %3 = tpu.iota {dimensions = array<i32: 0>} : vector<256x256xi32>
    %c0 = arith.constant 0 : index
    %c0_1 = arith.constant 0 : index
    %c0_2 = arith.constant 0 : index
    %c0_3 = arith.constant 0 : index
    %4 = vector.load %arg3[%c0, %c0_1, %c0_2, %c0_3] : memref<1x1x4x256xf32, #tpu.memory_space<vmem>>, vector<1x1x4x256xf32>
    %5 = vector.shape_cast %4 : vector<1x1x4x256xf32> to vector<4x256xf32>
    %c0_4 = arith.constant 0 : index
    %c0_5 = arith.constant 0 : index
    %c0_6 = arith.constant 0 : index
    %c0_7 = arith.constant 0 : index
    %6 = vector.load %arg4[%c0_4, %c0_5, %c0_6, %c0_7] : memref<1x1x4x256xi32, #tpu.memory_space<vmem>>, vector<1x1x4x256xi32>
    %7 = vector.shape_cast %6 : vector<1x1x4x256xi32> to vector<4x256xi32>
    %cst = arith.constant 0.000000e+00 : f32
    %8 = vector.broadcast %cst : f32 to vector<256x256xf32>
    %9 = vector.extract_strided_slice %7 {offsets = [0, 0], sizes = [1, 256], strides = [1, 1]} : vector<4x256xi32> to vector<1x256xi32>
    %10 = vector.broadcast %9 : vector<1x256xi32> to vector<256x256xi32>
    %11 = arith.cmpi eq, %3, %10 : vector<256x256xi32>
    %12 = vector.extract_strided_slice %5 {offsets = [0, 0], sizes = [1, 256], strides = [1, 1]} : vector<4x256xf32> to vector<1x256xf32>
    %cst_8 = arith.constant 0.000000e+00 : f32
    %13 = vector.shape_cast %12 : vector<1x256xf32> to vector<1x256xf32>
    %14 = vector.broadcast %13 : vector<1x256xf32> to vector<256x256xf32>
    %15 = vector.broadcast %cst_8 : f32 to vector<256x256xf32>
    %16 = arith.select %11, %14, %15 : vector<256x256xi1>, vector<256x256xf32>
    %17 = arith.addf %8, %16 : vector<256x256xf32>
    %18 = vector.extract_strided_slice %7 {offsets = [1, 0], sizes = [1, 256], strides = [1, 1]} : vector<4x256xi32> to vector<1x256xi32>
    %19 = vector.broadcast %18 : vector<1x256xi32> to vector<256x256xi32>
    %20 = arith.cmpi eq, %3, %19 : vector<256x256xi32>
    %21 = vector.extract_strided_slice %5 {offsets = [1, 0], sizes = [1, 256], strides = [1, 1]} : vector<4x256xf32> to vector<1x256xf32>
    %cst_9 = arith.constant 0.000000e+00 : f32
    %22 = vector.shape_cast %21 : vector<1x256xf32> to vector<1x256xf32>
    %23 = vector.broadcast %22 : vector<1x256xf32> to vector<256x256xf32>
    %24 = vector.broadcast %cst_9 : f32 to vector<256x256xf32>
    %25 = arith.select %20, %23, %24 : vector<256x256xi1>, vector<256x256xf32>
    %26 = arith.addf %17, %25 : vector<256x256xf32>
    %27 = vector.extract_strided_slice %7 {offsets = [2, 0], sizes = [1, 256], strides = [1, 1]} : vector<4x256xi32> to vector<1x256xi32>
    %28 = vector.broadcast %27 : vector<1x256xi32> to vector<256x256xi32>
    %29 = arith.cmpi eq, %3, %28 : vector<256x256xi32>
    %30 = vector.extract_strided_slice %5 {offsets = [2, 0], sizes = [1, 256], strides = [1, 1]} : vector<4x256xf32> to vector<1x256xf32>
    %cst_10 = arith.constant 0.000000e+00 : f32
    %31 = vector.shape_cast %30 : vector<1x256xf32> to vector<1x256xf32>
    %32 = vector.broadcast %31 : vector<1x256xf32> to vector<256x256xf32>
    %33 = vector.broadcast %cst_10 : f32 to vector<256x256xf32>
    %34 = arith.select %29, %32, %33 : vector<256x256xi1>, vector<256x256xf32>
    %35 = arith.addf %26, %34 : vector<256x256xf32>
    %36 = vector.extract_strided_slice %7 {offsets = [3, 0], sizes = [1, 256], strides = [1, 1]} : vector<4x256xi32> to vector<1x256xi32>
    %37 = vector.broadcast %36 : vector<1x256xi32> to vector<256x256xi32>
    %38 = arith.cmpi eq, %3, %37 : vector<256x256xi32>
    %39 = vector.extract_strided_slice %5 {offsets = [3, 0], sizes = [1, 256], strides = [1, 1]} : vector<4x256xf32> to vector<1x256xf32>
    %cst_11 = arith.constant 0.000000e+00 : f32
    %40 = vector.shape_cast %39 : vector<1x256xf32> to vector<1x256xf32>
    %41 = vector.broadcast %40 : vector<1x256xf32> to vector<256x256xf32>
    %42 = vector.broadcast %cst_11 : f32 to vector<256x256xf32>
    %43 = arith.select %38, %41, %42 : vector<256x256xi1>, vector<256x256xf32>
    %44 = arith.addf %35, %43 : vector<256x256xf32>
    %c0_12 = arith.constant 0 : index
    %c0_13 = arith.constant 0 : index
    %c0_14 = arith.constant 0 : index
    %45 = vector.load %arg2[%c0_12, %c0_13, %c0_14] : memref<1x128x256xf32, #tpu.memory_space<vmem>>, vector<1x128x256xf32>
    %46 = vector.shape_cast %45 : vector<1x128x256xf32> to vector<128x256xf32>
    %47 = arith.truncf %46 : vector<128x256xf32> to vector<128x256xbf16>
    %48 = arith.truncf %44 : vector<256x256xf32> to vector<256x256xbf16>
    %cst_15 = arith.constant dense<0.000000e+00> : vector<128x256xf32>
    %49 = tpu.matmul %47, %48, %cst_15 {dimension_numbers = #tpu.dot_dimension_numbers<[1], [0], [0], [1], [0, 0, 1, 1], [], []>} : vector<128x256xbf16>, vector<256x256xbf16>, vector<128x256xf32> -> vector<128x256xf32>
    %c0_16 = arith.constant 0 : index
    %c0_17 = arith.constant 0 : index
    %50 = vector.load %arg9[%c0_16, %c0_17] : memref<128x256xf32, #tpu.memory_space<vmem>>, vector<128x256xf32>
    %c0_18 = arith.constant 0 : index
    %c0_19 = arith.constant 0 : index
    %c0_20 = arith.constant 0 : index
    %51 = vector.load %arg5[%c0_18, %c0_19, %c0_20] : memref<1x128x128xbf16, #tpu.memory_space<vmem>>, vector<1x128x128xbf16>
    %52 = vector.shape_cast %51 : vector<1x128x128xbf16> to vector<128x128xbf16>
    %53 = arith.truncf %49 : vector<128x256xf32> to vector<128x256xbf16>
    %cst_21 = arith.constant dense<0.000000e+00> : vector<128x256xf32>
    %54 = tpu.matmul %52, %53, %cst_21 {dimension_numbers = #tpu.dot_dimension_numbers<[1], [0], [0], [1], [0, 0, 1, 1], [], []>} : vector<128x128xbf16>, vector<128x256xbf16>, vector<128x256xf32> -> vector<128x256xf32>
    %55 = arith.addf %50, %54 : vector<128x256xf32>
    %c0_22 = arith.constant 0 : index
    %c0_23 = arith.constant 0 : index
    %56 = vector.load %arg9[%c0_22, %c0_23] : memref<128x256xf32, #tpu.memory_space<vmem>>, vector<128x256xf32>
    tpu.vector_store %arg9[%c0_22, %c0_23], %55 {strides = array<i32>} : memref<128x256xf32, #tpu.memory_space<vmem>>, vector<128x256xf32>,
    %c8_i32 = arith.constant 8 : i32
    %57 = arith.cmpi eq, %arg1, %c8_i32 : i32
    %58 = arith.extui %57 : i1 to i32
    %c0_i32_24 = arith.constant 0 : i32
    %59 = arith.cmpi ne, %58, %c0_i32_24 : i32
    scf.if %59 {
      %c0_25 = arith.constant 0 : index
      %c0_26 = arith.constant 0 : index
      %60 = vector.load %arg9[%c0_25, %c0_26] : memref<128x256xf32, #tpu.memory_space<vmem>>, vector<128x256xf32>
      %c0_27 = arith.constant 0 : index
      %c0_28 = arith.constant 0 : index
      %c0_29 = arith.constant 0 : index
      %61 = vector.load %arg6[%c0_27, %c0_28, %c0_29] : memref<1x128x256xf32, #tpu.memory_space<vmem>>, vector<1x128x256xf32>
      %62 = vector.shape_cast %61 : vector<1x128x256xf32> to vector<128x256xf32>
      %63 = vector.shape_cast %60 : vector<128x256xf32> to vector<1x128x256xf32>
      tpu.vector_store %arg6[%c0_27, %c0_28, %c0_29], %63 {strides = array<i32>} : memref<1x128x256xf32, #tpu.memory_space<vmem>>, vector<1x128x256xf32>,
      %cst_30 = arith.constant dense<0.000000e+00> : vector<128xf32>
      %64 = vector.multi_reduction <add>, %60, %cst_30 [1] : vector<128x256xf32> to vector<128xf32>
      %65 = vector.shape_cast %64 : vector<128xf32> to vector<128x1xf32>
      %c0_31 = arith.constant 0 : index
      %c0_32 = arith.constant 0 : index
      %c0_33 = arith.constant 0 : index
      %66 = vector.load %arg7[%c0_31, %c0_32, %c0_33] : memref<1x128x1xf32, #tpu.memory_space<vmem>>, vector<1x128x1xf32>
      %67 = vector.shape_cast %66 : vector<1x128x1xf32> to vector<128x1xf32>
      %68 = vector.shape_cast %65 : vector<128x1xf32> to vector<1x128x1xf32>
      tpu.vector_store %arg7[%c0_31, %c0_32, %c0_33], %68 {strides = array<i32>} : memref<1x128x1xf32, #tpu.memory_space<vmem>>, vector<1x128x1xf32>,
      %69 = arith.mulf %60, %60 : vector<128x256xf32>
      %cst_34 = arith.constant dense<0.000000e+00> : vector<128xf32>
      %70 = vector.multi_reduction <add>, %69, %cst_34 [1] : vector<128x256xf32> to vector<128xf32>
      %71 = vector.shape_cast %70 : vector<128xf32> to vector<128x1xf32>
      %c0_35 = arith.constant 0 : index
      %c0_36 = arith.constant 0 : index
      %c0_37 = arith.constant 0 : index
      %72 = vector.load %arg8[%c0_35, %c0_36, %c0_37] : memref<1x128x1xf32, #tpu.memory_space<vmem>>, vector<1x128x1xf32>
      %73 = vector.shape_cast %72 : vector<1x128x1xf32> to vector<128x1xf32>
      %74 = vector.shape_cast %71 : vector<128x1xf32> to vector<1x128x1xf32>
      tpu.vector_store %arg8[%c0_35, %c0_36, %c0_37], %74 {strides = array<i32>} : memref<1x128x1xf32, #tpu.memory_space<vmem>>, vector<1x128x1xf32>,
    } else {
    }
    return
  }
  func.func @transform_0(%arg0: i32, %arg1: i32) -> (i32, i32, i32) {
    %c0_i32 = arith.constant 0 : i32
    %c0_i32_0 = arith.constant 0 : i32
    %c0_i32_1 = arith.constant 0 : i32
    return %arg0, %c0_i32, %c0_i32_0 : i32, i32, i32
  }
  func.func @transform_1(%arg0: i32, %arg1: i32) -> (i32, i32, i32, i32) {
    %c0_i32 = arith.constant 0 : i32
    %c0_i32_0 = arith.constant 0 : i32
    %c0_i32_1 = arith.constant 0 : i32
    return %arg0, %arg1, %c0_i32, %c0_i32_0 : i32, i32, i32, i32
  }
  func.func @transform_2(%arg0: i32, %arg1: i32) -> (i32, i32, i32, i32) {
    %c0_i32 = arith.constant 0 : i32
    %c0_i32_0 = arith.constant 0 : i32
    %c0_i32_1 = arith.constant 0 : i32
    return %arg0, %arg1, %c0_i32, %c0_i32_0 : i32, i32, i32, i32
  }
  func.func @transform_3(%arg0: i32, %arg1: i32) -> (i32, i32, i32) {
    %c0_i32 = arith.constant 0 : i32
    %c0_i32_0 = arith.constant 0 : i32
    %c0_i32_1 = arith.constant 0 : i32
    return %arg1, %c0_i32, %c0_i32_0 : i32, i32, i32
  }
  func.func @transform_4(%arg0: i32, %arg1: i32) -> (i32, i32, i32) {
    %c0_i32 = arith.constant 0 : i32
    %c0_i32_0 = arith.constant 0 : i32
    %c0_i32_1 = arith.constant 0 : i32
    return %arg0, %c0_i32, %c0_i32_0 : i32, i32, i32
  }
  func.func @transform_5(%arg0: i32, %arg1: i32) -> (i32, i32, i32) {
    %c0_i32 = arith.constant 0 : i32
    %c0_i32_0 = arith.constant 0 : i32
    %c0_i32_1 = arith.constant 0 : i32
    return %arg0, %c0_i32, %c0_i32_0 : i32, i32, i32
  }
  func.func @transform_6(%arg0: i32, %arg1: i32) -> (i32, i32, i32) {
    %c0_i32 = arith.constant 0 : i32
    %c0_i32_0 = arith.constant 0 : i32
    %c0_i32_1 = arith.constant 0 : i32
    return %arg0, %c0_i32, %c0_i32_0 : i32, i32, i32
  }
}

</mosaic_0001>

<llo_original>
// kernel: double_deform_conv_forward.6
$region0: #{double_deform_conv_forward.6}
  #allocation0 [shape = 'u32[]', space=smem, size = 0x4, offset = 0x4, fixed_abs, tag = 'smem constant byte address 0x4 - core index']
  #allocation1 [shape = 'u32[72,128]{1,0:T(1,128)}', space=vmem, size = 0x9000, scoped, tag = 'internal scratch']
  %s0 = inlined_call_operand.vmem [shape: f32[512,128], index: 0, kind: input, shape index: {}]
  %s1 = inlined_call_operand.vmem [shape: f32[128,128], index: 1, kind: input, shape index: {}]
  %s2 = inlined_call_operand.vmem [shape: f32[1,128], index: 2, kind: input, shape index: {}]
  %s3 = inlined_call_operand.vmem [shape: f32[512,128], index: 3, kind: output, shape index: {}]
  %s4 = sld [smem:[#allocation0]]
  $region45: #{double_deform_conv_forward.6} parent=0
    _
  %s6 = ssub.s32 1, %s4
  %s7 = scalar_select 0, %s6, %s4
  loop: start=0, step=1, limit=4
  $region2: #{double_deform_conv_forward.6} parent=0 // loop_pre_header
    _
  $region3: #{double_deform_conv_forward.6} parent=0 // loop_header
    %s9 = sphi 0, %s13
    %p10 = scmp.ge.s32.totalorder %s9, 4
    %s19 = sphi 0, %s21
    %s22 = sphi 0, %s19
    %s23 = sphi 0, %s22
    %s39 = sphi 0, %s23
    %s43 = sphi 0, %s43
    %s45 = sphi 0, %s43
    %s46 = sphi 0, %s45
    %s60 = sphi 0, %s46
    %s64 = sphi 0, %s64
    %s66 = sphi 0, %s64
    %s67 = sphi 0, %s66
    %s81 = sphi 0, %s67
    %s87 = sphi 0, %s89
    %s90 = sphi 0, %s87
    %s91 = sphi 0, %s90
    %s107 = sphi 0, %s91
  $region4: #{double_deform_conv_forward.6} parent=0 // loop_header_branch
    %12 = sbr.rel (%p10) target = $region8
  $region5: #{double_deform_conv_forward.6} parent=0 // loop_body
    %s14 = ssub.s32 %s9, 1
    %s15 = ssub.s32 %s9, 2
    %s16 = sadd.s32 %s9, 1
    %s17 = ssub.s32 %s9, %s16
    %p18 = scmp.eq.s32.totalorder %s17, 0
    %s20 = sadd.s32 %s19, 1
    %s21 = scalar_select %p18, %s19, %s20
    %p24 = pneg %p18
    %p25 = scmp.eq.s32.totalorder %s9, 1
    %p26 = por %p24, %p25
    %p27 = scmp.ne.s32.totalorder %s19, %s22
    %p28 = scmp.eq.s32.totalorder %s9, 0
    %p29 = por %p27, %p28
    %p30 = scmp.ne.s32.totalorder %s19, %s22
    %p31 = scmp.eq.s32.totalorder %s14, 1
    %p32 = por %p30, %p31
    %p33 = scmp.ne.s32.totalorder %s22, %s23
    %p34 = scmp.eq.s32.totalorder %s14, 0
    %p35 = por %p33, %p34
    %p36 = scmp.ne.s32.totalorder %s22, %s23
    %p37 = scmp.eq.s32.totalorder %s15, 1
    %p38 = por %p36, %p37
    %p40 = scmp.ne.s32.totalorder %s23, %s39
    %p41 = scmp.eq.s32.totalorder %s15, 0
    %p42 = por %p40, %p41
    %s44 = sadd.s32 %s43, 1
    %p47 = scmp.eq.s32.totalorder %s9, 1
    %p48 = scmp.ne.s32.totalorder %s43, %s45
    %p49 = scmp.eq.s32.totalorder %s9, 0
    %p50 = por %p48, %p49
    %p51 = scmp.ne.s32.totalorder %s43, %s45
    %p52 = scmp.eq.s32.totalorder %s14, 1
    %p53 = por %p51, %p52
    %p54 = scmp.ne.s32.totalorder %s45, %s46
    %p55 = scmp.eq.s32.totalorder %s14, 0
    %p56 = por %p54, %p55
    %p57 = scmp.ne.s32.totalorder %s45, %s46
    %p58 = scmp.eq.s32.totalorder %s15, 1
    %p59 = por %p57, %p58
    %p61 = scmp.ne.s32.totalorder %s46, %s60
    %p62 = scmp.eq.s32.totalorder %s15, 0
    %p63 = por %p61, %p62
    %s65 = sadd.s32 %s64, 1
    %p68 = scmp.eq.s32.totalorder %s9, 1
    %p69 = scmp.ne.s32.totalorder %s64, %s66
    %p70 = scmp.eq.s32.totalorder %s9, 0
    %p71 = por %p69, %p70
    %p72 = scmp.ne.s32.totalorder %s64, %s66
    %p73 = scmp.eq.s32.totalorder %s14, 1
    %p74 = por %p72, %p73
    %p75 = scmp.ne.s32.totalorder %s66, %s67
    %p76 = scmp.eq.s32.totalorder %s14, 0
    %p77 = por %p75, %p76
    %p78 = scmp.ne.s32.totalorder %s66, %s67
    %p79 = scmp.eq.s32.totalorder %s15, 1
    %p80 = por %p78, %p79
    %p82 = scmp.ne.s32.totalorder %s67, %s81
    %p83 = scmp.eq.s32.totalorder %s15, 0
    %p84 = por %p82, %p83
    %s85 = ssub.s32 %s9, %s16
    %p86 = scmp.eq.s32.totalorder %s85, 0
    %s88 = sadd.s32 %s87, 1
    %s89 = scalar_select %p86, %s87, %s88
    %p92 = pneg %p86
    %p93 = scmp.eq.s32.totalorder %s9, 1
    %p94 = por %p92, %p93
    %p95 = scmp.ne.s32.totalorder %s87, %s90
    %p96 = scmp.eq.s32.totalorder %s9, 0
    %p97 = por %p95, %p96
    %p98 = scmp.ne.s32.totalorder %s87, %s90
    %p99 = scmp.eq.s32.totalorder %s14, 1
    %p100 = por %p98, %p99
    %p101 = scmp.ne.s32.totalorder %s90, %s91
    %p102 = scmp.eq.s32.totalorder %s14, 0
    %p103 = por %p101, %p102
    %p104 = scmp.ne.s32.totalorder %s90, %s91
    %p105 = scmp.eq.s32.totalorder %s15, 1
    %p106 = por %p104, %p105
    %p108 = scmp.ne.s32.totalorder %s91, %s107
    %p109 = scmp.eq.s32.totalorder %s15, 0
    %p110 = por %p108, %p109
    %p111 = scmp.le.s32.totalorder 1, %s9
    %p112 = scmp.lt.s32.totalorder %s9, 3
    %p113 = pnand %p111, %p112
    %p114 = pneg %p113
    // Predicated region
    $region9: #{double_deform_conv_forward.6} parent=5 // pred_check
      _
    $region10: #{double_deform_conv_forward.6} parent=5 // pred_check_branch
      %116 = sbr.rel (%p113) target = $region12
    $region11: #{double_deform_conv_forward.6} parent=5 // pred_region
      %s117 = ssub.s32 %s9, 1
      // Predicated region
      $region13: #{double_deform_conv_forward.6} parent=11 // pred_check
        %p118 = pneg %p56
      $region14: #{double_deform_conv_forward.6} parent=11 // pred_check_branch
        %120 = sbr.rel (%p118) target = $region16
      $region15: #{double_deform_conv_forward.6} parent=11 // pred_region
        _
      $region16: #{double_deform_conv_forward.6} parent=11 // pred_fallthru
        _
      // Predicated region
      $region17: #{double_deform_conv_forward.6} parent=11 // pred_check
        %p121 = pneg %p77
      $region18: #{double_deform_conv_forward.6} parent=11 // pred_check_branch
        %123 = sbr.rel (%p121) target = $region20
      $region19: #{double_deform_conv_forward.6} parent=11 // pred_region
        _
      $region20: #{double_deform_conv_forward.6} parent=11 // pred_fallthru
        _
    $region12: #{double_deform_conv_forward.6} parent=5 // pred_fallthru
      _
    %p124 = scmp.lt.s32.totalorder %s9, 2
    // Predicated region
    $region21: #{double_deform_conv_forward.6} parent=5 // pred_check
      %p125 = pneg %p124
    $region22: #{double_deform_conv_forward.6} parent=5 // pred_check_branch
      %127 = sbr.rel (%p125) target = $region24
    $region23: #{double_deform_conv_forward.6} parent=5 // pred_region
      // Predicated region
      $region25: #{double_deform_conv_forward.6} parent=23 // pred_check
        %p128 = pneg %p29
      $region26: #{double_deform_conv_forward.6} parent=23 // pred_check_branch
        %130 = sbr.rel (%p128) target = $region28
      $region27: #{double_deform_conv_forward.6} parent=23 // pred_region
        %s131 = smul.u32 32, %s9
        %p132 = scmp.lt.s32.totalorder %s131, 63
        %s133 = scalar_select %p132, %s131, 63
        %s134 = smul.addr %s133, 8
        %s135 = scalar_lea.vmem %s0, %s134
        %s136 = smul.u32 32, %s9
      $region28: #{double_deform_conv_forward.6} parent=23 // pred_fallthru
        _
    $region24: #{double_deform_conv_forward.6} parent=5 // pred_fallthru
      _
    %p137 = scmp.le.s32.totalorder 1, %s9
    %p138 = scmp.lt.s32.totalorder %s9, 3
    %p139 = pnand %p137, %p138
    %p140 = pneg %p139
    // Predicated region
    $region29: #{double_deform_conv_forward.6} parent=5 // pred_check
      _
    $region30: #{double_deform_conv_forward.6} parent=5 // pred_check_branch
      %142 = sbr.rel (%p139) target = $region32
    $region31: #{double_deform_conv_forward.6} parent=5 // pred_region
      %s143 = ssub.s32 %s9, 1
      %s144 = smul.u32 32, %s14
      %p145 = scmp.lt.s32.totalorder %s144, 63
      %s146 = scalar_select %p145, %s144, 63
      %s147 = smul.addr %s146, 8
      %s148 = scalar_lea.vmem %s0, %s147
      %p149 = pneg %p35
      %p150 = pneg %p32
      %p151 = pneg %p56
      %p152 = pneg %p53
      %p153 = pneg %p77
      %p154 = pneg %p74
      %p155 = pneg %p103
      %p156 = pneg %p100
      %s157 = smul.u32 32, %s14
      %p158 = scmp.lt.s32.totalorder %s157, 63
      %s159 = scalar_select %p158, %s157, 63
      %s160 = smul.addr %s159, 8
      %s161 = scalar_lea.vmem %s3, %s160
      %s162 = smul.u32 32, %s14
      %p163 = scmp.lt.s32.totalorder %s162, 63
      %s164 = scalar_select %p163, %s162, 63
      %s165 = smul.addr %s164, 8
      %s166 = scalar_lea.vmem %s0, %s165
      %s167 = smul.u32 32, %s14
      %s168 = smul.u32 32, %s14
      %p169 = scmp.lt.s32.totalorder %s168, 63
      %s170 = scalar_select %p169, %s168, 63
      %s171 = smul.addr %s170, 8
      %s172 = scalar_lea.vmem %s3, %s171
      %s173 = smul.u32 32, %s14
      %v174 = vld [vmem:[%s166] sm:$0xff]
      %v175 = vld [vmem:[%s166 + $0x8] sm:$0xff]
      %v176 = vld [vmem:[%s166 + $0x10] sm:$0xff]
      %v177 = vld [vmem:[%s166 + $0x18] sm:$0xff]
      %v178 = vld [vmem:[%s166 + $0x20] sm:$0xff]
      %v179 = vld [vmem:[%s166 + $0x28] sm:$0xff]
      %v180 = vld [vmem:[%s166 + $0x30] sm:$0xff]
      %v181 = vld [vmem:[%s166 + $0x38] sm:$0xff]
      %v182 = vld [vmem:[%s166 + $0x40] sm:$0xff]
      %v183 = vld [vmem:[%s166 + $0x48] sm:$0xff]
      %v184 = vld [vmem:[%s166 + $0x50] sm:$0xff]
      %v185 = vld [vmem:[%s166 + $0x58] sm:$0xff]
      %v186 = vld [vmem:[%s166 + $0x60] sm:$0xff]
      %v187 = vld [vmem:[%s166 + $0x68] sm:$0xff]
      %v188 = vld [vmem:[%s166 + $0x70] sm:$0xff]
      %v189 = vld [vmem:[%s166 + $0x78] sm:$0xff]
      %v190 = vld [vmem:[%s166 + $0x80] sm:$0xff]
      %v191 = vld [vmem:[%s166 + $0x88] sm:$0xff]
      %v192 = vld [vmem:[%s166 + $0x90] sm:$0xff]
      %v193 = vld [vmem:[%s166 + $0x98] sm:$0xff]
      %v194 = vld [vmem:[%s166 + $0xa0] sm:$0xff]
      %v195 = vld [vmem:[%s166 + $0xa8] sm:$0xff]
      %v196 = vld [vmem:[%s166 + $0xb0] sm:$0xff]
      %v197 = vld [vmem:[%s166 + $0xb8] sm:$0xff]
      %v198 = vld [vmem:[%s166 + $0xc0] sm:$0xff]
      %v199 = vld [vmem:[%s166 + $0xc8] sm:$0xff]
      %v200 = vld [vmem:[%s166 + $0xd0] sm:$0xff]
      %v201 = vld [vmem:[%s166 + $0xd8] sm:$0xff]
      %v202 = vld [vmem:[%s166 + $0xe0] sm:$0xff]
      %v203 = vld [vmem:[%s166 + $0xe8] sm:$0xff]
      %v204 = vld [vmem:[%s166 + $0xf0] sm:$0xff]
      %v205 = vld [vmem:[%s166 + $0xf8] sm:$0xff]
      %v206 = vld [vmem:[%s1] sm:$0xff]
      %v207 = vld [vmem:[%s1 + $0x8] sm:$0xff]
      %v208 = vld [vmem:[%s1 + $0x10] sm:$0xff]
      %v209 = vld [vmem:[%s1 + $0x18] sm:$0xff]
      %v210 = vld [vmem:[%s1 + $0x20] sm:$0xff]
      %v211 = vld [vmem:[%s1 + $0x28] sm:$0xff]
      %v212 = vld [vmem:[%s1 + $0x30] sm:$0xff]
      %v213 = vld [vmem:[%s1 + $0x38] sm:$0xff]
      %v214 = vld [vmem:[%s1 + $0x40] sm:$0xff]
      %v215 = vld [vmem:[%s1 + $0x48] sm:$0xff]
      %v216 = vld [vmem:[%s1 + $0x50] sm:$0xff]
      %v217 = vld [vmem:[%s1 + $0x58] sm:$0xff]
      %v218 = vld [vmem:[%s1 + $0x60] sm:$0xff]
      %v219 = vld [vmem:[%s1 + $0x68] sm:$0xff]
      %v220 = vld [vmem:[%s1 + $0x70] sm:$0xff]
      %v221 = vld [vmem:[%s1 + $0x78] sm:$0xff]
      %v222 = vld [vmem:[%s2] sm:$0x1]
      %v224 = vperm.slane %v222, 0
      %226 = vmatpush.msra.mxu0 %v221
      %227 = vmatpush.msra.mxu0 %v220
      %228 = vmatpush.msra.mxu0 %v219
      %229 = vmatpush.msra.mxu0 %v218
      %230 = vmatpush.msra.mxu0 %v217
      %231 = vmatpush.msra.mxu0 %v216
      %232 = vmatpush.msra.mxu0 %v215
      %233 = vmatpush.msra.mxu0 %v214
      %234 = vmatpush.msra.mxu0 %v213
      %235 = vmatpush.msra.mxu0 %v212
      %236 = vmatpush.msra.mxu0 %v211
      %237 = vmatpush.msra.mxu0 %v210
      %238 = vmatpush.msra.mxu0 %v209
      %239 = vmatpush.msra.mxu0 %v208
      %240 = vmatpush.msra.mxu0 %v207
      %241 = vmatpush.msra.mxu0 %v206
      %242 = vmatmul.f32.gmra.mxu0 %v174
      %v243 = vpop.f32.mrf.mxu0
      %v244 = vadd.f32 %v224, %v243
      %245 = vmatmul.f32.gmra.mxu0 %v175
      %v246 = vpop.f32.mrf.mxu0
      %v247 = vadd.f32 %v224, %v246
      %248 = vmatmul.f32.gmra.mxu0 %v176
      %v249 = vpop.f32.mrf.mxu0
      %v250 = vadd.f32 %v224, %v249
      %251 = vmatmul.f32.gmra.mxu0 %v177
      %v252 = vpop.f32.mrf.mxu0
      %v253 = vadd.f32 %v224, %v252
      %254 = vmatmul.f32.gmra.mxu0 %v178
      %v255 = vpop.f32.mrf.mxu0
      %v256 = vadd.f32 %v224, %v255
      %257 = vmatmul.f32.gmra.mxu0 %v179
      %v258 = vpop.f32.mrf.mxu0
      %v259 = vadd.f32 %v224, %v258
      %260 = vmatmul.f32.gmra.mxu0 %v180
      %v261 = vpop.f32.mrf.mxu0
      %v262 = vadd.f32 %v224, %v261
      %263 = vmatmul.f32.gmra.mxu0 %v181
      %v264 = vpop.f32.mrf.mxu0
      %v265 = vadd.f32 %v224, %v264
      %266 = vmatmul.f32.gmra.mxu0 %v182
      %v267 = vpop.f32.mrf.mxu0
      %v268 = vadd.f32 %v224, %v267
      %269 = vmatmul.f32.gmra.mxu0 %v183
      %v270 = vpop.f32.mrf.mxu0
      %v271 = vadd.f32 %v224, %v270
      %272 = vmatmul.f32.gmra.mxu0 %v184
      %v273 = vpop.f32.mrf.mxu0
      %v274 = vadd.f32 %v224, %v273
      %275 = vmatmul.f32.gmra.mxu0 %v185
      %v276 = vpop.f32.mrf.mxu0
      %v277 = vadd.f32 %v224, %v276
      %278 = vmatmul.f32.gmra.mxu0 %v186
      %v279 = vpop.f32.mrf.mxu0
      %v280 = vadd.f32 %v224, %v279
      %281 = vmatmul.f32.gmra.mxu0 %v187
      %v282 = vpop.f32.mrf.mxu0
      %v283 = vadd.f32 %v224, %v282
      %284 = vmatmul.f32.gmra.mxu0 %v188
      %v285 = vpop.f32.mrf.mxu0
      %v286 = vadd.f32 %v224, %v285
      %287 = vmatmul.f32.gmra.mxu0 %v189
      %v288 = vpop.f32.mrf.mxu0
      %v289 = vadd.f32 %v224, %v288
      %290 = vmatmul.f32.gmra.mxu0 %v190
      %v291 = vpop.f32.mrf.mxu0
      %v292 = vadd.f32 %v224, %v291
      %293 = vmatmul.f32.gmra.mxu0 %v191
      %v294 = vpop.f32.mrf.mxu0
      %v295 = vadd.f32 %v224, %v294
      %296 = vmatmul.f32.gmra.mxu0 %v192
      %v297 = vpop.f32.mrf.mxu0
      %v298 = vadd.f32 %v224, %v297
      %299 = vmatmul.f32.gmra.mxu0 %v193
      %v300 = vpop.f32.mrf.mxu0
      %v301 = vadd.f32 %v224, %v300
      %302 = vmatmul.f32.gmra.mxu0 %v194
      %v303 = vpop.f32.mrf.mxu0
      %v304 = vadd.f32 %v224, %v303
      %305 = vmatmul.f32.gmra.mxu0 %v195
      %v306 = vpop.f32.mrf.mxu0
      %v307 = vadd.f32 %v224, %v306
      %308 = vmatmul.f32.gmra.mxu0 %v196
      %v309 = vpop.f32.mrf.mxu0
      %v310 = vadd.f32 %v224, %v309
      %311 = vmatmul.f32.gmra.mxu0 %v197
      %v312 = vpop.f32.mrf.mxu0
      %v313 = vadd.f32 %v224, %v312
      %314 = vmatmul.f32.gmra.mxu0 %v198
      %v315 = vpop.f32.mrf.mxu0
      %v316 = vadd.f32 %v224, %v315
      %317 = vmatmul.f32.gmra.mxu0 %v199
      %v318 = vpop.f32.mrf.mxu0
      %v319 = vadd.f32 %v224, %v318
      %320 = vmatmul.f32.gmra.mxu0 %v200
      %v321 = vpop.f32.mrf.mxu0
      %v322 = vadd.f32 %v224, %v321
      %323 = vmatmul.f32.gmra.mxu0 %v201
      %v324 = vpop.f32.mrf.mxu0
      %v325 = vadd.f32 %v224, %v324
      %326 = vmatmul.f32.gmra.mxu0 %v202
      %v327 = vpop.f32.mrf.mxu0
      %v328 = vadd.f32 %v224, %v327
      %329 = vmatmul.f32.gmra.mxu0 %v203
      %v330 = vpop.f32.mrf.mxu0
      %v331 = vadd.f32 %v224, %v330
      %332 = vmatmul.f32.gmra.mxu0 %v204
      %v333 = vpop.f32.mrf.mxu0
      %v334 = vadd.f32 %v224, %v333
      %335 = vmatmul.f32.gmra.mxu0 %v205
      %v336 = vpop.f32.mrf.mxu0
      %v337 = vadd.f32 %v224, %v336
      %338 = vdwg.mxu0
      %339 = vst [vmem:[%s172] sm:$0xff] %v244
      %340 = vst [vmem:[%s172 + $0x8] sm:$0xff] %v247
      %341 = vst [vmem:[%s172 + $0x10] sm:$0xff] %v250
      %342 = vst [vmem:[%s172 + $0x18] sm:$0xff] %v253
      %343 = vst [vmem:[%s172 + $0x20] sm:$0xff] %v256
      %344 = vst [vmem:[%s172 + $0x28] sm:$0xff] %v259
      %345 = vst [vmem:[%s172 + $0x30] sm:$0xff] %v262
      %346 = vst [vmem:[%s172 + $0x38] sm:$0xff] %v265
      %347 = vst [vmem:[%s172 + $0x40] sm:$0xff] %v268
      %348 = vst [vmem:[%s172 + $0x48] sm:$0xff] %v271
      %349 = vst [vmem:[%s172 + $0x50] sm:$0xff] %v274
      %350 = vst [vmem:[%s172 + $0x58] sm:$0xff] %v277
      %351 = vst [vmem:[%s172 + $0x60] sm:$0xff] %v280
      %352 = vst [vmem:[%s172 + $0x68] sm:$0xff] %v283
      %353 = vst [vmem:[%s172 + $0x70] sm:$0xff] %v286
      %354 = vst [vmem:[%s172 + $0x78] sm:$0xff] %v289
      %355 = vst [vmem:[%s172 + $0x80] sm:$0xff] %v292
      %356 = vst [vmem:[%s172 + $0x88] sm:$0xff] %v295
      %357 = vst [vmem:[%s172 + $0x90] sm:$0xff] %v298
      %358 = vst [vmem:[%s172 + $0x98] sm:$0xff] %v301
      %359 = vst [vmem:[%s172 + $0xa0] sm:$0xff] %v304
      %360 = vst [vmem:[%s172 + $0xa8] sm:$0xff] %v307
      %361 = vst [vmem:[%s172 + $0xb0] sm:$0xff] %v310
      %362 = vst [vmem:[%s172 + $0xb8] sm:$0xff] %v313
      %363 = vst [vmem:[%s172 + $0xc0] sm:$0xff] %v316
      %364 = vst [vmem:[%s172 + $0xc8] sm:$0xff] %v319
      %365 = vst [vmem:[%s172 + $0xd0] sm:$0xff] %v322
      %366 = vst [vmem:[%s172 + $0xd8] sm:$0xff] %v325
      %367 = vst [vmem:[%s172 + $0xe0] sm:$0xff] %v328
      %368 = vst [vmem:[%s172 + $0xe8] sm:$0xff] %v331
      %369 = vst [vmem:[%s172 + $0xf0] sm:$0xff] %v334
      %370 = vst [vmem:[%s172 + $0xf8] sm:$0xff] %v337
      %s371 = smul.u32 32, %s14
      %p372 = scmp.lt.s32.totalorder %s371, 63
      %s373 = scalar_select %p372, %s371, 63
      %s374 = smul.addr %s373, 8
      %s375 = scalar_lea.vmem %s3, %s374
      // Predicated region
      $region33: #{double_deform_conv_forward.6} parent=31 // pred_check
        %p376 = pneg %p100
      $region34: #{double_deform_conv_forward.6} parent=31 // pred_check_branch
        %378 = sbr.rel (%p376) target = $region36
      $region35: #{double_deform_conv_forward.6} parent=31 // pred_region
        %s379 = smul.u32 32, %s14
      $region36: #{double_deform_conv_forward.6} parent=31 // pred_fallthru
        _
    $region32: #{double_deform_conv_forward.6} parent=5 // pred_fallthru
      _
    %p380 = scmp.le.s32.totalorder 2, %s9
    // Predicated region
    $region37: #{double_deform_conv_forward.6} parent=5 // pred_check
      %p381 = pneg %p380
    $region38: #{double_deform_conv_forward.6} parent=5 // pred_check_branch
      %383 = sbr.rel (%p381) target = $region40
    $region39: #{double_deform_conv_forward.6} parent=5 // pred_region
      %s384 = ssub.s32 %s9, 2
      // Predicated region
      $region41: #{double_deform_conv_forward.6} parent=39 // pred_check
        %p385 = pneg %p106
      $region42: #{double_deform_conv_forward.6} parent=39 // pred_check_branch
        %387 = sbr.rel (%p385) target = $region44
      $region43: #{double_deform_conv_forward.6} parent=39 // pred_region
        %s388 = smul.u32 32, %s15
        %p389 = scmp.lt.s32.totalorder %s388, 63
        %s390 = scalar_select %p389, %s388, 63
        %s391 = smul.addr %s390, 8
        %s392 = scalar_lea.vmem %s3, %s391
      $region44: #{double_deform_conv_forward.6} parent=39 // pred_fallthru
        _
    $region40: #{double_deform_conv_forward.6} parent=5 // pred_fallthru
      _
  $region6: #{double_deform_conv_forward.6} parent=0 // loop_footer
    %s13 = sadd.s32 1, %s9
  $region7: #{double_deform_conv_forward.6} parent=0 // loop_footer_branch
    %8 = sbr.rel target = $region3
  $region8: #{double_deform_conv_forward.6} parent=0 // loop_exit
    _

// kernel: double_deform_conv_forward.8
$region0: #{double_deform_conv_forward.8}
  #allocation0 [shape = 'u32[]', space=smem, size = 0x4, offset = 0x4, fixed_abs, tag = 'smem constant byte address 0x4 - core index']
  #allocation1 [shape = 'u32[72,128]{1,0:T(1,128)}', space=vmem, size = 0x9000, scoped, tag = 'internal scratch']
  %s0 = inlined_call_operand.vmem [shape: f32[2,128,256], index: 0, kind: input, shape index: {}]
  %s1 = inlined_call_operand.vmem [shape: f32[1,128,1], index: 1, kind: input, shape index: {}]
  %s2 = inlined_call_operand.vmem [shape: f32[1,128,1], index: 2, kind: input, shape index: {}]
  %s3 = inlined_call_operand.vmem [shape: f32[2,128,256], index: 3, kind: output, shape index: {}]
  %s4 = sld [smem:[#allocation0]]
  $region45: #{double_deform_conv_forward.8} parent=0
    _
  %s6 = ssub.s32 1, %s4
  %s7 = scalar_select 0, %s6, %s4
  loop: start=0, step=1, limit=4
  $region2: #{double_deform_conv_forward.8} parent=0 // loop_pre_header
    _
  $region3: #{double_deform_conv_forward.8} parent=0 // loop_header
    %s9 = sphi 0, %s13
    %p10 = scmp.ge.s32.totalorder %s9, 4
    %s19 = sphi 0, %s21
    %s22 = sphi 0, %s19
    %s23 = sphi 0, %s22
    %s39 = sphi 0, %s23
    %s43 = sphi 0, %s43
    %s45 = sphi 0, %s43
    %s46 = sphi 0, %s45
    %s60 = sphi 0, %s46
    %s64 = sphi 0, %s64
    %s66 = sphi 0, %s64
    %s67 = sphi 0, %s66
    %s81 = sphi 0, %s67
    %s87 = sphi 0, %s89
    %s90 = sphi 0, %s87
    %s91 = sphi 0, %s90
    %s107 = sphi 0, %s91
  $region4: #{double_deform_conv_forward.8} parent=0 // loop_header_branch
    %12 = sbr.rel (%p10) target = $region8
  $region5: #{double_deform_conv_forward.8} parent=0 // loop_body
    %s14 = ssub.s32 %s9, 1
    %s15 = ssub.s32 %s9, 2
    %s16 = sadd.s32 %s9, 1
    %s17 = ssub.s32 %s9, %s16
    %p18 = scmp.eq.s32.totalorder %s17, 0
    %s20 = sadd.s32 %s19, 1
    %s21 = scalar_select %p18, %s19, %s20
    %p24 = pneg %p18
    %p25 = scmp.eq.s32.totalorder %s9, 1
    %p26 = por %p24, %p25
    %p27 = scmp.ne.s32.totalorder %s19, %s22
    %p28 = scmp.eq.s32.totalorder %s9, 0
    %p29 = por %p27, %p28
    %p30 = scmp.ne.s32.totalorder %s19, %s22
    %p31 = scmp.eq.s32.totalorder %s14, 1
    %p32 = por %p30, %p31
    %p33 = scmp.ne.s32.totalorder %s22, %s23
    %p34 = scmp.eq.s32.totalorder %s14, 0
    %p35 = por %p33, %p34
    %p36 = scmp.ne.s32.totalorder %s22, %s23
    %p37 = scmp.eq.s32.totalorder %s15, 1
    %p38 = por %p36, %p37
    %p40 = scmp.ne.s32.totalorder %s23, %s39
    %p41 = scmp.eq.s32.totalorder %s15, 0
    %p42 = por %p40, %p41
    %s44 = sadd.s32 %s43, 1
    %p47 = scmp.eq.s32.totalorder %s9, 1
    %p48 = scmp.ne.s32.totalorder %s43, %s45
    %p49 = scmp.eq.s32.totalorder %s9, 0
    %p50 = por %p48, %p49
    %p51 = scmp.ne.s32.totalorder %s43, %s45
    %p52 = scmp.eq.s32.totalorder %s14, 1
    %p53 = por %p51, %p52
    %p54 = scmp.ne.s32.totalorder %s45, %s46
    %p55 = scmp.eq.s32.totalorder %s14, 0
    %p56 = por %p54, %p55
    %p57 = scmp.ne.s32.totalorder %s45, %s46
    %p58 = scmp.eq.s32.totalorder %s15, 1
    %p59 = por %p57, %p58
    %p61 = scmp.ne.s32.totalorder %s46, %s60
    %p62 = scmp.eq.s32.totalorder %s15, 0
    %p63 = por %p61, %p62
    %s65 = sadd.s32 %s64, 1
    %p68 = scmp.eq.s32.totalorder %s9, 1
    %p69 = scmp.ne.s32.totalorder %s64, %s66
    %p70 = scmp.eq.s32.totalorder %s9, 0
    %p71 = por %p69, %p70
    %p72 = scmp.ne.s32.totalorder %s64, %s66
    %p73 = scmp.eq.s32.totalorder %s14, 1
    %p74 = por %p72, %p73
    %p75 = scmp.ne.s32.totalorder %s66, %s67
    %p76 = scmp.eq.s32.totalorder %s14, 0
    %p77 = por %p75, %p76
    %p78 = scmp.ne.s32.totalorder %s66, %s67
    %p79 = scmp.eq.s32.totalorder %s15, 1
    %p80 = por %p78, %p79
    %p82 = scmp.ne.s32.totalorder %s67, %s81
    %p83 = scmp.eq.s32.totalorder %s15, 0
    %p84 = por %p82, %p83
    %s85 = ssub.s32 %s9, %s16
    %p86 = scmp.eq.s32.totalorder %s85, 0
    %s88 = sadd.s32 %s87, 1
    %s89 = scalar_select %p86, %s87, %s88
    %p92 = pneg %p86
    %p93 = scmp.eq.s32.totalorder %s9, 1
    %p94 = por %p92, %p93
    %p95 = scmp.ne.s32.totalorder %s87, %s90
    %p96 = scmp.eq.s32.totalorder %s9, 0
    %p97 = por %p95, %p96
    %p98 = scmp.ne.s32.totalorder %s87, %s90
    %p99 = scmp.eq.s32.totalorder %s14, 1
    %p100 = por %p98, %p99
    %p101 = scmp.ne.s32.totalorder %s90, %s91
    %p102 = scmp.eq.s32.totalorder %s14, 0
    %p103 = por %p101, %p102
    %p104 = scmp.ne.s32.totalorder %s90, %s91
    %p105 = scmp.eq.s32.totalorder %s15, 1
    %p106 = por %p104, %p105
    %p108 = scmp.ne.s32.totalorder %s91, %s107
    %p109 = scmp.eq.s32.totalorder %s15, 0
    %p110 = por %p108, %p109
    %p111 = scmp.le.s32.totalorder 1, %s9
    %p112 = scmp.lt.s32.totalorder %s9, 3
    %p113 = pnand %p111, %p112
    %p114 = pneg %p113
    // Predicated region
    $region9: #{double_deform_conv_forward.8} parent=5 // pred_check
      _
    $region10: #{double_deform_conv_forward.8} parent=5 // pred_check_branch
      %116 = sbr.rel (%p113) target = $region12
    $region11: #{double_deform_conv_forward.8} parent=5 // pred_region
      %s117 = ssub.s32 %s9, 1
      // Predicated region
      $region13: #{double_deform_conv_forward.8} parent=11 // pred_check
        %p118 = pneg %p56
      $region14: #{double_deform_conv_forward.8} parent=11 // pred_check_branch
        %120 = sbr.rel (%p118) target = $region16
      $region15: #{double_deform_conv_forward.8} parent=11 // pred_region
        _
      $region16: #{double_deform_conv_forward.8} parent=11 // pred_fallthru
        _
      // Predicated region
      $region17: #{double_deform_conv_forward.8} parent=11 // pred_check
        %p121 = pneg %p77
      $region18: #{double_deform_conv_forward.8} parent=11 // pred_check_branch
        %123 = sbr.rel (%p121) target = $region20
      $region19: #{double_deform_conv_forward.8} parent=11 // pred_region
        _
      $region20: #{double_deform_conv_forward.8} parent=11 // pred_fallthru
        _
    $region12: #{double_deform_conv_forward.8} parent=5 // pred_fallthru
      _
    %p124 = scmp.lt.s32.totalorder %s9, 2
    // Predicated region
    $region21: #{double_deform_conv_forward.8} parent=5 // pred_check
      %p125 = pneg %p124
    $region22: #{double_deform_conv_forward.8} parent=5 // pred_check_branch
      %127 = sbr.rel (%p125) target = $region24
    $region23: #{double_deform_conv_forward.8} parent=5 // pred_region
      // Predicated region
      $region25: #{double_deform_conv_forward.8} parent=23 // pred_check
        %p128 = pneg %p29
      $region26: #{double_deform_conv_forward.8} parent=23 // pred_check_branch
        %130 = sbr.rel (%p128) target = $region28
      $region27: #{double_deform_conv_forward.8} parent=23 // pred_region
        %p131 = scmp.lt.s32.totalorder %s9, 1
        %s132 = scalar_select %p131, %s9, 1
        %s133 = smul.addr %s132, 32
        %s134 = smul.addr %s133, 8
        %s135 = scalar_lea.vmem %s0, %s134
      $region28: #{double_deform_conv_forward.8} parent=23 // pred_fallthru
        _
    $region24: #{double_deform_conv_forward.8} parent=5 // pred_fallthru
      _
    %p136 = scmp.le.s32.totalorder 1, %s9
    %p137 = scmp.lt.s32.totalorder %s9, 3
    %p138 = pnand %p136, %p137
    %p139 = pneg %p138
    // Predicated region
    $region29: #{double_deform_conv_forward.8} parent=5 // pred_check
      _
    $region30: #{double_deform_conv_forward.8} parent=5 // pred_check_branch
      %141 = sbr.rel (%p138) target = $region32
    $region31: #{double_deform_conv_forward.8} parent=5 // pred_region
      %s142 = ssub.s32 %s9, 1
      %p143 = scmp.lt.s32.totalorder %s14, 1
      %s144 = scalar_select %p143, %s14, 1
      %s145 = smul.addr %s144, 32
      %s146 = smul.addr %s145, 8
      %s147 = scalar_lea.vmem %s0, %s146
      %p148 = pneg %p35
      %p149 = pneg %p32
      %p150 = pneg %p56
      %p151 = pneg %p53
      %p152 = pneg %p77
      %p153 = pneg %p74
      %p154 = pneg %p103
      %p155 = pneg %p100
      %p156 = scmp.lt.s32.totalorder %s14, 1
      %s157 = scalar_select %p156, %s14, 1
      %s158 = smul.addr %s157, 32
      %s159 = smul.addr %s158, 8
      %s160 = scalar_lea.vmem %s3, %s159
      %p161 = scmp.lt.s32.totalorder %s14, 1
      %s162 = scalar_select %p161, %s14, 1
      %s163 = smul.addr %s162, 32
      %s164 = smul.addr %s163, 8
      %s165 = scalar_lea.vmem %s0, %s164
      %p166 = scmp.lt.s32.totalorder %s14, 1
      %s167 = scalar_select %p166, %s14, 1
      %s168 = smul.addr %s167, 32
      %s169 = smul.addr %s168, 8
      %s170 = scalar_lea.vmem %s3, %s169
      %v171 = vld [vmem:[%s165] sm:$0xff]
      %v172 = vld [vmem:[%s165 + $0x8] sm:$0xff]
      %v173 = vld [vmem:[%s165 + $0x10] sm:$0xff]
      %v174 = vld [vmem:[%s165 + $0x18] sm:$0xff]
      %v175 = vld [vmem:[%s165 + $0x20] sm:$0xff]
      %v176 = vld [vmem:[%s165 + $0x28] sm:$0xff]
      %v177 = vld [vmem:[%s165 + $0x30] sm:$0xff]
      %v178 = vld [vmem:[%s165 + $0x38] sm:$0xff]
      %v179 = vld [vmem:[%s165 + $0x40] sm:$0xff]
      %v180 = vld [vmem:[%s165 + $0x48] sm:$0xff]
      %v181 = vld [vmem:[%s165 + $0x50] sm:$0xff]
      %v182 = vld [vmem:[%s165 + $0x58] sm:$0xff]
      %v183 = vld [vmem:[%s165 + $0x60] sm:$0xff]
      %v184 = vld [vmem:[%s165 + $0x68] sm:$0xff]
      %v185 = vld [vmem:[%s165 + $0x70] sm:$0xff]
      %v186 = vld [vmem:[%s165 + $0x78] sm:$0xff]
      %v187 = vld [vmem:[%s165 + $0x80] sm:$0xff]
      %v188 = vld [vmem:[%s165 + $0x88] sm:$0xff]
      %v189 = vld [vmem:[%s165 + $0x90] sm:$0xff]
      %v190 = vld [vmem:[%s165 + $0x98] sm:$0xff]
      %v191 = vld [vmem:[%s165 + $0xa0] sm:$0xff]
      %v192 = vld [vmem:[%s165 + $0xa8] sm:$0xff]
      %v193 = vld [vmem:[%s165 + $0xb0] sm:$0xff]
      %v194 = vld [vmem:[%s165 + $0xb8] sm:$0xff]
      %v195 = vld [vmem:[%s165 + $0xc0] sm:$0xff]
      %v196 = vld [vmem:[%s165 + $0xc8] sm:$0xff]
      %v197 = vld [vmem:[%s165 + $0xd0] sm:$0xff]
      %v198 = vld [vmem:[%s165 + $0xd8] sm:$0xff]
      %v199 = vld [vmem:[%s165 + $0xe0] sm:$0xff]
      %v200 = vld [vmem:[%s165 + $0xe8] sm:$0xff]
      %v201 = vld [vmem:[%s165 + $0xf0] sm:$0xff]
      %v202 = vld [vmem:[%s165 + $0xf8] sm:$0xff]
      %v203 = vld [vmem:[%s1] sm:$0xff]
      %v204 = vld [vmem:[%s1 + $0x8] sm:$0xff]
      %v205 = vld [vmem:[%s1 + $0x10] sm:$0xff]
      %v206 = vld [vmem:[%s1 + $0x18] sm:$0xff]
      %v207 = vld [vmem:[%s1 + $0x20] sm:$0xff]
      %v208 = vld [vmem:[%s1 + $0x28] sm:$0xff]
      %v209 = vld [vmem:[%s1 + $0x30] sm:$0xff]
      %v210 = vld [vmem:[%s1 + $0x38] sm:$0xff]
      %v211 = vld [vmem:[%s1 + $0x40] sm:$0xff]
      %v212 = vld [vmem:[%s1 + $0x48] sm:$0xff]
      %v213 = vld [vmem:[%s1 + $0x50] sm:$0xff]
      %v214 = vld [vmem:[%s1 + $0x58] sm:$0xff]
      %v215 = vld [vmem:[%s1 + $0x60] sm:$0xff]
      %v216 = vld [vmem:[%s1 + $0x68] sm:$0xff]
      %v217 = vld [vmem:[%s1 + $0x70] sm:$0xff]
      %v218 = vld [vmem:[%s1 + $0x78] sm:$0xff]
      %220 = vset.pattern.permute.xlu0 0
      %221 = vperm.xlu0 %220, %v203
      %v222 = vpop.permute.xlu0 %221
      %225 = vset.pattern.permute.xlu0 0
      %226 = vperm.xlu0 %225, %v204
      %v227 = vpop.permute.xlu0 %226
      %230 = vset.pattern.permute.xlu0 0
      %231 = vperm.xlu0 %230, %v205
      %v232 = vpop.permute.xlu0 %231
      %235 = vset.pattern.permute.xlu0 0
      %236 = vperm.xlu0 %235, %v206
      %v237 = vpop.permute.xlu0 %236
      %240 = vset.pattern.permute.xlu0 0
      %241 = vperm.xlu0 %240, %v207
      %v242 = vpop.permute.xlu0 %241
      %245 = vset.pattern.permute.xlu0 0
      %246 = vperm.xlu0 %245, %v208
      %v247 = vpop.permute.xlu0 %246
      %250 = vset.pattern.permute.xlu0 0
      %251 = vperm.xlu0 %250, %v209
      %v252 = vpop.permute.xlu0 %251
      %255 = vset.pattern.permute.xlu0 0
      %256 = vperm.xlu0 %255, %v210
      %v257 = vpop.permute.xlu0 %256
      %260 = vset.pattern.permute.xlu0 0
      %261 = vperm.xlu0 %260, %v211
      %v262 = vpop.permute.xlu0 %261
      %265 = vset.pattern.permute.xlu0 0
      %266 = vperm.xlu0 %265, %v212
      %v267 = vpop.permute.xlu0 %266
      %270 = vset.pattern.permute.xlu0 0
      %271 = vperm.xlu0 %270, %v213
      %v272 = vpop.permute.xlu0 %271
      %275 = vset.pattern.permute.xlu0 0
      %276 = vperm.xlu0 %275, %v214
      %v277 = vpop.permute.xlu0 %276
      %280 = vset.pattern.permute.xlu0 0
      %281 = vperm.xlu0 %280, %v215
      %v282 = vpop.permute.xlu0 %281
      %285 = vset.pattern.permute.xlu0 0
      %286 = vperm.xlu0 %285, %v216
      %v287 = vpop.permute.xlu0 %286
      %290 = vset.pattern.permute.xlu0 0
      %291 = vperm.xlu0 %290, %v217
      %v292 = vpop.permute.xlu0 %291
      %295 = vset.pattern.permute.xlu0 0
      %296 = vperm.xlu0 %295, %v218
      %v297 = vpop.permute.xlu0 %296
      %v299 = vmul.f32 %v171, %v222
      %v300 = vmul.f32 %v172, %v222
      %v301 = vmul.f32 %v173, %v227
      %v302 = vmul.f32 %v174, %v227
      %v303 = vmul.f32 %v175, %v232
      %v304 = vmul.f32 %v176, %v232
      %v305 = vmul.f32 %v177, %v237
      %v306 = vmul.f32 %v178, %v237
      %v307 = vmul.f32 %v179, %v242
      %v308 = vmul.f32 %v180, %v242
      %v309 = vmul.f32 %v181, %v247
      %v310 = vmul.f32 %v182, %v247
      %v311 = vmul.f32 %v183, %v252
      %v312 = vmul.f32 %v184, %v252
      %v313 = vmul.f32 %v185, %v257
      %v314 = vmul.f32 %v186, %v257
      %v315 = vmul.f32 %v187, %v262
      %v316 = vmul.f32 %v188, %v262
      %v317 = vmul.f32 %v189, %v267
      %v318 = vmul.f32 %v190, %v267
      %v319 = vmul.f32 %v191, %v272
      %v320 = vmul.f32 %v192, %v272
      %v321 = vmul.f32 %v193, %v277
      %v322 = vmul.f32 %v194, %v277
      %v323 = vmul.f32 %v195, %v282
      %v324 = vmul.f32 %v196, %v282
      %v325 = vmul.f32 %v197, %v287
      %v326 = vmul.f32 %v198, %v287
      %v327 = vmul.f32 %v199, %v292
      %v328 = vmul.f32 %v200, %v292
      %v329 = vmul.f32 %v201, %v297
      %v330 = vmul.f32 %v202, %v297
      %v331 = vld [vmem:[%s2] sm:$0xff]
      %v332 = vld [vmem:[%s2 + $0x8] sm:$0xff]
      %v333 = vld [vmem:[%s2 + $0x10] sm:$0xff]
      %v334 = vld [vmem:[%s2 + $0x18] sm:$0xff]
      %v335 = vld [vmem:[%s2 + $0x20] sm:$0xff]
      %v336 = vld [vmem:[%s2 + $0x28] sm:$0xff]
      %v337 = vld [vmem:[%s2 + $0x30] sm:$0xff]
      %v338 = vld [vmem:[%s2 + $0x38] sm:$0xff]
      %v339 = vld [vmem:[%s2 + $0x40] sm:$0xff]
      %v340 = vld [vmem:[%s2 + $0x48] sm:$0xff]
      %v341 = vld [vmem:[%s2 + $0x50] sm:$0xff]
      %v342 = vld [vmem:[%s2 + $0x58] sm:$0xff]
      %v343 = vld [vmem:[%s2 + $0x60] sm:$0xff]
      %v344 = vld [vmem:[%s2 + $0x68] sm:$0xff]
      %v345 = vld [vmem:[%s2 + $0x70] sm:$0xff]
      %v346 = vld [vmem:[%s2 + $0x78] sm:$0xff]
      %348 = vset.pattern.permute.xlu0 0
      %349 = vperm.xlu0 %348, %v331
      %v350 = vpop.permute.xlu0 %349
      %353 = vset.pattern.permute.xlu0 0
      %354 = vperm.xlu0 %353, %v332
      %v355 = vpop.permute.xlu0 %354
      %358 = vset.pattern.permute.xlu0 0
      %359 = vperm.xlu0 %358, %v333
      %v360 = vpop.permute.xlu0 %359
      %363 = vset.pattern.permute.xlu0 0
      %364 = vperm.xlu0 %363, %v334
      %v365 = vpop.permute.xlu0 %364
      %368 = vset.pattern.permute.xlu0 0
      %369 = vperm.xlu0 %368, %v335
      %v370 = vpop.permute.xlu0 %369
      %373 = vset.pattern.permute.xlu0 0
      %374 = vperm.xlu0 %373, %v336
      %v375 = vpop.permute.xlu0 %374
      %378 = vset.pattern.permute.xlu0 0
      %379 = vperm.xlu0 %378, %v337
      %v380 = vpop.permute.xlu0 %379
      %383 = vset.pattern.permute.xlu0 0
      %384 = vperm.xlu0 %383, %v338
      %v385 = vpop.permute.xlu0 %384
      %388 = vset.pattern.permute.xlu0 0
      %389 = vperm.xlu0 %388, %v339
      %v390 = vpop.permute.xlu0 %389
      %393 = vset.pattern.permute.xlu0 0
      %394 = vperm.xlu0 %393, %v340
      %v395 = vpop.permute.xlu0 %394
      %398 = vset.pattern.permute.xlu0 0
      %399 = vperm.xlu0 %398, %v341
      %v400 = vpop.permute.xlu0 %399
      %403 = vset.pattern.permute.xlu0 0
      %404 = vperm.xlu0 %403, %v342
      %v405 = vpop.permute.xlu0 %404
      %408 = vset.pattern.permute.xlu0 0
      %409 = vperm.xlu0 %408, %v343
      %v410 = vpop.permute.xlu0 %409
      %413 = vset.pattern.permute.xlu0 0
      %414 = vperm.xlu0 %413, %v344
      %v415 = vpop.permute.xlu0 %414
      %418 = vset.pattern.permute.xlu0 0
      %419 = vperm.xlu0 %418, %v345
      %v420 = vpop.permute.xlu0 %419
      %423 = vset.pattern.permute.xlu0 0
      %424 = vperm.xlu0 %423, %v346
      %v425 = vpop.permute.xlu0 %424
      %v427 = vadd.f32 %v299, %v350
      %v428 = vadd.f32 %v300, %v350
      %v429 = vadd.f32 %v301, %v355
      %v430 = vadd.f32 %v302, %v355
      %v431 = vadd.f32 %v303, %v360
      %v432 = vadd.f32 %v304, %v360
      %v433 = vadd.f32 %v305, %v365
      %v434 = vadd.f32 %v306, %v365
      %v435 = vadd.f32 %v307, %v370
      %v436 = vadd.f32 %v308, %v370
      %v437 = vadd.f32 %v309, %v375
      %v438 = vadd.f32 %v310, %v375
      %v439 = vadd.f32 %v311, %v380
      %v440 = vadd.f32 %v312, %v380
      %v441 = vadd.f32 %v313, %v385
      %v442 = vadd.f32 %v314, %v385
      %v443 = vadd.f32 %v315, %v390
      %v444 = vadd.f32 %v316, %v390
      %v445 = vadd.f32 %v317, %v395
      %v446 = vadd.f32 %v318, %v395
      %v447 = vadd.f32 %v319, %v400
      %v448 = vadd.f32 %v320, %v400
      %v449 = vadd.f32 %v321, %v405
      %v450 = vadd.f32 %v322, %v405
      %v451 = vadd.f32 %v323, %v410
      %v452 = vadd.f32 %v324, %v410
      %v453 = vadd.f32 %v325, %v415
      %v454 = vadd.f32 %v326, %v415
      %v455 = vadd.f32 %v327, %v420
      %v456 = vadd.f32 %v328, %v420
      %v457 = vadd.f32 %v329, %v425
      %v458 = vadd.f32 %v330, %v425
      %v459 = vmax.f32 %v427, 0.0
      %v460 = vmax.f32 %v428, 0.0
      %v461 = vmax.f32 %v429, 0.0
      %v462 = vmax.f32 %v430, 0.0
      %v463 = vmax.f32 %v431, 0.0
      %v464 = vmax.f32 %v432, 0.0
      %v465 = vmax.f32 %v433, 0.0
      %v466 = vmax.f32 %v434, 0.0
      %v467 = vmax.f32 %v435, 0.0
      %v468 = vmax.f32 %v436, 0.0
      %v469 = vmax.f32 %v437, 0.0
      %v470 = vmax.f32 %v438, 0.0
      %v471 = vmax.f32 %v439, 0.0
      %v472 = vmax.f32 %v440, 0.0
      %v473 = vmax.f32 %v441, 0.0
      %v474 = vmax.f32 %v442, 0.0
      %v475 = vmax.f32 %v443, 0.0
      %v476 = vmax.f32 %v444, 0.0
      %v477 = vmax.f32 %v445, 0.0
      %v478 = vmax.f32 %v446, 0.0
      %v479 = vmax.f32 %v447, 0.0
      %v480 = vmax.f32 %v448, 0.0
      %v481 = vmax.f32 %v449, 0.0
      %v482 = vmax.f32 %v450, 0.0
      %v483 = vmax.f32 %v451, 0.0
      %v484 = vmax.f32 %v452, 0.0
      %v485 = vmax.f32 %v453, 0.0
      %v486 = vmax.f32 %v454, 0.0
      %v487 = vmax.f32 %v455, 0.0
      %v488 = vmax.f32 %v456, 0.0
      %v489 = vmax.f32 %v457, 0.0
      %v490 = vmax.f32 %v458, 0.0
      %491 = vst [vmem:[%s170] sm:$0xff] %v459
      %492 = vst [vmem:[%s170 + $0x8] sm:$0xff] %v460
      %493 = vst [vmem:[%s170 + $0x10] sm:$0xff] %v461
      %494 = vst [vmem:[%s170 + $0x18] sm:$0xff] %v462
      %495 = vst [vmem:[%s170 + $0x20] sm:$0xff] %v463
      %496 = vst [vmem:[%s170 + $0x28] sm:$0xff] %v464
      %497 = vst [vmem:[%s170 + $0x30] sm:$0xff] %v465
      %498 = vst [vmem:[%s170 + $0x38] sm:$0xff] %v466
      %499 = vst [vmem:[%s170 + $0x40] sm:$0xff] %v467
      %500 = vst [vmem:[%s170 + $0x48] sm:$0xff] %v468
      %501 = vst [vmem:[%s170 + $0x50] sm:$0xff] %v469
      %502 = vst [vmem:[%s170 + $0x58] sm:$0xff] %v470
      %503 = vst [vmem:[%s170 + $0x60] sm:$0xff] %v471
      %504 = vst [vmem:[%s170 + $0x68] sm:$0xff] %v472
      %505 = vst [vmem:[%s170 + $0x70] sm:$0xff] %v473
      %506 = vst [vmem:[%s170 + $0x78] sm:$0xff] %v474
      %507 = vst [vmem:[%s170 + $0x80] sm:$0xff] %v475
      %508 = vst [vmem:[%s170 + $0x88] sm:$0xff] %v476
      %509 = vst [vmem:[%s170 + $0x90] sm:$0xff] %v477
      %510 = vst [vmem:[%s170 + $0x98] sm:$0xff] %v478
      %511 = vst [vmem:[%s170 + $0xa0] sm:$0xff] %v479
      %512 = vst [vmem:[%s170 + $0xa8] sm:$0xff] %v480
      %513 = vst [vmem:[%s170 + $0xb0] sm:$0xff] %v481
      %514 = vst [vmem:[%s170 + $0xb8] sm:$0xff] %v482
      %515 = vst [vmem:[%s170 + $0xc0] sm:$0xff] %v483
      %516 = vst [vmem:[%s170 + $0xc8] sm:$0xff] %v484
      %517 = vst [vmem:[%s170 + $0xd0] sm:$0xff] %v485
      %518 = vst [vmem:[%s170 + $0xd8] sm:$0xff] %v486
      %519 = vst [vmem:[%s170 + $0xe0] sm:$0xff] %v487
      %520 = vst [vmem:[%s170 + $0xe8] sm:$0xff] %v488
      %521 = vst [vmem:[%s170 + $0xf0] sm:$0xff] %v489
      %522 = vst [vmem:[%s170 + $0xf8] sm:$0xff] %v490
      %p523 = scmp.lt.s32.totalorder %s14, 1
      %s524 = scalar_select %p523, %s14, 1
      %s525 = smul.addr %s524, 32
      %s526 = smul.addr %s525, 8
      %s527 = scalar_lea.vmem %s3, %s526
      // Predicated region
      $region33: #{double_deform_conv_forward.8} parent=31 // pred_check
        %p528 = pneg %p100
      $region34: #{double_deform_conv_forward.8} parent=31 // pred_check_branch
        %530 = sbr.rel (%p528) target = $region36
      $region35: #{double_deform_conv_forward.8} parent=31 // pred_region
        _
      $region36: #{double_deform_conv_forward.8} parent=31 // pred_fallthru
        _
    $region32: #{double_deform_conv_forward.8} parent=5 // pred_fallthru
      _
    %p531 = scmp.le.s32.totalorder 2, %s9
    // Predicated region
    $region37: #{double_deform_conv_forward.8} parent=5 // pred_check
      %p532 = pneg %p531
    $region38: #{double_deform_conv_forward.8} parent=5 // pred_check_branch
      %534 = sbr.rel (%p532) target = $region40
    $region39: #{double_deform_conv_forward.8} parent=5 // pred_region
      %s535 = ssub.s32 %s9, 2
      // Predicated region
      $region41: #{double_deform_conv_forward.8} parent=39 // pred_check
        %p536 = pneg %p106
      $region42: #{double_deform_conv_forward.8} parent=39 // pred_check_branch
        %538 = sbr.rel (%p536) target = $region44
      $region43: #{double_deform_conv_forward.8} parent=39 // pred_region
        %p539 = scmp.lt.s32.totalorder %s15, 1
        %s540 = scalar_select %p539, %s15, 1
        %s541 = smul.addr %s540, 32
        %s542 = smul.addr %s541, 8
        %s543 = scalar_lea.vmem %s3, %s542
      $region44: #{double_deform_conv_forward.8} parent=39 // pred_fallthru
        _
    $region40: #{double_deform_conv_forward.8} parent=5 // pred_fallthru
      _
  $region6: #{double_deform_conv_forward.8} parent=0 // loop_footer
    %s13 = sadd.s32 1, %s9
  $region7: #{double_deform_conv_forward.8} parent=0 // loop_footer_branch
    %8 = sbr.rel target = $region3
  $region8: #{double_deform_conv_forward.8} parent=0 // loop_exit
    _

// kernel: double_deform_conv_forward.7
$region0: #{double_deform_conv_forward.7}
  #allocation0 [shape = 'u32[]', space=smem, size = 0x4, offset = 0x4, fixed_abs, tag = 'smem constant byte address 0x4 - core index']
  #allocation1 [shape = 'u32[72,128]{1,0:T(1,128)}', space=vmem, size = 0x9000, scoped, tag = 'internal scratch']
  #allocation2 [shape = 'f32[128,256]{1,0:T(8,128)}', space=vmem, size = 0x20000, scoped, tag = 'scratch operand']
  %s0 = inlined_call_operand.vmem [shape: f32[2,128,256], index: 0, kind: input, shape index: {}]
  %s1 = inlined_call_operand.vmem [shape: f32[2,9,4,256], index: 1, kind: input, shape index: {}]
  %s2 = inlined_call_operand.vmem [shape: s32[2,9,4,256], index: 2, kind: input, shape index: {}]
  %s3 = inlined_call_operand.vmem [shape: bf16[9,128,128], index: 3, kind: input, shape index: {}]
  %s4 = inlined_call_operand.vmem [shape: f32[2,128,256], index: 4, kind: output, shape index: {0}]
  %s5 = inlined_call_operand.vmem [shape: f32[2,128,1], index: 5, kind: output, shape index: {1}]
  %s6 = inlined_call_operand.vmem [shape: f32[2,128,1], index: 6, kind: output, shape index: {2}]
  %7 = xla_tuple %s4, %s5, %s6
  %s8 = sld [smem:[#allocation0]]
  $region73: #{double_deform_conv_forward.7} parent=0
    _
  %s10 = ssub.s32 1, %s8
  %s11 = scalar_select 0, %s10, %s8
  loop: start=0, step=1, limit=20
  $region2: #{double_deform_conv_forward.7} parent=0 // loop_pre_header
    _
  $region3: #{double_deform_conv_forward.7} parent=0 // loop_header
    %s13 = sphi 0, %s17
    %p14 = scmp.ge.s32.totalorder %s13, 20
    %s20 = sphi 0, %s32
    %s21 = sphi 0, %s28
    %s22 = sphi 0, %s20
    %s23 = sphi 0, %s21
    %s24 = sphi 0, %s22
    %s25 = sphi 0, %s23
    %s35 = sphi 0, %s37
    %s38 = sphi 0, %s35
    %s39 = sphi 0, %s38
    %s55 = sphi 0, %s39
    %s63 = sphi 0, %s65
    %s66 = sphi 0, %s63
    %s67 = sphi 0, %s66
    %s83 = sphi 0, %s67
    %s91 = sphi 0, %s93
    %s94 = sphi 0, %s91
    %s95 = sphi 0, %s94
    %s111 = sphi 0, %s95
    %s117 = sphi 0, %s119
    %s120 = sphi 0, %s117
    %s121 = sphi 0, %s120
    %s137 = sphi 0, %s121
    %s143 = sphi 0, %s145
    %s146 = sphi 0, %s143
    %s147 = sphi 0, %s146
    %s163 = sphi 0, %s147
    %s169 = sphi 0, %s171
    %s172 = sphi 0, %s169
    %s173 = sphi 0, %s172
    %s189 = sphi 0, %s173
    %s195 = sphi 0, %s197
    %s198 = sphi 0, %s195
    %s199 = sphi 0, %s198
    %s215 = sphi 0, %s199
  $region4: #{double_deform_conv_forward.7} parent=0 // loop_header_branch
    %16 = sbr.rel (%p14) target = $region8
  $region5: #{double_deform_conv_forward.7} parent=0 // loop_body
    %s18 = ssub.s32 %s13, 1
    %s19 = ssub.s32 %s13, 2
    %s26 = sadd.s32 1, %s21
    %p27 = scmp.ge.s32.totalorder %s26, 9
    %s28 = scalar_select %p27, 0, %s26
    %s29 = sadd.s32 1, %s20
    %s30 = scalar_select %p27, %s29, %s20
    %p31 = scmp.ge.s32.totalorder %s30, 2
    %s32 = scalar_select %p31, 0, %s30
    %s33 = ssub.s32 %s20, %s32
    %p34 = scmp.eq.s32.totalorder %s33, 0
    %s36 = sadd.s32 %s35, 1
    %s37 = scalar_select %p34, %s35, %s36
    %p40 = pneg %p34
    %p41 = scmp.eq.s32.totalorder %s13, 17
    %p42 = por %p40, %p41
    %p43 = scmp.ne.s32.totalorder %s35, %s38
    %p44 = scmp.eq.s32.totalorder %s13, 0
    %p45 = por %p43, %p44
    %p46 = scmp.ne.s32.totalorder %s35, %s38
    %p47 = scmp.eq.s32.totalorder %s18, 17
    %p48 = por %p46, %p47
    %p49 = scmp.ne.s32.totalorder %s38, %s39
    %p50 = scmp.eq.s32.totalorder %s18, 0
    %p51 = por %p49, %p50
    %p52 = scmp.ne.s32.totalorder %s38, %s39
    %p53 = scmp.eq.s32.totalorder %s19, 17
    %p54 = por %p52, %p53
    %p56 = scmp.ne.s32.totalorder %s39, %s55
    %p57 = scmp.eq.s32.totalorder %s19, 0
    %p58 = por %p56, %p57
    %s59 = ssub.s32 %s20, %s32
    %s60 = ssub.s32 %s21, %s28
    %s61 = sor.u32 %s59, %s60
    %p62 = scmp.eq.s32.totalorder %s61, 0
    %s64 = sadd.s32 %s63, 1
    %s65 = scalar_select %p62, %s63, %s64
    %p68 = pneg %p62
    %p69 = scmp.eq.s32.totalorder %s13, 17
    %p70 = por %p68, %p69
    %p71 = scmp.ne.s32.totalorder %s63, %s66
    %p72 = scmp.eq.s32.totalorder %s13, 0
    %p73 = por %p71, %p72
    %p74 = scmp.ne.s32.totalorder %s63, %s66
    %p75 = scmp.eq.s32.totalorder %s18, 17
    %p76 = por %p74, %p75
    %p77 = scmp.ne.s32.totalorder %s66, %s67
    %p78 = scmp.eq.s32.totalorder %s18, 0
    %p79 = por %p77, %p78
    %p80 = scmp.ne.s32.totalorder %s66, %s67
    %p81 = scmp.eq.s32.totalorder %s19, 17
    %p82 = por %p80, %p81
    %p84 = scmp.ne.s32.totalorder %s67, %s83
    %p85 = scmp.eq.s32.totalorder %s19, 0
    %p86 = por %p84, %p85
    %s87 = ssub.s32 %s20, %s32
    %s88 = ssub.s32 %s21, %s28
    %s89 = sor.u32 %s87, %s88
    %p90 = scmp.eq.s32.totalorder %s89, 0
    %s92 = sadd.s32 %s91, 1
    %s93 = scalar_select %p90, %s91, %s92
    %p96 = pneg %p90
    %p97 = scmp.eq.s32.totalorder %s13, 17
    %p98 = por %p96, %p97
    %p99 = scmp.ne.s32.totalorder %s91, %s94
    %p100 = scmp.eq.s32.totalorder %s13, 0
    %p101 = por %p99, %p100
    %p102 = scmp.ne.s32.totalorder %s91, %s94
    %p103 = scmp.eq.s32.totalorder %s18, 17
    %p104 = por %p102, %p103
    %p105 = scmp.ne.s32.totalorder %s94, %s95
    %p106 = scmp.eq.s32.totalorder %s18, 0
    %p107 = por %p105, %p106
    %p108 = scmp.ne.s32.totalorder %s94, %s95
    %p109 = scmp.eq.s32.totalorder %s19, 17
    %p110 = por %p108, %p109
    %p112 = scmp.ne.s32.totalorder %s95, %s111
    %p113 = scmp.eq.s32.totalorder %s19, 0
    %p114 = por %p112, %p113
    %s115 = ssub.s32 %s21, %s28
    %p116 = scmp.eq.s32.totalorder %s115, 0
    %s118 = sadd.s32 %s117, 1
    %s119 = scalar_select %p116, %s117, %s118
    %p122 = pneg %p116
    %p123 = scmp.eq.s32.totalorder %s13, 17
    %p124 = por %p122, %p123
    %p125 = scmp.ne.s32.totalorder %s117, %s120
    %p126 = scmp.eq.s32.totalorder %s13, 0
    %p127 = por %p125, %p126
    %p128 = scmp.ne.s32.totalorder %s117, %s120
    %p129 = scmp.eq.s32.totalorder %s18, 17
    %p130 = por %p128, %p129
    %p131 = scmp.ne.s32.totalorder %s120, %s121
    %p132 = scmp.eq.s32.totalorder %s18, 0
    %p133 = por %p131, %p132
    %p134 = scmp.ne.s32.totalorder %s120, %s121
    %p135 = scmp.eq.s32.totalorder %s19, 17
    %p136 = por %p134, %p135
    %p138 = scmp.ne.s32.totalorder %s121, %s137
    %p139 = scmp.eq.s32.totalorder %s19, 0
    %p140 = por %p138, %p139
    %s141 = ssub.s32 %s20, %s32
    %p142 = scmp.eq.s32.totalorder %s141, 0
    %s144 = sadd.s32 %s143, 1
    %s145 = scalar_select %p142, %s143, %s144
    %p148 = pneg %p142
    %p149 = scmp.eq.s32.totalorder %s13, 17
    %p150 = por %p148, %p149
    %p151 = scmp.ne.s32.totalorder %s143, %s146
    %p152 = scmp.eq.s32.totalorder %s13, 0
    %p153 = por %p151, %p152
    %p154 = scmp.ne.s32.totalorder %s143, %s146
    %p155 = scmp.eq.s32.totalorder %s18, 17
    %p156 = por %p154, %p155
    %p157 = scmp.ne.s32.totalorder %s146, %s147
    %p158 = scmp.eq.s32.totalorder %s18, 0
    %p159 = por %p157, %p158
    %p160 = scmp.ne.s32.totalorder %s146, %s147
    %p161 = scmp.eq.s32.totalorder %s19, 17
    %p162 = por %p160, %p161
    %p164 = scmp.ne.s32.totalorder %s147, %s163
    %p165 = scmp.eq.s32.totalorder %s19, 0
    %p166 = por %p164, %p165
    %s167 = ssub.s32 %s20, %s32
    %p168 = scmp.eq.s32.totalorder %s167, 0
    %s170 = sadd.s32 %s169, 1
    %s171 = scalar_select %p168, %s169, %s170
    %p174 = pneg %p168
    %p175 = scmp.eq.s32.totalorder %s13, 17
    %p176 = por %p174, %p175
    %p177 = scmp.ne.s32.totalorder %s169, %s172
    %p178 = scmp.eq.s32.totalorder %s13, 0
    %p179 = por %p177, %p178
    %p180 = scmp.ne.s32.totalorder %s169, %s172
    %p181 = scmp.eq.s32.totalorder %s18, 17
    %p182 = por %p180, %p181
    %p183 = scmp.ne.s32.totalorder %s172, %s173
    %p184 = scmp.eq.s32.totalorder %s18, 0
    %p185 = por %p183, %p184
    %p186 = scmp.ne.s32.totalorder %s172, %s173
    %p187 = scmp.eq.s32.totalorder %s19, 17
    %p188 = por %p186, %p187
    %p190 = scmp.ne.s32.totalorder %s173, %s189
    %p191 = scmp.eq.s32.totalorder %s19, 0
    %p192 = por %p190, %p191
    %s193 = ssub.s32 %s20, %s32
    %p194 = scmp.eq.s32.totalorder %s193, 0
    %s196 = sadd.s32 %s195, 1
    %s197 = scalar_select %p194, %s195, %s196
    %p200 = pneg %p194
    %p201 = scmp.eq.s32.totalorder %s13, 17
    %p202 = por %p200, %p201
    %p203 = scmp.ne.s32.totalorder %s195, %s198
    %p204 = scmp.eq.s32.totalorder %s13, 0
    %p205 = por %p203, %p204
    %p206 = scmp.ne.s32.totalorder %s195, %s198
    %p207 = scmp.eq.s32.totalorder %s18, 17
    %p208 = por %p206, %p207
    %p209 = scmp.ne.s32.totalorder %s198, %s199
    %p210 = scmp.eq.s32.totalorder %s18, 0
    %p211 = por %p209, %p210
    %p212 = scmp.ne.s32.totalorder %s198, %s199
    %p213 = scmp.eq.s32.totalorder %s19, 17
    %p214 = por %p212, %p213
    %p216 = scmp.ne.s32.totalorder %s199, %s215
    %p217 = scmp.eq.s32.totalorder %s19, 0
    %p218 = por %p216, %p217
    %p219 = scmp.le.s32.totalorder 1, %s13
    %p220 = scmp.lt.s32.totalorder %s13, 19
    %p221 = pnand %p219, %p220
    %p222 = pneg %p221
    // Predicated region
    $region9: #{double_deform_conv_forward.7} parent=5 // pred_check
      _
    $region10: #{double_deform_conv_forward.7} parent=5 // pred_check_branch
      %224 = sbr.rel (%p221) target = $region12
    $region11: #{double_deform_conv_forward.7} parent=5 // pred_region
      %s225 = ssub.s32 %s13, 1
    $region12: #{double_deform_conv_forward.7} parent=5 // pred_fallthru
      _
    %p226 = scmp.lt.s32.totalorder %s13, 18
    // Predicated region
    $region13: #{double_deform_conv_forward.7} parent=5 // pred_check
      %p227 = pneg %p226
    $region14: #{double_deform_conv_forward.7} parent=5 // pred_check_branch
      %229 = sbr.rel (%p227) target = $region16
    $region15: #{double_deform_conv_forward.7} parent=5 // pred_region
      // Predicated region
      $region17: #{double_deform_conv_forward.7} parent=15 // pred_check
        %p230 = pneg %p45
      $region18: #{double_deform_conv_forward.7} parent=15 // pred_check_branch
        %232 = sbr.rel (%p230) target = $region20
      $region19: #{double_deform_conv_forward.7} parent=15 // pred_region
        %p233 = scmp.lt.s32.totalorder %s20, 1
        %s234 = scalar_select %p233, %s20, 1
        %s235 = smul.addr %s234, 32
        %s236 = smul.addr %s235, 8
        %s237 = scalar_lea.vmem %s0, %s236
      $region20: #{double_deform_conv_forward.7} parent=15 // pred_fallthru
        _
      // Predicated region
      $region21: #{double_deform_conv_forward.7} parent=15 // pred_check
        %p238 = pneg %p73
      $region22: #{double_deform_conv_forward.7} parent=15 // pred_check_branch
        %240 = sbr.rel (%p238) target = $region24
      $region23: #{double_deform_conv_forward.7} parent=15 // pred_region
        %p241 = scmp.lt.s32.totalorder %s20, 1
        %s242 = scalar_select %p241, %s20, 1
        %p243 = scmp.lt.s32.totalorder %s21, 8
        %s244 = scalar_select %p243, %s21, 8
        %s245 = smul.addr %s244, 2
        %s246 = smul.addr %s242, 18
        %s247 = sadd.s32 %s245, %s246
        %s248 = smul.addr %s247, 4
        %s249 = scalar_lea.vmem %s1, %s248
      $region24: #{double_deform_conv_forward.7} parent=15 // pred_fallthru
        _
      // Predicated region
      $region25: #{double_deform_conv_forward.7} parent=15 // pred_check
        %p250 = pneg %p101
      $region26: #{double_deform_conv_forward.7} parent=15 // pred_check_branch
        %252 = sbr.rel (%p250) target = $region28
      $region27: #{double_deform_conv_forward.7} parent=15 // pred_region
        %p253 = scmp.lt.s32.totalorder %s20, 1
        %s254 = scalar_select %p253, %s20, 1
        %p255 = scmp.lt.s32.totalorder %s21, 8
        %s256 = scalar_select %p255, %s21, 8
        %s257 = smul.addr %s256, 2
        %s258 = smul.addr %s254, 18
        %s259 = sadd.s32 %s257, %s258
        %s260 = smul.addr %s259, 4
        %s261 = scalar_lea.vmem %s2, %s260
      $region28: #{double_deform_conv_forward.7} parent=15 // pred_fallthru
        _
      // Predicated region
      $region29: #{double_deform_conv_forward.7} parent=15 // pred_check
        %p262 = pneg %p127
      $region30: #{double_deform_conv_forward.7} parent=15 // pred_check_branch
        %264 = sbr.rel (%p262) target = $region32
      $region31: #{double_deform_conv_forward.7} parent=15 // pred_region
        %p265 = scmp.lt.s32.totalorder %s21, 8
        %s266 = scalar_select %p265, %s21, 8
        %s267 = smul.addr %s266, 16
        %s268 = smul.addr %s267, 4
        %s269 = scalar_lea.vmem %s3, %s268
      $region32: #{double_deform_conv_forward.7} parent=15 // pred_fallthru
        _
    $region16: #{double_deform_conv_forward.7} parent=5 // pred_fallthru
      _
    %p270 = scmp.le.s32.totalorder 1, %s13
    %p271 = scmp.lt.s32.totalorder %s13, 19
    %p272 = pnand %p270, %p271
    %p273 = pneg %p272
    // Predicated region
    $region33: #{double_deform_conv_forward.7} parent=5 // pred_check
      _
    $region34: #{double_deform_conv_forward.7} parent=5 // pred_check_branch
      %275 = sbr.rel (%p272) target = $region36
    $region35: #{double_deform_conv_forward.7} parent=5 // pred_region
      %s276 = ssub.s32 %s13, 1
      %p277 = scmp.lt.s32.totalorder %s22, 1
      %s278 = scalar_select %p277, %s22, 1
      %s279 = smul.addr %s278, 32
      %s280 = smul.addr %s279, 8
      %s281 = scalar_lea.vmem %s0, %s280
      %p282 = pneg %p51
      %p283 = pneg %p48
      %p284 = scmp.lt.s32.totalorder %s22, 1
      %s285 = scalar_select %p284, %s22, 1
      %p286 = scmp.lt.s32.totalorder %s23, 8
      %s287 = scalar_select %p286, %s23, 8
      %s288 = smul.addr %s287, 2
      %s289 = smul.addr %s285, 18
      %s290 = sadd.s32 %s288, %s289
      %s291 = smul.addr %s290, 4
      %s292 = scalar_lea.vmem %s1, %s291
      %p293 = pneg %p79
      %p294 = pneg %p76
      %p295 = scmp.lt.s32.totalorder %s22, 1
      %s296 = scalar_select %p295, %s22, 1
      %p297 = scmp.lt.s32.totalorder %s23, 8
      %s298 = scalar_select %p297, %s23, 8
      %s299 = smul.addr %s298, 2
      %s300 = smul.addr %s296, 18
      %s301 = sadd.s32 %s299, %s300
      %s302 = smul.addr %s301, 4
      %s303 = scalar_lea.vmem %s2, %s302
      %p304 = pneg %p107
      %p305 = pneg %p104
      %p306 = scmp.lt.s32.totalorder %s23, 8
      %s307 = scalar_select %p306, %s23, 8
      %s308 = smul.addr %s307, 16
      %s309 = smul.addr %s308, 4
      %s310 = scalar_lea.vmem %s3, %s309
      %p311 = pneg %p133
      %p312 = pneg %p130
      %p313 = pneg %p159
      %p314 = pneg %p156
      %p315 = scmp.lt.s32.totalorder %s22, 1
      %s316 = scalar_select %p315, %s22, 1
      %s317 = smul.addr %s316, 32
      %s318 = smul.addr %s317, 8
      %s319 = scalar_lea.vmem %s4, %s318
      %p320 = pneg %p185
      %p321 = pneg %p182
      %p322 = scmp.lt.s32.totalorder %s22, 1
      %s323 = scalar_select %p322, %s22, 1
      %s324 = smul.addr %s323, 16
      %s325 = smul.addr %s324, 8
      %s326 = scalar_lea.vmem %s5, %s325
      %p327 = pneg %p211
      %p328 = pneg %p208
      %p329 = scmp.lt.s32.totalorder %s22, 1
      %s330 = scalar_select %p329, %s22, 1
      %s331 = smul.addr %s330, 16
      %s332 = smul.addr %s331, 8
      %s333 = scalar_lea.vmem %s6, %s332
      %p334 = scmp.lt.s32.totalorder %s22, 1
      %s335 = scalar_select %p334, %s22, 1
      %s336 = smul.addr %s335, 32
      %s337 = smul.addr %s336, 8
      %s338 = scalar_lea.vmem %s0, %s337
      %p339 = scmp.lt.s32.totalorder %s22, 1
      %s340 = scalar_select %p339, %s22, 1
      %p341 = scmp.lt.s32.totalorder %s23, 8
      %s342 = scalar_select %p341, %s23, 8
      %s343 = smul.addr %s342, 2
      %s344 = smul.addr %s340, 18
      %s345 = sadd.s32 %s343, %s344
      %s346 = smul.addr %s345, 4
      %s347 = scalar_lea.vmem %s1, %s346
      %p348 = scmp.lt.s32.totalorder %s22, 1
      %s349 = scalar_select %p348, %s22, 1
      %p350 = scmp.lt.s32.totalorder %s23, 8
      %s351 = scalar_select %p350, %s23, 8
      %s352 = smul.addr %s351, 2
      %s353 = smul.addr %s349, 18
      %s354 = sadd.s32 %s352, %s353
      %s355 = smul.addr %s354, 4
      %s356 = scalar_lea.vmem %s2, %s355
      %p357 = scmp.lt.s32.totalorder %s23, 8
      %s358 = scalar_select %p357, %s23, 8
      %s359 = smul.addr %s358, 16
      %s360 = smul.addr %s359, 4
      %s361 = scalar_lea.vmem %s3, %s360
      %p362 = scmp.lt.s32.totalorder %s22, 1
      %s363 = scalar_select %p362, %s22, 1
      %s364 = smul.addr %s363, 32
      %s365 = smul.addr %s364, 8
      %s366 = scalar_lea.vmem %s4, %s365
      %p367 = scmp.lt.s32.totalorder %s22, 1
      %s368 = scalar_select %p367, %s22, 1
      %s369 = smul.addr %s368, 16
      %s370 = smul.addr %s369, 8
      %s371 = scalar_lea.vmem %s5, %s370
      %p372 = scmp.lt.s32.totalorder %s22, 1
      %s373 = scalar_select %p372, %s22, 1
      %s374 = smul.addr %s373, 16
      %s375 = smul.addr %s374, 8
      %s376 = scalar_lea.vmem %s6, %s375
      %p377 = scmp.eq.s32.totalorder %s23, 0
      // Predicated region
      $region37: #{double_deform_conv_forward.7} parent=35 // pred_check
        %p378 = pneg %p377
      $region38: #{double_deform_conv_forward.7} parent=35 // pred_check_branch
        %380 = sbr.rel (%p378) target = $region40
      $region39: #{double_deform_conv_forward.7} parent=35 // pred_region
        %381 = vst [vmem:[#allocation2] sm:$0xff] 0.0
        %382 = vst [vmem:[#allocation2 + $0x8] sm:$0xff] 0.0
        %383 = vst [vmem:[#allocation2 + $0x10] sm:$0xff] 0.0
        %384 = vst [vmem:[#allocation2 + $0x18] sm:$0xff] 0.0
        %385 = vst [vmem:[#allocation2 + $0x20] sm:$0xff] 0.0
        %386 = vst [vmem:[#allocation2 + $0x28] sm:$0xff] 0.0
        %387 = vst [vmem:[#allocation2 + $0x30] sm:$0xff] 0.0
        %388 = vst [vmem:[#allocation2 + $0x38] sm:$0xff] 0.0
        %389 = vst [vmem:[#allocation2 + $0x40] sm:$0xff] 0.0
        %390 = vst [vmem:[#allocation2 + $0x48] sm:$0xff] 0.0
        %391 = vst [vmem:[#allocation2 + $0x50] sm:$0xff] 0.0
        %392 = vst [vmem:[#allocation2 + $0x58] sm:$0xff] 0.0
        %393 = vst [vmem:[#allocation2 + $0x60] sm:$0xff] 0.0
        %394 = vst [vmem:[#allocation2 + $0x68] sm:$0xff] 0.0
        %395 = vst [vmem:[#allocation2 + $0x70] sm:$0xff] 0.0
        %396 = vst [vmem:[#allocation2 + $0x78] sm:$0xff] 0.0
        %397 = vst [vmem:[#allocation2 + $0x80] sm:$0xff] 0.0
        %398 = vst [vmem:[#allocation2 + $0x88] sm:$0xff] 0.0
        %399 = vst [vmem:[#allocation2 + $0x90] sm:$0xff] 0.0
        %400 = vst [vmem:[#allocation2 + $0x98] sm:$0xff] 0.0
        %401 = vst [vmem:[#allocation2 + $0xa0] sm:$0xff] 0.0
        %402 = vst [vmem:[#allocation2 + $0xa8] sm:$0xff] 0.0
        %403 = vst [vmem:[#allocation2 + $0xb0] sm:$0xff] 0.0
        %404 = vst [vmem:[#allocation2 + $0xb8] sm:$0xff] 0.0
        %405 = vst [vmem:[#allocation2 + $0xc0] sm:$0xff] 0.0
        %406 = vst [vmem:[#allocation2 + $0xc8] sm:$0xff] 0.0
        %407 = vst [vmem:[#allocation2 + $0xd0] sm:$0xff] 0.0
        %408 = vst [vmem:[#allocation2 + $0xd8] sm:$0xff] 0.0
        %409 = vst [vmem:[#allocation2 + $0xe0] sm:$0xff] 0.0
        %410 = vst [vmem:[#allocation2 + $0xe8] sm:$0xff] 0.0
        %411 = vst [vmem:[#allocation2 + $0xf0] sm:$0xff] 0.0
        %412 = vst [vmem:[#allocation2 + $0xf8] sm:$0xff] 0.0
      $region40: #{double_deform_conv_forward.7} parent=35 // pred_fallthru
        _
      %v413 = vlaneseq
      %v414 = vshrl.u32 %v413, 7
      %v415 = vadd.s32 %v414, 8
      %v416 = vadd.s32 %v414, 16
      %v417 = vadd.s32 %v414, 24
      %v418 = vadd.s32 %v414, 32
      %v419 = vadd.s32 %v414, 40
      %v420 = vadd.s32 %v414, 48
      %v421 = vadd.s32 %v414, 56
      %v422 = vadd.s32 %v414, 64
      %v423 = vadd.s32 %v414, 72
      %v424 = vadd.s32 %v414, 80
      %v425 = vadd.s32 %v414, 88
      %v426 = vadd.s32 %v414, 96
      %v427 = vadd.s32 %v414, 104
      %v428 = vadd.s32 %v414, 112
      %v429 = vadd.s32 %v414, 120
      %v430 = vadd.s32 %v414, 128
      %v431 = vadd.s32 %v414, 136
      %v432 = vadd.s32 %v414, 144
      %v433 = vadd.s32 %v414, 152
      %v434 = vadd.s32 %v414, 160
      %v435 = vadd.s32 %v414, 168
      %v436 = vadd.s32 %v414, 176
      %v437 = vadd.s32 %v414, 184
      %v438 = vadd.s32 %v414, 192
      %v439 = vadd.s32 %v414, 200
      %v440 = vadd.s32 %v414, 208
      %v441 = vadd.s32 %v414, 216
      %v442 = vadd.s32 %v414, 224
      %v443 = vadd.s32 %v414, 232
      %v444 = vadd.s32 %v414, 240
      %v445 = vadd.s32 %v414, 248
      %v446 = vld [vmem:[%s347] sm:$0xff]
      %v447 = vld [vmem:[%s356] sm:$0xff]
      %v448 = vperm.slane %v447, 0
      %v449 = vperm.slane %v447, 4
      %v450 = vperm.slane %v448, 0
      %v451 = vperm.slane %v449, 0
      %vm452 = vcmp.eq.s32.totalorder %v414, %v450
      %vm453 = vcmp.eq.s32.totalorder %v414, %v451
      %vm454 = vcmp.eq.s32.totalorder %v415, %v450
      %vm455 = vcmp.eq.s32.totalorder %v415, %v451
      %vm456 = vcmp.eq.s32.totalorder %v416, %v450
      %vm457 = vcmp.eq.s32.totalorder %v416, %v451
      %vm458 = vcmp.eq.s32.totalorder %v417, %v450
      %vm459 = vcmp.eq.s32.totalorder %v417, %v451
      %vm460 = vcmp.eq.s32.totalorder %v418, %v450
      %vm461 = vcmp.eq.s32.totalorder %v418, %v451
      %vm462 = vcmp.eq.s32.totalorder %v419, %v450
      %vm463 = vcmp.eq.s32.totalorder %v419, %v451
      %vm464 = vcmp.eq.s32.totalorder %v420, %v450
      %vm465 = vcmp.eq.s32.totalorder %v420, %v451
      %vm466 = vcmp.eq.s32.totalorder %v421, %v450
      %vm467 = vcmp.eq.s32.totalorder %v421, %v451
      %vm468 = vcmp.eq.s32.totalorder %v422, %v450
      %vm469 = vcmp.eq.s32.totalorder %v422, %v451
      %vm470 = vcmp.eq.s32.totalorder %v423, %v450
      %vm471 = vcmp.eq.s32.totalorder %v423, %v451
      %vm472 = vcmp.eq.s32.totalorder %v424, %v450
      %vm473 = vcmp.eq.s32.totalorder %v424, %v451
      %vm474 = vcmp.eq.s32.totalorder %v425, %v450
      %vm475 = vcmp.eq.s32.totalorder %v425, %v451
      %vm476 = vcmp.eq.s32.totalorder %v426, %v450
      %vm477 = vcmp.eq.s32.totalorder %v426, %v451
      %vm478 = vcmp.eq.s32.totalorder %v427, %v450
      %vm479 = vcmp.eq.s32.totalorder %v427, %v451
      %vm480 = vcmp.eq.s32.totalorder %v428, %v450
      %vm481 = vcmp.eq.s32.totalorder %v428, %v451
      %vm482 = vcmp.eq.s32.totalorder %v429, %v450
      %vm483 = vcmp.eq.s32.totalorder %v429, %v451
      %vm484 = vcmp.eq.s32.totalorder %v430, %v450
      %vm485 = vcmp.eq.s32.totalorder %v430, %v451
      %vm486 = vcmp.eq.s32.totalorder %v431, %v450
      %vm487 = vcmp.eq.s32.totalorder %v431, %v451
      %vm488 = vcmp.eq.s32.totalorder %v432, %v450
      %vm489 = vcmp.eq.s32.totalorder %v432, %v451
      %vm490 = vcmp.eq.s32.totalorder %v433, %v450
      %vm491 = vcmp.eq.s32.totalorder %v433, %v451
      %vm492 = vcmp.eq.s32.totalorder %v434, %v450
      %vm493 = vcmp.eq.s32.totalorder %v434, %v451
      %vm494 = vcmp.eq.s32.totalorder %v435, %v450
      %vm495 = vcmp.eq.s32.totalorder %v435, %v451
      %vm496 = vcmp.eq.s32.totalorder %v436, %v450
      %vm497 = vcmp.eq.s32.totalorder %v436, %v451
      %vm498 = vcmp.eq.s32.totalorder %v437, %v450
      %vm499 = vcmp.eq.s32.totalorder %v437, %v451
      %vm500 = vcmp.eq.s32.totalorder %v438, %v450
      %vm501 = vcmp.eq.s32.totalorder %v438, %v451
      %vm502 = vcmp.eq.s32.totalorder %v439, %v450
      %vm503 = vcmp.eq.s32.totalorder %v439, %v451
      %vm504 = vcmp.eq.s32.totalorder %v440, %v450
      %vm505 = vcmp.eq.s32.totalorder %v440, %v451
      %vm506 = vcmp.eq.s32.totalorder %v441, %v450
      %vm507 = vcmp.eq.s32.totalorder %v441, %v451
      %vm508 = vcmp.eq.s32.totalorder %v442, %v450
      %vm509 = vcmp.eq.s32.totalorder %v442, %v451
      %vm510 = vcmp.eq.s32.totalorder %v443, %v450
      %vm511 = vcmp.eq.s32.totalorder %v443, %v451
      %vm512 = vcmp.eq.s32.totalorder %v444, %v450
      %vm513 = vcmp.eq.s32.totalorder %v444, %v451
      %vm514 = vcmp.eq.s32.totalorder %v445, %v450
      %vm515 = vcmp.eq.s32.totalorder %v445, %v451
      %v517 = vperm.slane %v446, 0
      %v518 = vperm.slane %v446, 4
      %v521 = vperm.slane %v517, 0
      %v522 = vperm.slane %v518, 0
      %v523 = vsel %vm452, %v521, 0.0
      %v524 = vsel %vm453, %v522, 0.0
      %v525 = vsel %vm454, %v521, 0.0
      %v526 = vsel %vm455, %v522, 0.0
      %v527 = vsel %vm456, %v521, 0.0
      %v528 = vsel %vm457, %v522, 0.0
      %v529 = vsel %vm458, %v521, 0.0
      %v530 = vsel %vm459, %v522, 0.0
      %v531 = vsel %vm460, %v521, 0.0
      %v532 = vsel %vm461, %v522, 0.0
      %v533 = vsel %vm462, %v521, 0.0
      %v534 = vsel %vm463, %v522, 0.0
      %v535 = vsel %vm464, %v521, 0.0
      %v536 = vsel %vm465, %v522, 0.0
      %v537 = vsel %vm466, %v521, 0.0
      %v538 = vsel %vm467, %v522, 0.0
      %v539 = vsel %vm468, %v521, 0.0
      %v540 = vsel %vm469, %v522, 0.0
      %v541 = vsel %vm470, %v521, 0.0
      %v542 = vsel %vm471, %v522, 0.0
      %v543 = vsel %vm472, %v521, 0.0
      %v544 = vsel %vm473, %v522, 0.0
      %v545 = vsel %vm474, %v521, 0.0
      %v546 = vsel %vm475, %v522, 0.0
      %v547 = vsel %vm476, %v521, 0.0
      %v548 = vsel %vm477, %v522, 0.0
      %v549 = vsel %vm478, %v521, 0.0
      %v550 = vsel %vm479, %v522, 0.0
      %v551 = vsel %vm480, %v521, 0.0
      %v552 = vsel %vm481, %v522, 0.0
      %v553 = vsel %vm482, %v521, 0.0
      %v554 = vsel %vm483, %v522, 0.0
      %v555 = vsel %vm484, %v521, 0.0
      %v556 = vsel %vm485, %v522, 0.0
      %v557 = vsel %vm486, %v521, 0.0
      %v558 = vsel %vm487, %v522, 0.0
      %v559 = vsel %vm488, %v521, 0.0
      %v560 = vsel %vm489, %v522, 0.0
      %v561 = vsel %vm490, %v521, 0.0
      %v562 = vsel %vm491, %v522, 0.0
      %v563 = vsel %vm492, %v521, 0.0
      %v564 = vsel %vm493, %v522, 0.0
      %v565 = vsel %vm494, %v521, 0.0
      %v566 = vsel %vm495, %v522, 0.0
      %v567 = vsel %vm496, %v521, 0.0
      %v568 = vsel %vm497, %v522, 0.0
      %v569 = vsel %vm498, %v521, 0.0
      %v570 = vsel %vm499, %v522, 0.0
      %v571 = vsel %vm500, %v521, 0.0
      %v572 = vsel %vm501, %v522, 0.0
      %v573 = vsel %vm502, %v521, 0.0
      %v574 = vsel %vm503, %v522, 0.0
      %v575 = vsel %vm504, %v521, 0.0
      %v576 = vsel %vm505, %v522, 0.0
      %v577 = vsel %vm506, %v521, 0.0
      %v578 = vsel %vm507, %v522, 0.0
      %v579 = vsel %vm508, %v521, 0.0
      %v580 = vsel %vm509, %v522, 0.0
      %v581 = vsel %vm510, %v521, 0.0
      %v582 = vsel %vm511, %v522, 0.0
      %v583 = vsel %vm512, %v521, 0.0
      %v584 = vsel %vm513, %v522, 0.0
      %v585 = vsel %vm514, %v521, 0.0
      %v586 = vsel %vm515, %v522, 0.0
      %v587 = vadd.f32 %v523, 0.0
      %v588 = vadd.f32 %v524, 0.0
      %v589 = vadd.f32 %v525, 0.0
      %v590 = vadd.f32 %v526, 0.0
      %v591 = vadd.f32 %v527, 0.0
      %v592 = vadd.f32 %v528, 0.0
      %v593 = vadd.f32 %v529, 0.0
      %v594 = vadd.f32 %v530, 0.0
      %v595 = vadd.f32 %v531, 0.0
      %v596 = vadd.f32 %v532, 0.0
      %v597 = vadd.f32 %v533, 0.0
      %v598 = vadd.f32 %v534, 0.0
      %v599 = vadd.f32 %v535, 0.0
      %v600 = vadd.f32 %v536, 0.0
      %v601 = vadd.f32 %v537, 0.0
      %v602 = vadd.f32 %v538, 0.0
      %v603 = vadd.f32 %v539, 0.0
      %v604 = vadd.f32 %v540, 0.0
      %v605 = vadd.f32 %v541, 0.0
      %v606 = vadd.f32 %v542, 0.0
      %v607 = vadd.f32 %v543, 0.0
      %v608 = vadd.f32 %v544, 0.0
      %v609 = vadd.f32 %v545, 0.0
      %v610 = vadd.f32 %v546, 0.0
      %v611 = vadd.f32 %v547, 0.0
      %v612 = vadd.f32 %v548, 0.0
      %v613 = vadd.f32 %v549, 0.0
      %v614 = vadd.f32 %v550, 0.0
      %v615 = vadd.f32 %v551, 0.0
      %v616 = vadd.f32 %v552, 0.0
      %v617 = vadd.f32 %v553, 0.0
      %v618 = vadd.f32 %v554, 0.0
      %v619 = vadd.f32 %v555, 0.0
      %v620 = vadd.f32 %v556, 0.0
      %v621 = vadd.f32 %v557, 0.0
      %v622 = vadd.f32 %v558, 0.0
      %v623 = vadd.f32 %v559, 0.0
      %v624 = vadd.f32 %v560, 0.0
      %v625 = vadd.f32 %v561, 0.0
      %v626 = vadd.f32 %v562, 0.0
      %v627 = vadd.f32 %v563, 0.0
      %v628 = vadd.f32 %v564, 0.0
      %v629 = vadd.f32 %v565, 0.0
      %v630 = vadd.f32 %v566, 0.0
      %v631 = vadd.f32 %v567, 0.0
      %v632 = vadd.f32 %v568, 0.0
      %v633 = vadd.f32 %v569, 0.0
      %v634 = vadd.f32 %v570, 0.0
      %v635 = vadd.f32 %v571, 0.0
      %v636 = vadd.f32 %v572, 0.0
      %v637 = vadd.f32 %v573, 0.0
      %v638 = vadd.f32 %v574, 0.0
      %v639 = vadd.f32 %v575, 0.0
      %v640 = vadd.f32 %v576, 0.0
      %v641 = vadd.f32 %v577, 0.0
      %v642 = vadd.f32 %v578, 0.0
      %v643 = vadd.f32 %v579, 0.0
      %v644 = vadd.f32 %v580, 0.0
      %v645 = vadd.f32 %v581, 0.0
      %v646 = vadd.f32 %v582, 0.0
      %v647 = vadd.f32 %v583, 0.0
      %v648 = vadd.f32 %v584, 0.0
      %v649 = vadd.f32 %v585, 0.0
      %v650 = vadd.f32 %v586, 0.0
      %v651 = vperm.slane %v447, 1
      %v652 = vperm.slane %v447, 5
      %v653 = vperm.slane %v651, 1
      %v654 = vperm.slane %v652, 1
      %vm655 = vcmp.eq.s32.totalorder %v414, %v653
      %vm656 = vcmp.eq.s32.totalorder %v414, %v654
      %vm657 = vcmp.eq.s32.totalorder %v415, %v653
      %vm658 = vcmp.eq.s32.totalorder %v415, %v654
      %vm659 = vcmp.eq.s32.totalorder %v416, %v653
      %vm660 = vcmp.eq.s32.totalorder %v416, %v654
      %vm661 = vcmp.eq.s32.totalorder %v417, %v653
      %vm662 = vcmp.eq.s32.totalorder %v417, %v654
      %vm663 = vcmp.eq.s32.totalorder %v418, %v653
      %vm664 = vcmp.eq.s32.totalorder %v418, %v654
      %vm665 = vcmp.eq.s32.totalorder %v419, %v653
      %vm666 = vcmp.eq.s32.totalorder %v419, %v654
      %vm667 = vcmp.eq.s32.totalorder %v420, %v653
      %vm668 = vcmp.eq.s32.totalorder %v420, %v654
      %vm669 = vcmp.eq.s32.totalorder %v421, %v653
      %vm670 = vcmp.eq.s32.totalorder %v421, %v654
      %vm671 = vcmp.eq.s32.totalorder %v422, %v653
      %vm672 = vcmp.eq.s32.totalorder %v422, %v654
      %vm673 = vcmp.eq.s32.totalorder %v423, %v653
      %vm674 = vcmp.eq.s32.totalorder %v423, %v654
      %vm675 = vcmp.eq.s32.totalorder %v424, %v653
      %vm676 = vcmp.eq.s32.totalorder %v424, %v654
      %vm677 = vcmp.eq.s32.totalorder %v425, %v653
      %vm678 = vcmp.eq.s32.totalorder %v425, %v654
      %vm679 = vcmp.eq.s32.totalorder %v426, %v653
      %vm680 = vcmp.eq.s32.totalorder %v426, %v654
      %vm681 = vcmp.eq.s32.totalorder %v427, %v653
      %vm682 = vcmp.eq.s32.totalorder %v427, %v654
      %vm683 = vcmp.eq.s32.totalorder %v428, %v653
      %vm684 = vcmp.eq.s32.totalorder %v428, %v654
      %vm685 = vcmp.eq.s32.totalorder %v429, %v653
      %vm686 = vcmp.eq.s32.totalorder %v429, %v654
      %vm687 = vcmp.eq.s32.totalorder %v430, %v653
      %vm688 = vcmp.eq.s32.totalorder %v430, %v654
      %vm689 = vcmp.eq.s32.totalorder %v431, %v653
      %vm690 = vcmp.eq.s32.totalorder %v431, %v654
      %vm691 = vcmp.eq.s32.totalorder %v432, %v653
      %vm692 = vcmp.eq.s32.totalorder %v432, %v654
      %vm693 = vcmp.eq.s32.totalorder %v433, %v653
      %vm694 = vcmp.eq.s32.totalorder %v433, %v654
      %vm695 = vcmp.eq.s32.totalorder %v434, %v653
      %vm696 = vcmp.eq.s32.totalorder %v434, %v654
      %vm697 = vcmp.eq.s32.totalorder %v435, %v653
      %vm698 = vcmp.eq.s32.totalorder %v435, %v654
      %vm699 = vcmp.eq.s32.totalorder %v436, %v653
      %vm700 = vcmp.eq.s32.totalorder %v436, %v654
      %vm701 = vcmp.eq.s32.totalorder %v437, %v653
      %vm702 = vcmp.eq.s32.totalorder %v437, %v654
      %vm703 = vcmp.eq.s32.totalorder %v438, %v653
      %vm704 = vcmp.eq.s32.totalorder %v438, %v654
      %vm705 = vcmp.eq.s32.totalorder %v439, %v653
      %vm706 = vcmp.eq.s32.totalorder %v439, %v654
      %vm707 = vcmp.eq.s32.totalorder %v440, %v653
      %vm708 = vcmp.eq.s32.totalorder %v440, %v654
      %vm709 = vcmp.eq.s32.totalorder %v441, %v653
      %vm710 = vcmp.eq.s32.totalorder %v441, %v654
      %vm711 = vcmp.eq.s32.totalorder %v442, %v653
      %vm712 = vcmp.eq.s32.totalorder %v442, %v654
      %vm713 = vcmp.eq.s32.totalorder %v443, %v653
      %vm714 = vcmp.eq.s32.totalorder %v443, %v654
      %vm715 = vcmp.eq.s32.totalorder %v444, %v653
      %vm716 = vcmp.eq.s32.totalorder %v444, %v654
      %vm717 = vcmp.eq.s32.totalorder %v445, %v653
      %vm718 = vcmp.eq.s32.totalorder %v445, %v654
      %v719 = vperm.slane %v446, 1
      %v720 = vperm.slane %v446, 5
      %v723 = vperm.slane %v719, 1
      %v724 = vperm.slane %v720, 1
      %v725 = vsel %vm655, %v723, 0.0
      %v726 = vsel %vm656, %v724, 0.0
      %v727 = vsel %vm657, %v723, 0.0
      %v728 = vsel %vm658, %v724, 0.0
      %v729 = vsel %vm659, %v723, 0.0
      %v730 = vsel %vm660, %v724, 0.0
      %v731 = vsel %vm661, %v723, 0.0
      %v732 = vsel %vm662, %v724, 0.0
      %v733 = vsel %vm663, %v723, 0.0
      %v734 = vsel %vm664, %v724, 0.0
      %v735 = vsel %vm665, %v723, 0.0
      %v736 = vsel %vm666, %v724, 0.0
      %v737 = vsel %vm667, %v723, 0.0
      %v738 = vsel %vm668, %v724, 0.0
      %v739 = vsel %vm669, %v723, 0.0
      %v740 = vsel %vm670, %v724, 0.0
      %v741 = vsel %vm671, %v723, 0.0
      %v742 = vsel %vm672, %v724, 0.0
      %v743 = vsel %vm673, %v723, 0.0
      %v744 = vsel %vm674, %v724, 0.0
      %v745 = vsel %vm675, %v723, 0.0
      %v746 = vsel %vm676, %v724, 0.0
      %v747 = vsel %vm677, %v723, 0.0
      %v748 = vsel %vm678, %v724, 0.0
      %v749 = vsel %vm679, %v723, 0.0
      %v750 = vsel %vm680, %v724, 0.0
      %v751 = vsel %vm681, %v723, 0.0
      %v752 = vsel %vm682, %v724, 0.0
      %v753 = vsel %vm683, %v723, 0.0
      %v754 = vsel %vm684, %v724, 0.0
      %v755 = vsel %vm685, %v723, 0.0
      %v756 = vsel %vm686, %v724, 0.0
      %v757 = vsel %vm687, %v723, 0.0
      %v758 = vsel %vm688, %v724, 0.0
      %v759 = vsel %vm689, %v723, 0.0
      %v760 = vsel %vm690, %v724, 0.0
      %v761 = vsel %vm691, %v723, 0.0
      %v762 = vsel %vm692, %v724, 0.0
      %v763 = vsel %vm693, %v723, 0.0
      %v764 = vsel %vm694, %v724, 0.0
      %v765 = vsel %vm695, %v723, 0.0
      %v766 = vsel %vm696, %v724, 0.0
      %v767 = vsel %vm697, %v723, 0.0
      %v768 = vsel %vm698, %v724, 0.0
      %v769 = vsel %vm699, %v723, 0.0
      %v770 = vsel %vm700, %v724, 0.0
      %v771 = vsel %vm701, %v723, 0.0
      %v772 = vsel %vm702, %v724, 0.0
      %v773 = vsel %vm703, %v723, 0.0
      %v774 = vsel %vm704, %v724, 0.0
      %v775 = vsel %vm705, %v723, 0.0
      %v776 = vsel %vm706, %v724, 0.0
      %v777 = vsel %vm707, %v723, 0.0
      %v778 = vsel %vm708, %v724, 0.0
      %v779 = vsel %vm709, %v723, 0.0
      %v780 = vsel %vm710, %v724, 0.0
      %v781 = vsel %vm711, %v723, 0.0
      %v782 = vsel %vm712, %v724, 0.0
      %v783 = vsel %vm713, %v723, 0.0
      %v784 = vsel %vm714, %v724, 0.0
      %v785 = vsel %vm715, %v723, 0.0
      %v786 = vsel %vm716, %v724, 0.0
      %v787 = vsel %vm717, %v723, 0.0
      %v788 = vsel %vm718, %v724, 0.0
      %v789 = vadd.f32 %v587, %v725
      %v790 = vadd.f32 %v588, %v726
      %v791 = vadd.f32 %v589, %v727
      %v792 = vadd.f32 %v590, %v728
      %v793 = vadd.f32 %v591, %v729
      %v794 = vadd.f32 %v592, %v730
      %v795 = vadd.f32 %v593, %v731
      %v796 = vadd.f32 %v594, %v732
      %v797 = vadd.f32 %v595, %v733
      %v798 = vadd.f32 %v596, %v734
      %v799 = vadd.f32 %v597, %v735
      %v800 = vadd.f32 %v598, %v736
      %v801 = vadd.f32 %v599, %v737
      %v802 = vadd.f32 %v600, %v738
      %v803 = vadd.f32 %v601, %v739
      %v804 = vadd.f32 %v602, %v740
      %v805 = vadd.f32 %v603, %v741
      %v806 = vadd.f32 %v604, %v742
      %v807 = vadd.f32 %v605, %v743
      %v808 = vadd.f32 %v606, %v744
      %v809 = vadd.f32 %v607, %v745
      %v810 = vadd.f32 %v608, %v746
      %v811 = vadd.f32 %v609, %v747
      %v812 = vadd.f32 %v610, %v748
      %v813 = vadd.f32 %v611, %v749
      %v814 = vadd.f32 %v612, %v750
      %v815 = vadd.f32 %v613, %v751
      %v816 = vadd.f32 %v614, %v752
      %v817 = vadd.f32 %v615, %v753
      %v818 = vadd.f32 %v616, %v754
      %v819 = vadd.f32 %v617, %v755
      %v820 = vadd.f32 %v618, %v756
      %v821 = vadd.f32 %v619, %v757
      %v822 = vadd.f32 %v620, %v758
      %v823 = vadd.f32 %v621, %v759
      %v824 = vadd.f32 %v622, %v760
      %v825 = vadd.f32 %v623, %v761
      %v826 = vadd.f32 %v624, %v762
      %v827 = vadd.f32 %v625, %v763
      %v828 = vadd.f32 %v626, %v764
      %v829 = vadd.f32 %v627, %v765
      %v830 = vadd.f32 %v628, %v766
      %v831 = vadd.f32 %v629, %v767
      %v832 = vadd.f32 %v630, %v768
      %v833 = vadd.f32 %v631, %v769
      %v834 = vadd.f32 %v632, %v770
      %v835 = vadd.f32 %v633, %v771
      %v836 = vadd.f32 %v634, %v772
      %v837 = vadd.f32 %v635, %v773
      %v838 = vadd.f32 %v636, %v774
      %v839 = vadd.f32 %v637, %v775
      %v840 = vadd.f32 %v638, %v776
      %v841 = vadd.f32 %v639, %v777
      %v842 = vadd.f32 %v640, %v778
      %v843 = vadd.f32 %v641, %v779
      %v844 = vadd.f32 %v642, %v780
      %v845 = vadd.f32 %v643, %v781
      %v846 = vadd.f32 %v644, %v782
      %v847 = vadd.f32 %v645, %v783
      %v848 = vadd.f32 %v646, %v784
      %v849 = vadd.f32 %v647, %v785
      %v850 = vadd.f32 %v648, %v786
      %v851 = vadd.f32 %v649, %v787
      %v852 = vadd.f32 %v650, %v788
      %v853 = vperm.slane %v447, 2
      %v854 = vperm.slane %v447, 6
      %v855 = vperm.slane %v853, 2
      %v856 = vperm.slane %v854, 2
      %vm857 = vcmp.eq.s32.totalorder %v414, %v855
      %vm858 = vcmp.eq.s32.totalorder %v414, %v856
      %vm859 = vcmp.eq.s32.totalorder %v415, %v855
      %vm860 = vcmp.eq.s32.totalorder %v415, %v856
      %vm861 = vcmp.eq.s32.totalorder %v416, %v855
      %vm862 = vcmp.eq.s32.totalorder %v416, %v856
      %vm863 = vcmp.eq.s32.totalorder %v417, %v855
      %vm864 = vcmp.eq.s32.totalorder %v417, %v856
      %vm865 = vcmp.eq.s32.totalorder %v418, %v855
      %vm866 = vcmp.eq.s32.totalorder %v418, %v856
      %vm867 = vcmp.eq.s32.totalorder %v419, %v855
      %vm868 = vcmp.eq.s32.totalorder %v419, %v856
      %vm869 = vcmp.eq.s32.totalorder %v420, %v855
      %vm870 = vcmp.eq.s32.totalorder %v420, %v856
      %vm871 = vcmp.eq.s32.totalorder %v421, %v855
      %vm872 = vcmp.eq.s32.totalorder %v421, %v856
      %vm873 = vcmp.eq.s32.totalorder %v422, %v855
      %vm874 = vcmp.eq.s32.totalorder %v422, %v856
      %vm875 = vcmp.eq.s32.totalorder %v423, %v855
      %vm876 = vcmp.eq.s32.totalorder %v423, %v856
      %vm877 = vcmp.eq.s32.totalorder %v424, %v855
      %vm878 = vcmp.eq.s32.totalorder %v424, %v856
      %vm879 = vcmp.eq.s32.totalorder %v425, %v855
      %vm880 = vcmp.eq.s32.totalorder %v425, %v856
      %vm881 = vcmp.eq.s32.totalorder %v426, %v855
      %vm882 = vcmp.eq.s32.totalorder %v426, %v856
      %vm883 = vcmp.eq.s32.totalorder %v427, %v855
      %vm884 = vcmp.eq.s32.totalorder %v427, %v856
      %vm885 = vcmp.eq.s32.totalorder %v428, %v855
      %vm886 = vcmp.eq.s32.totalorder %v428, %v856
      %vm887 = vcmp.eq.s32.totalorder %v429, %v855
      %vm888 = vcmp.eq.s32.totalorder %v429, %v856
      %vm889 = vcmp.eq.s32.totalorder %v430, %v855
      %vm890 = vcmp.eq.s32.totalorder %v430, %v856
      %vm891 = vcmp.eq.s32.totalorder %v431, %v855
      %vm892 = vcmp.eq.s32.totalorder %v431, %v856
      %vm893 = vcmp.eq.s32.totalorder %v432, %v855
      %vm894 = vcmp.eq.s32.totalorder %v432, %v856
      %vm895 = vcmp.eq.s32.totalorder %v433, %v855
      %vm896 = vcmp.eq.s32.totalorder %v433, %v856
      %vm897 = vcmp.eq.s32.totalorder %v434, %v855
      %vm898 = vcmp.eq.s32.totalorder %v434, %v856
      %vm899 = vcmp.eq.s32.totalorder %v435, %v855
      %vm900 = vcmp.eq.s32.totalorder %v435, %v856
      %vm901 = vcmp.eq.s32.totalorder %v436, %v855
      %vm902 = vcmp.eq.s32.totalorder %v436, %v856
      %vm903 = vcmp.eq.s32.totalorder %v437, %v855
      %vm904 = vcmp.eq.s32.totalorder %v437, %v856
      %vm905 = vcmp.eq.s32.totalorder %v438, %v855
      %vm906 = vcmp.eq.s32.totalorder %v438, %v856
      %vm907 = vcmp.eq.s32.totalorder %v439, %v855
      %vm908 = vcmp.eq.s32.totalorder %v439, %v856
      %vm909 = vcmp.eq.s32.totalorder %v440, %v855
      %vm910 = vcmp.eq.s32.totalorder %v440, %v856
      %vm911 = vcmp.eq.s32.totalorder %v441, %v855
      %vm912 = vcmp.eq.s32.totalorder %v441, %v856
      %vm913 = vcmp.eq.s32.totalorder %v442, %v855
      %vm914 = vcmp.eq.s32.totalorder %v442, %v856
      %vm915 = vcmp.eq.s32.totalorder %v443, %v855
      %vm916 = vcmp.eq.s32.totalorder %v443, %v856
      %vm917 = vcmp.eq.s32.totalorder %v444, %v855
      %vm918 = vcmp.eq.s32.totalorder %v444, %v856
      %vm919 = vcmp.eq.s32.totalorder %v445, %v855
      %vm920 = vcmp.eq.s32.totalorder %v445, %v856
      %v921 = vperm.slane %v446, 2
      %v922 = vperm.slane %v446, 6
      %v925 = vperm.slane %v921, 2
      %v926 = vperm.slane %v922, 2
      %v927 = vsel %vm857, %v925, 0.0
      %v928 = vsel %vm858, %v926, 0.0
      %v929 = vsel %vm859, %v925, 0.0
      %v930 = vsel %vm860, %v926, 0.0
      %v931 = vsel %vm861, %v925, 0.0
      %v932 = vsel %vm862, %v926, 0.0
      %v933 = vsel %vm863, %v925, 0.0
      %v934 = vsel %vm864, %v926, 0.0
      %v935 = vsel %vm865, %v925, 0.0
      %v936 = vsel %vm866, %v926, 0.0
      %v937 = vsel %vm867, %v925, 0.0
      %v938 = vsel %vm868, %v926, 0.0
      %v939 = vsel %vm869, %v925, 0.0
      %v940 = vsel %vm870, %v926, 0.0
      %v941 = vsel %vm871, %v925, 0.0
      %v942 = vsel %vm872, %v926, 0.0
      %v943 = vsel %vm873, %v925, 0.0
      %v944 = vsel %vm874, %v926, 0.0
      %v945 = vsel %vm875, %v925, 0.0
      %v946 = vsel %vm876, %v926, 0.0
      %v947 = vsel %vm877, %v925, 0.0
      %v948 = vsel %vm878, %v926, 0.0
      %v949 = vsel %vm879, %v925, 0.0
      %v950 = vsel %vm880, %v926, 0.0
      %v951 = vsel %vm881, %v925, 0.0
      %v952 = vsel %vm882, %v926, 0.0
      %v953 = vsel %vm883, %v925, 0.0
      %v954 = vsel %vm884, %v926, 0.0
      %v955 = vsel %vm885, %v925, 0.0
      %v956 = vsel %vm886, %v926, 0.0
      %v957 = vsel %vm887, %v925, 0.0
      %v958 = vsel %vm888, %v926, 0.0
      %v959 = vsel %vm889, %v925, 0.0
      %v960 = vsel %vm890, %v926, 0.0
      %v961 = vsel %vm891, %v925, 0.0
      %v962 = vsel %vm892, %v926, 0.0
      %v963 = vsel %vm893, %v925, 0.0
      %v964 = vsel %vm894, %v926, 0.0
      %v965 = vsel %vm895, %v925, 0.0
      %v966 = vsel %vm896, %v926, 0.0
      %v967 = vsel %vm897, %v925, 0.0
      %v968 = vsel %vm898, %v926, 0.0
      %v969 = vsel %vm899, %v925, 0.0
      %v970 = vsel %vm900, %v926, 0.0
      %v971 = vsel %vm901, %v925, 0.0
      %v972 = vsel %vm902, %v926, 0.0
      %v973 = vsel %vm903, %v925, 0.0
      %v974 = vsel %vm904, %v926, 0.0
      %v975 = vsel %vm905, %v925, 0.0
      %v976 = vsel %vm906, %v926, 0.0
      %v977 = vsel %vm907, %v925, 0.0
      %v978 = vsel %vm908, %v926, 0.0
      %v979 = vsel %vm909, %v925, 0.0
      %v980 = vsel %vm910, %v926, 0.0
      %v981 = vsel %vm911, %v925, 0.0
      %v982 = vsel %vm912, %v926, 0.0
      %v983 = vsel %vm913, %v925, 0.0
      %v984 = vsel %vm914, %v926, 0.0
      %v985 = vsel %vm915, %v925, 0.0
      %v986 = vsel %vm916, %v926, 0.0
      %v987 = vsel %vm917, %v925, 0.0
      %v988 = vsel %vm918, %v926, 0.0
      %v989 = vsel %vm919, %v925, 0.0
      %v990 = vsel %vm920, %v926, 0.0
      %v991 = vadd.f32 %v789, %v927
      %v992 = vadd.f32 %v790, %v928
      %v993 = vadd.f32 %v791, %v929
      %v994 = vadd.f32 %v792, %v930
      %v995 = vadd.f32 %v793, %v931
      %v996 = vadd.f32 %v794, %v932
      %v997 = vadd.f32 %v795, %v933
      %v998 = vadd.f32 %v796, %v934
      %v999 = vadd.f32 %v797, %v935
      %v1000 = vadd.f32 %v798, %v936
      %v1001 = vadd.f32 %v799, %v937
      %v1002 = vadd.f32 %v800, %v938
      %v1003 = vadd.f32 %v801, %v939
      %v1004 = vadd.f32 %v802, %v940
      %v1005 = vadd.f32 %v803, %v941
      %v1006 = vadd.f32 %v804, %v942
      %v1007 = vadd.f32 %v805, %v943
      %v1008 = vadd.f32 %v806, %v944
      %v1009 = vadd.f32 %v807, %v945
      %v1010 = vadd.f32 %v808, %v946
      %v1011 = vadd.f32 %v809, %v947
      %v1012 = vadd.f32 %v810, %v948
      %v1013 = vadd.f32 %v811, %v949
      %v1014 = vadd.f32 %v812, %v950
      %v1015 = vadd.f32 %v813, %v951
      %v1016 = vadd.f32 %v814, %v952
      %v1017 = vadd.f32 %v815, %v953
      %v1018 = vadd.f32 %v816, %v954
      %v1019 = vadd.f32 %v817, %v955
      %v1020 = vadd.f32 %v818, %v956
      %v1021 = vadd.f32 %v819, %v957
      %v1022 = vadd.f32 %v820, %v958
      %v1023 = vadd.f32 %v821, %v959
      %v1024 = vadd.f32 %v822, %v960
      %v1025 = vadd.f32 %v823, %v961
      %v1026 = vadd.f32 %v824, %v962
      %v1027 = vadd.f32 %v825, %v963
      %v1028 = vadd.f32 %v826, %v964
      %v1029 = vadd.f32 %v827, %v965
      %v1030 = vadd.f32 %v828, %v966
      %v1031 = vadd.f32 %v829, %v967
      %v1032 = vadd.f32 %v830, %v968
      %v1033 = vadd.f32 %v831, %v969
      %v1034 = vadd.f32 %v832, %v970
      %v1035 = vadd.f32 %v833, %v971
      %v1036 = vadd.f32 %v834, %v972
      %v1037 = vadd.f32 %v835, %v973
      %v1038 = vadd.f32 %v836, %v974
      %v1039 = vadd.f32 %v837, %v975
      %v1040 = vadd.f32 %v838, %v976
      %v1041 = vadd.f32 %v839, %v977
      %v1042 = vadd.f32 %v840, %v978
      %v1043 = vadd.f32 %v841, %v979
      %v1044 = vadd.f32 %v842, %v980
      %v1045 = vadd.f32 %v843, %v981
      %v1046 = vadd.f32 %v844, %v982
      %v1047 = vadd.f32 %v845, %v983
      %v1048 = vadd.f32 %v846, %v984
      %v1049 = vadd.f32 %v847, %v985
      %v1050 = vadd.f32 %v848, %v986
      %v1051 = vadd.f32 %v849, %v987
      %v1052 = vadd.f32 %v850, %v988
      %v1053 = vadd.f32 %v851, %v989
      %v1054 = vadd.f32 %v852, %v990
      %v1055 = vperm.slane %v447, 3
      %v1056 = vperm.slane %v447, 7
      %v1057 = vperm.slane %v1055, 3
      %v1058 = vperm.slane %v1056, 3
      %vm1059 = vcmp.eq.s32.totalorder %v414, %v1057
      %vm1060 = vcmp.eq.s32.totalorder %v414, %v1058
      %vm1061 = vcmp.eq.s32.totalorder %v415, %v1057
      %vm1062 = vcmp.eq.s32.totalorder %v415, %v1058
      %vm1063 = vcmp.eq.s32.totalorder %v416, %v1057
      %vm1064 = vcmp.eq.s32.totalorder %v416, %v1058
      %vm1065 = vcmp.eq.s32.totalorder %v417, %v1057
      %vm1066 = vcmp.eq.s32.totalorder %v417, %v1058
      %vm1067 = vcmp.eq.s32.totalorder %v418, %v1057
      %vm1068 = vcmp.eq.s32.totalorder %v418, %v1058
      %vm1069 = vcmp.eq.s32.totalorder %v419, %v1057
      %vm1070 = vcmp.eq.s32.totalorder %v419, %v1058
      %vm1071 = vcmp.eq.s32.totalorder %v420, %v1057
      %vm1072 = vcmp.eq.s32.totalorder %v420, %v1058
      %vm1073 = vcmp.eq.s32.totalorder %v421, %v1057
      %vm1074 = vcmp.eq.s32.totalorder %v421, %v1058
      %vm1075 = vcmp.eq.s32.totalorder %v422, %v1057
      %vm1076 = vcmp.eq.s32.totalorder %v422, %v1058
      %vm1077 = vcmp.eq.s32.totalorder %v423, %v1057
      %vm1078 = vcmp.eq.s32.totalorder %v423, %v1058
      %vm1079 = vcmp.eq.s32.totalorder %v424, %v1057
      %vm1080 = vcmp.eq.s32.totalorder %v424, %v1058
      %vm1081 = vcmp.eq.s32.totalorder %v425, %v1057
      %vm1082 = vcmp.eq.s32.totalorder %v425, %v1058
      %vm1083 = vcmp.eq.s32.totalorder %v426, %v1057
      %vm1084 = vcmp.eq.s32.totalorder %v426, %v1058
      %vm1085 = vcmp.eq.s32.totalorder %v427, %v1057
      %vm1086 = vcmp.eq.s32.totalorder %v427, %v1058
      %vm1087 = vcmp.eq.s32.totalorder %v428, %v1057
      %vm1088 = vcmp.eq.s32.totalorder %v428, %v1058
      %vm1089 = vcmp.eq.s32.totalorder %v429, %v1057
      %vm1090 = vcmp.eq.s32.totalorder %v429, %v1058
      %vm1091 = vcmp.eq.s32.totalorder %v430, %v1057
      %vm1092 = vcmp.eq.s32.totalorder %v430, %v1058
      %vm1093 = vcmp.eq.s32.totalorder %v431, %v1057
      %vm1094 = vcmp.eq.s32.totalorder %v431, %v1058
      %vm1095 = vcmp.eq.s32.totalorder %v432, %v1057
      %vm1096 = vcmp.eq.s32.totalorder %v432, %v1058
      %vm1097 = vcmp.eq.s32.totalorder %v433, %v1057
      %vm1098 = vcmp.eq.s32.totalorder %v433, %v1058
      %vm1099 = vcmp.eq.s32.totalorder %v434, %v1057
      %vm1100 = vcmp.eq.s32.totalorder %v434, %v1058
      %vm1101 = vcmp.eq.s32.totalorder %v435, %v1057
      %vm1102 = vcmp.eq.s32.totalorder %v435, %v1058
      %vm1103 = vcmp.eq.s32.totalorder %v436, %v1057
      %vm1104 = vcmp.eq.s32.totalorder %v436, %v1058
      %vm1105 = vcmp.eq.s32.totalorder %v437, %v1057
      %vm1106 = vcmp.eq.s32.totalorder %v437, %v1058
      %vm1107 = vcmp.eq.s32.totalorder %v438, %v1057
      %vm1108 = vcmp.eq.s32.totalorder %v438, %v1058
      %vm1109 = vcmp.eq.s32.totalorder %v439, %v1057
      %vm1110 = vcmp.eq.s32.totalorder %v439, %v1058
      %vm1111 = vcmp.eq.s32.totalorder %v440, %v1057
      %vm1112 = vcmp.eq.s32.totalorder %v440, %v1058
      %vm1113 = vcmp.eq.s32.totalorder %v441, %v1057
      %vm1114 = vcmp.eq.s32.totalorder %v441, %v1058
      %vm1115 = vcmp.eq.s32.totalorder %v442, %v1057
      %vm1116 = vcmp.eq.s32.totalorder %v442, %v1058
      %vm1117 = vcmp.eq.s32.totalorder %v443, %v1057
      %vm1118 = vcmp.eq.s32.totalorder %v443, %v1058
      %vm1119 = vcmp.eq.s32.totalorder %v444, %v1057
      %vm1120 = vcmp.eq.s32.totalorder %v444, %v1058
      %vm1121 = vcmp.eq.s32.totalorder %v445, %v1057
      %vm1122 = vcmp.eq.s32.totalorder %v445, %v1058
      %v1123 = vperm.slane %v446, 3
      %v1124 = vperm.slane %v446, 7
      %v1127 = vperm.slane %v1123, 3
      %v1128 = vperm.slane %v1124, 3
      %v1129 = vsel %vm1059, %v1127, 0.0
      %v1130 = vsel %vm1060, %v1128, 0.0
      %v1131 = vsel %vm1061, %v1127, 0.0
      %v1132 = vsel %vm1062, %v1128, 0.0
      %v1133 = vsel %vm1063, %v1127, 0.0
      %v1134 = vsel %vm1064, %v1128, 0.0
      %v1135 = vsel %vm1065, %v1127, 0.0
      %v1136 = vsel %vm1066, %v1128, 0.0
      %v1137 = vsel %vm1067, %v1127, 0.0
      %v1138 = vsel %vm1068, %v1128, 0.0
      %v1139 = vsel %vm1069, %v1127, 0.0
      %v1140 = vsel %vm1070, %v1128, 0.0
      %v1141 = vsel %vm1071, %v1127, 0.0
      %v1142 = vsel %vm1072, %v1128, 0.0
      %v1143 = vsel %vm1073, %v1127, 0.0
      %v1144 = vsel %vm1074, %v1128, 0.0
      %v1145 = vsel %vm1075, %v1127, 0.0
      %v1146 = vsel %vm1076, %v1128, 0.0
      %v1147 = vsel %vm1077, %v1127, 0.0
      %v1148 = vsel %vm1078, %v1128, 0.0
      %v1149 = vsel %vm1079, %v1127, 0.0
      %v1150 = vsel %vm1080, %v1128, 0.0
      %v1151 = vsel %vm1081, %v1127, 0.0
      %v1152 = vsel %vm1082, %v1128, 0.0
      %v1153 = vsel %vm1083, %v1127, 0.0
      %v1154 = vsel %vm1084, %v1128, 0.0
      %v1155 = vsel %vm1085, %v1127, 0.0
      %v1156 = vsel %vm1086, %v1128, 0.0
      %v1157 = vsel %vm1087, %v1127, 0.0
      %v1158 = vsel %vm1088, %v1128, 0.0
      %v1159 = vsel %vm1089, %v1127, 0.0
      %v1160 = vsel %vm1090, %v1128, 0.0
      %v1161 = vsel %vm1091, %v1127, 0.0
      %v1162 = vsel %vm1092, %v1128, 0.0
      %v1163 = vsel %vm1093, %v1127, 0.0
      %v1164 = vsel %vm1094, %v1128, 0.0
      %v1165 = vsel %vm1095, %v1127, 0.0
      %v1166 = vsel %vm1096, %v1128, 0.0
      %v1167 = vsel %vm1097, %v1127, 0.0
      %v1168 = vsel %vm1098, %v1128, 0.0
      %v1169 = vsel %vm1099, %v1127, 0.0
      %v1170 = vsel %vm1100, %v1128, 0.0
      %v1171 = vsel %vm1101, %v1127, 0.0
      %v1172 = vsel %vm1102, %v1128, 0.0
      %v1173 = vsel %vm1103, %v1127, 0.0
      %v1174 = vsel %vm1104, %v1128, 0.0
      %v1175 = vsel %vm1105, %v1127, 0.0
      %v1176 = vsel %vm1106, %v1128, 0.0
      %v1177 = vsel %vm1107, %v1127, 0.0
      %v1178 = vsel %vm1108, %v1128, 0.0
      %v1179 = vsel %vm1109, %v1127, 0.0
      %v1180 = vsel %vm1110, %v1128, 0.0
      %v1181 = vsel %vm1111, %v1127, 0.0
      %v1182 = vsel %vm1112, %v1128, 0.0
      %v1183 = vsel %vm1113, %v1127, 0.0
      %v1184 = vsel %vm1114, %v1128, 0.0
      %v1185 = vsel %vm1115, %v1127, 0.0
      %v1186 = vsel %vm1116, %v1128, 0.0
      %v1187 = vsel %vm1117, %v1127, 0.0
      %v1188 = vsel %vm1118, %v1128, 0.0
      %v1189 = vsel %vm1119, %v1127, 0.0
      %v1190 = vsel %vm1120, %v1128, 0.0
      %v1191 = vsel %vm1121, %v1127, 0.0
      %v1192 = vsel %vm1122, %v1128, 0.0
      %v1193 = vadd.f32 %v991, %v1129
      %v1194 = vadd.f32 %v992, %v1130
      %v1195 = vadd.f32 %v993, %v1131
      %v1196 = vadd.f32 %v994, %v1132
      %v1197 = vadd.f32 %v995, %v1133
      %v1198 = vadd.f32 %v996, %v1134
      %v1199 = vadd.f32 %v997, %v1135
      %v1200 = vadd.f32 %v998, %v1136
      %v1201 = vadd.f32 %v999, %v1137
      %v1202 = vadd.f32 %v1000, %v1138
      %v1203 = vadd.f32 %v1001, %v1139
      %v1204 = vadd.f32 %v1002, %v1140
      %v1205 = vadd.f32 %v1003, %v1141
      %v1206 = vadd.f32 %v1004, %v1142
      %v1207 = vadd.f32 %v1005, %v1143
      %v1208 = vadd.f32 %v1006, %v1144
      %v1209 = vadd.f32 %v1007, %v1145
      %v1210 = vadd.f32 %v1008, %v1146
      %v1211 = vadd.f32 %v1009, %v1147
      %v1212 = vadd.f32 %v1010, %v1148
      %v1213 = vadd.f32 %v1011, %v1149
      %v1214 = vadd.f32 %v1012, %v1150
      %v1215 = vadd.f32 %v1013, %v1151
      %v1216 = vadd.f32 %v1014, %v1152
      %v1217 = vadd.f32 %v1015, %v1153
      %v1218 = vadd.f32 %v1016, %v1154
      %v1219 = vadd.f32 %v1017, %v1155
      %v1220 = vadd.f32 %v1018, %v1156
      %v1221 = vadd.f32 %v1019, %v1157
      %v1222 = vadd.f32 %v1020, %v1158
      %v1223 = vadd.f32 %v1021, %v1159
      %v1224 = vadd.f32 %v1022, %v1160
      %v1225 = vadd.f32 %v1023, %v1161
      %v1226 = vadd.f32 %v1024, %v1162
      %v1227 = vadd.f32 %v1025, %v1163
      %v1228 = vadd.f32 %v1026, %v1164
      %v1229 = vadd.f32 %v1027, %v1165
      %v1230 = vadd.f32 %v1028, %v1166
      %v1231 = vadd.f32 %v1029, %v1167
      %v1232 = vadd.f32 %v1030, %v1168
      %v1233 = vadd.f32 %v1031, %v1169
      %v1234 = vadd.f32 %v1032, %v1170
      %v1235 = vadd.f32 %v1033, %v1171
      %v1236 = vadd.f32 %v1034, %v1172
      %v1237 = vadd.f32 %v1035, %v1173
      %v1238 = vadd.f32 %v1036, %v1174
      %v1239 = vadd.f32 %v1037, %v1175
      %v1240 = vadd.f32 %v1038, %v1176
      %v1241 = vadd.f32 %v1039, %v1177
      %v1242 = vadd.f32 %v1040, %v1178
      %v1243 = vadd.f32 %v1041, %v1179
      %v1244 = vadd.f32 %v1042, %v1180
      %v1245 = vadd.f32 %v1043, %v1181
      %v1246 = vadd.f32 %v1044, %v1182
      %v1247 = vadd.f32 %v1045, %v1183
      %v1248 = vadd.f32 %v1046, %v1184
      %v1249 = vadd.f32 %v1047, %v1185
      %v1250 = vadd.f32 %v1048, %v1186
      %v1251 = vadd.f32 %v1049, %v1187
      %v1252 = vadd.f32 %v1050, %v1188
      %v1253 = vadd.f32 %v1051, %v1189
      %v1254 = vadd.f32 %v1052, %v1190
      %v1255 = vadd.f32 %v1053, %v1191
      %v1256 = vadd.f32 %v1054, %v1192
      %v1257 = vld [vmem:[%s338] sm:$0xff]
      %v1258 = vld [vmem:[%s338 + $0x8] sm:$0xff]
      %v1259 = vld [vmem:[%s338 + $0x10] sm:$0xff]
      %v1260 = vld [vmem:[%s338 + $0x18] sm:$0xff]
      %v1261 = vld [vmem:[%s338 + $0x20] sm:$0xff]
      %v1262 = vld [vmem:[%s338 + $0x28] sm:$0xff]
      %v1263 = vld [vmem:[%s338 + $0x30] sm:$0xff]
      %v1264 = vld [vmem:[%s338 + $0x38] sm:$0xff]
      %v1265 = vld [vmem:[%s338 + $0x40] sm:$0xff]
      %v1266 = vld [vmem:[%s338 + $0x48] sm:$0xff]
      %v1267 = vld [vmem:[%s338 + $0x50] sm:$0xff]
      %v1268 = vld [vmem:[%s338 + $0x58] sm:$0xff]
      %v1269 = vld [vmem:[%s338 + $0x60] sm:$0xff]
      %v1270 = vld [vmem:[%s338 + $0x68] sm:$0xff]
      %v1271 = vld [vmem:[%s338 + $0x70] sm:$0xff]
      %v1272 = vld [vmem:[%s338 + $0x78] sm:$0xff]
      %v1273 = vld [vmem:[%s338 + $0x80] sm:$0xff]
      %v1274 = vld [vmem:[%s338 + $0x88] sm:$0xff]
      %v1275 = vld [vmem:[%s338 + $0x90] sm:$0xff]
      %v1276 = vld [vmem:[%s338 + $0x98] sm:$0xff]
      %v1277 = vld [vmem:[%s338 + $0xa0] sm:$0xff]
      %v1278 = vld [vmem:[%s338 + $0xa8] sm:$0xff]
      %v1279 = vld [vmem:[%s338 + $0xb0] sm:$0xff]
      %v1280 = vld [vmem:[%s338 + $0xb8] sm:$0xff]
      %v1281 = vld [vmem:[%s338 + $0xc0] sm:$0xff]
      %v1282 = vld [vmem:[%s338 + $0xc8] sm:$0xff]
      %v1283 = vld [vmem:[%s338 + $0xd0] sm:$0xff]
      %v1284 = vld [vmem:[%s338 + $0xd8] sm:$0xff]
      %v1285 = vld [vmem:[%s338 + $0xe0] sm:$0xff]
      %v1286 = vld [vmem:[%s338 + $0xe8] sm:$0xff]
      %v1287 = vld [vmem:[%s338 + $0xf0] sm:$0xff]
      %v1288 = vld [vmem:[%s338 + $0xf8] sm:$0xff]
      %v1289 = vpack.c.bf16 %v1259, %v1257
      %v1290 = vpack.c.bf16 %v1260, %v1258
      %v1291 = vpack.c.bf16 %v1263, %v1261
      %v1292 = vpack.c.bf16 %v1264, %v1262
      %v1293 = vpack.c.bf16 %v1267, %v1265
      %v1294 = vpack.c.bf16 %v1268, %v1266
      %v1295 = vpack.c.bf16 %v1271, %v1269
      %v1296 = vpack.c.bf16 %v1272, %v1270
      %v1297 = vpack.c.bf16 %v1275, %v1273
      %v1298 = vpack.c.bf16 %v1276, %v1274
      %v1299 = vpack.c.bf16 %v1279, %v1277
      %v1300 = vpack.c.bf16 %v1280, %v1278
      %v1301 = vpack.c.bf16 %v1283, %v1281
      %v1302 = vpack.c.bf16 %v1284, %v1282
      %v1303 = vpack.c.bf16 %v1287, %v1285
      %v1304 = vpack.c.bf16 %v1288, %v1286
      %v1305 = vpack.c.bf16 %v1195, %v1193
      %v1306 = vpack.c.bf16 %v1196, %v1194
      %v1307 = vpack.c.bf16 %v1199, %v1197
      %v1308 = vpack.c.bf16 %v1200, %v1198
      %v1309 = vpack.c.bf16 %v1203, %v1201
      %v1310 = vpack.c.bf16 %v1204, %v1202
      %v1311 = vpack.c.bf16 %v1207, %v1205
      %v1312 = vpack.c.bf16 %v1208, %v1206
      %v1313 = vpack.c.bf16 %v1211, %v1209
      %v1314 = vpack.c.bf16 %v1212, %v1210
      %v1315 = vpack.c.bf16 %v1215, %v1213
      %v1316 = vpack.c.bf16 %v1216, %v1214
      %v1317 = vpack.c.bf16 %v1219, %v1217
      %v1318 = vpack.c.bf16 %v1220, %v1218
      %v1319 = vpack.c.bf16 %v1223, %v1221
      %v1320 = vpack.c.bf16 %v1224, %v1222
      %v1321 = vpack.c.bf16 %v1227, %v1225
      %v1322 = vpack.c.bf16 %v1228, %v1226
      %v1323 = vpack.c.bf16 %v1231, %v1229
      %v1324 = vpack.c.bf16 %v1232, %v1230
      %v1325 = vpack.c.bf16 %v1235, %v1233
      %v1326 = vpack.c.bf16 %v1236, %v1234
      %v1327 = vpack.c.bf16 %v1239, %v1237
      %v1328 = vpack.c.bf16 %v1240, %v1238
      %v1329 = vpack.c.bf16 %v1243, %v1241
      %v1330 = vpack.c.bf16 %v1244, %v1242
      %v1331 = vpack.c.bf16 %v1247, %v1245
      %v1332 = vpack.c.bf16 %v1248, %v1246
      %v1333 = vpack.c.bf16 %v1251, %v1249
      %v1334 = vpack.c.bf16 %v1252, %v1250
      %v1335 = vpack.c.bf16 %v1255, %v1253
      %v1336 = vpack.c.bf16 %v1256, %v1254
      %1337 = vmatpush.bf16.msra.mxu0 %v1319
      %1338 = vmatpush.bf16.msra.mxu0 %v1317
      %1339 = vmatpush.bf16.msra.mxu0 %v1315
      %1340 = vmatpush.bf16.msra.mxu0 %v1313
      %1341 = vmatpush.bf16.msra.mxu0 %v1311
      %1342 = vmatpush.bf16.msra.mxu0 %v1309
      %1343 = vmatpush.bf16.msra.mxu0 %v1307
      %1344 = vmatpush.bf16.msra.mxu0 %v1305
      %1345 = vmatmul.bf16.gmra.mxu0 %v1289
      %v1346 = vpop.f32.mrf.mxu0
      %v1347 = vadd.f32 0.0, %v1346
      %v1348 = vpop.f32.mrf.mxu0
      %v1349 = vadd.f32 0.0, %v1348
      %1350 = vmatmul.bf16.gmra.mxu0 %v1291
      %v1351 = vpop.f32.mrf.mxu0
      %v1352 = vadd.f32 0.0, %v1351
      %v1353 = vpop.f32.mrf.mxu0
      %v1354 = vadd.f32 0.0, %v1353
      %1355 = vmatmul.bf16.gmra.mxu0 %v1293
      %v1356 = vpop.f32.mrf.mxu0
      %v1357 = vadd.f32 0.0, %v1356
      %v1358 = vpop.f32.mrf.mxu0
      %v1359 = vadd.f32 0.0, %v1358
      %1360 = vmatmul.bf16.gmra.mxu0 %v1295
      %v1361 = vpop.f32.mrf.mxu0
      %v1362 = vadd.f32 0.0, %v1361
      %v1363 = vpop.f32.mrf.mxu0
      %v1364 = vadd.f32 0.0, %v1363
      %1365 = vmatmul.bf16.gmra.mxu0 %v1297
      %v1366 = vpop.f32.mrf.mxu0
      %v1367 = vadd.f32 0.0, %v1366
      %v1368 = vpop.f32.mrf.mxu0
      %v1369 = vadd.f32 0.0, %v1368
      %1370 = vmatmul.bf16.gmra.mxu0 %v1299
      %v1371 = vpop.f32.mrf.mxu0
      %v1372 = vadd.f32 0.0, %v1371
      %v1373 = vpop.f32.mrf.mxu0
      %v1374 = vadd.f32 0.0, %v1373
      %1375 = vmatmul.bf16.gmra.mxu0 %v1301
      %v1376 = vpop.f32.mrf.mxu0
      %v1377 = vadd.f32 0.0, %v1376
      %v1378 = vpop.f32.mrf.mxu0
      %v1379 = vadd.f32 0.0, %v1378
      %1380 = vmatmul.bf16.gmra.mxu0 %v1303
      %v1381 = vpop.f32.mrf.mxu0
      %v1382 = vadd.f32 0.0, %v1381
      %v1383 = vpop.f32.mrf.mxu0
      %v1384 = vadd.f32 0.0, %v1383
      %1385 = vdwg.mxu0
      %1386 = vmatpush.bf16.msra.mxu0 %v1335
      %1387 = vmatpush.bf16.msra.mxu0 %v1333
      %1388 = vmatpush.bf16.msra.mxu0 %v1331
      %1389 = vmatpush.bf16.msra.mxu0 %v1329
      %1390 = vmatpush.bf16.msra.mxu0 %v1327
      %1391 = vmatpush.bf16.msra.mxu0 %v1325
      %1392 = vmatpush.bf16.msra.mxu0 %v1323
      %1393 = vmatpush.bf16.msra.mxu0 %v1321
      %1394 = vmatmul.bf16.gmra.mxu0 %v1290
      %v1395 = vpop.f32.mrf.mxu0
      %v1396 = vadd.f32 %v1347, %v1395
      %v1397 = vpop.f32.mrf.mxu0
      %v1398 = vadd.f32 %v1349, %v1397
      %1399 = vmatmul.bf16.gmra.mxu0 %v1292
      %v1400 = vpop.f32.mrf.mxu0
      %v1401 = vadd.f32 %v1352, %v1400
      %v1402 = vpop.f32.mrf.mxu0
      %v1403 = vadd.f32 %v1354, %v1402
      %1404 = vmatmul.bf16.gmra.mxu0 %v1294
      %v1405 = vpop.f32.mrf.mxu0
      %v1406 = vadd.f32 %v1357, %v1405
      %v1407 = vpop.f32.mrf.mxu0
      %v1408 = vadd.f32 %v1359, %v1407
      %1409 = vmatmul.bf16.gmra.mxu0 %v1296
      %v1410 = vpop.f32.mrf.mxu0
      %v1411 = vadd.f32 %v1362, %v1410
      %v1412 = vpop.f32.mrf.mxu0
      %v1413 = vadd.f32 %v1364, %v1412
      %1414 = vmatmul.bf16.gmra.mxu0 %v1298
      %v1415 = vpop.f32.mrf.mxu0
      %v1416 = vadd.f32 %v1367, %v1415
      %v1417 = vpop.f32.mrf.mxu0
      %v1418 = vadd.f32 %v1369, %v1417
      %1419 = vmatmul.bf16.gmra.mxu0 %v1300
      %v1420 = vpop.f32.mrf.mxu0
      %v1421 = vadd.f32 %v1372, %v1420
      %v1422 = vpop.f32.mrf.mxu0
      %v1423 = vadd.f32 %v1374, %v1422
      %1424 = vmatmul.bf16.gmra.mxu0 %v1302
      %v1425 = vpop.f32.mrf.mxu0
      %v1426 = vadd.f32 %v1377, %v1425
      %v1427 = vpop.f32.mrf.mxu0
      %v1428 = vadd.f32 %v1379, %v1427
      %1429 = vmatmul.bf16.gmra.mxu0 %v1304
      %v1430 = vpop.f32.mrf.mxu0
      %v1431 = vadd.f32 %v1382, %v1430
      %v1432 = vpop.f32.mrf.mxu0
      %v1433 = vadd.f32 %v1384, %v1432
      %1434 = vdwg.mxu0
      %1435 = vmatpush.bf16.msra.mxu0 %v1320
      %1436 = vmatpush.bf16.msra.mxu0 %v1318
      %1437 = vmatpush.bf16.msra.mxu0 %v1316
      %1438 = vmatpush.bf16.msra.mxu0 %v1314
      %1439 = vmatpush.bf16.msra.mxu0 %v1312
      %1440 = vmatpush.bf16.msra.mxu0 %v1310
      %1441 = vmatpush.bf16.msra.mxu0 %v1308
      %1442 = vmatpush.bf16.msra.mxu0 %v1306
      %1443 = vmatmul.bf16.gmra.mxu0 %v1289
      %v1444 = vpop.f32.mrf.mxu0
      %v1445 = vadd.f32 0.0, %v1444
      %v1446 = vpop.f32.mrf.mxu0
      %v1447 = vadd.f32 0.0, %v1446
      %1448 = vmatmul.bf16.gmra.mxu0 %v1291
      %v1449 = vpop.f32.mrf.mxu0
      %v1450 = vadd.f32 0.0, %v1449
      %v1451 = vpop.f32.mrf.mxu0
      %v1452 = vadd.f32 0.0, %v1451
      %1453 = vmatmul.bf16.gmra.mxu0 %v1293
      %v1454 = vpop.f32.mrf.mxu0
      %v1455 = vadd.f32 0.0, %v1454
      %v1456 = vpop.f32.mrf.mxu0
      %v1457 = vadd.f32 0.0, %v1456
      %1458 = vmatmul.bf16.gmra.mxu0 %v1295
      %v1459 = vpop.f32.mrf.mxu0
      %v1460 = vadd.f32 0.0, %v1459
      %v1461 = vpop.f32.mrf.mxu0
      %v1462 = vadd.f32 0.0, %v1461
      %1463 = vmatmul.bf16.gmra.mxu0 %v1297
      %v1464 = vpop.f32.mrf.mxu0
      %v1465 = vadd.f32 0.0, %v1464
      %v1466 = vpop.f32.mrf.mxu0
      %v1467 = vadd.f32 0.0, %v1466
      %1468 = vmatmul.bf16.gmra.mxu0 %v1299
      %v1469 = vpop.f32.mrf.mxu0
      %v1470 = vadd.f32 0.0, %v1469
      %v1471 = vpop.f32.mrf.mxu0
      %v1472 = vadd.f32 0.0, %v1471
      %1473 = vmatmul.bf16.gmra.mxu0 %v1301
      %v1474 = vpop.f32.mrf.mxu0
      %v1475 = vadd.f32 0.0, %v1474
      %v1476 = vpop.f32.mrf.mxu0
      %v1477 = vadd.f32 0.0, %v1476
      %1478 = vmatmul.bf16.gmra.mxu0 %v1303
      %v1479 = vpop.f32.mrf.mxu0
      %v1480 = vadd.f32 0.0, %v1479
      %v1481 = vpop.f32.mrf.mxu0
      %v1482 = vadd.f32 0.0, %v1481
      %1483 = vdwg.mxu0
      %1484 = vmatpush.bf16.msra.mxu0 %v1336
      %1485 = vmatpush.bf16.msra.mxu0 %v1334
      %1486 = vmatpush.bf16.msra.mxu0 %v1332
      %1487 = vmatpush.bf16.msra.mxu0 %v1330
      %1488 = vmatpush.bf16.msra.mxu0 %v1328
      %1489 = vmatpush.bf16.msra.mxu0 %v1326
      %1490 = vmatpush.bf16.msra.mxu0 %v1324
      %1491 = vmatpush.bf16.msra.mxu0 %v1322
      %1492 = vmatmul.bf16.gmra.mxu0 %v1290
      %v1493 = vpop.f32.mrf.mxu0
      %v1494 = vadd.f32 %v1445, %v1493
      %v1495 = vpop.f32.mrf.mxu0
      %v1496 = vadd.f32 %v1447, %v1495
      %1497 = vmatmul.bf16.gmra.mxu0 %v1292
      %v1498 = vpop.f32.mrf.mxu0
      %v1499 = vadd.f32 %v1450, %v1498
      %v1500 = vpop.f32.mrf.mxu0
      %v1501 = vadd.f32 %v1452, %v1500
      %1502 = vmatmul.bf16.gmra.mxu0 %v1294
      %v1503 = vpop.f32.mrf.mxu0
      %v1504 = vadd.f32 %v1455, %v1503
      %v1505 = vpop.f32.mrf.mxu0
      %v1506 = vadd.f32 %v1457, %v1505
      %1507 = vmatmul.bf16.gmra.mxu0 %v1296
      %v1508 = vpop.f32.mrf.mxu0
      %v1509 = vadd.f32 %v1460, %v1508
      %v1510 = vpop.f32.mrf.mxu0
      %v1511 = vadd.f32 %v1462, %v1510
      %1512 = vmatmul.bf16.gmra.mxu0 %v1298
      %v1513 = vpop.f32.mrf.mxu0
      %v1514 = vadd.f32 %v1465, %v1513
      %v1515 = vpop.f32.mrf.mxu0
      %v1516 = vadd.f32 %v1467, %v1515
      %1517 = vmatmul.bf16.gmra.mxu0 %v1300
      %v1518 = vpop.f32.mrf.mxu0
      %v1519 = vadd.f32 %v1470, %v1518
      %v1520 = vpop.f32.mrf.mxu0
      %v1521 = vadd.f32 %v1472, %v1520
      %1522 = vmatmul.bf16.gmra.mxu0 %v1302
      %v1523 = vpop.f32.mrf.mxu0
      %v1524 = vadd.f32 %v1475, %v1523
      %v1525 = vpop.f32.mrf.mxu0
      %v1526 = vadd.f32 %v1477, %v1525
      %1527 = vmatmul.bf16.gmra.mxu0 %v1304
      %v1528 = vpop.f32.mrf.mxu0
      %v1529 = vadd.f32 %v1480, %v1528
      %v1530 = vpop.f32.mrf.mxu0
      %v1531 = vadd.f32 %v1482, %v1530
      %1532 = vdwg.mxu0
      %v1533 = vld [vmem:[#allocation2] sm:$0xff]
      %v1534 = vld [vmem:[#allocation2 + $0x8] sm:$0xff]
      %v1535 = vld [vmem:[#allocation2 + $0x10] sm:$0xff]
      %v1536 = vld [vmem:[#allocation2 + $0x18] sm:$0xff]
      %v1537 = vld [vmem:[#allocation2 + $0x20] sm:$0xff]
      %v1538 = vld [vmem:[#allocation2 + $0x28] sm:$0xff]
      %v1539 = vld [vmem:[#allocation2 + $0x30] sm:$0xff]
      %v1540 = vld [vmem:[#allocation2 + $0x38] sm:$0xff]
      %v1541 = vld [vmem:[#allocation2 + $0x40] sm:$0xff]
      %v1542 = vld [vmem:[#allocation2 + $0x48] sm:$0xff]
      %v1543 = vld [vmem:[#allocation2 + $0x50] sm:$0xff]
      %v1544 = vld [vmem:[#allocation2 + $0x58] sm:$0xff]
      %v1545 = vld [vmem:[#allocation2 + $0x60] sm:$0xff]
      %v1546 = vld [vmem:[#allocation2 + $0x68] sm:$0xff]
      %v1547 = vld [vmem:[#allocation2 + $0x70] sm:$0xff]
      %v1548 = vld [vmem:[#allocation2 + $0x78] sm:$0xff]
      %v1549 = vld [vmem:[#allocation2 + $0x80] sm:$0xff]
      %v1550 = vld [vmem:[#allocation2 + $0x88] sm:$0xff]
      %v1551 = vld [vmem:[#allocation2 + $0x90] sm:$0xff]
      %v1552 = vld [vmem:[#allocation2 + $0x98] sm:$0xff]
      %v1553 = vld [vmem:[#allocation2 + $0xa0] sm:$0xff]
      %v1554 = vld [vmem:[#allocation2 + $0xa8] sm:$0xff]
      %v1555 = vld [vmem:[#allocation2 + $0xb0] sm:$0xff]
      %v1556 = vld [vmem:[#allocation2 + $0xb8] sm:$0xff]
      %v1557 = vld [vmem:[#allocation2 + $0xc0] sm:$0xff]
      %v1558 = vld [vmem:[#allocation2 + $0xc8] sm:$0xff]
      %v1559 = vld [vmem:[#allocation2 + $0xd0] sm:$0xff]
      %v1560 = vld [vmem:[#allocation2 + $0xd8] sm:$0xff]
      %v1561 = vld [vmem:[#allocation2 + $0xe0] sm:$0xff]
      %v1562 = vld [vmem:[#allocation2 + $0xe8] sm:$0xff]
      %v1563 = vld [vmem:[#allocation2 + $0xf0] sm:$0xff]
      %v1564 = vld [vmem:[#allocation2 + $0xf8] sm:$0xff]
      %v1565 = vld [vmem:[%s361] sm:$0xf]
      %v1566 = vld [vmem:[%s361 + $0x4] sm:$0xf]
      %v1567 = vld [vmem:[%s361 + $0x8] sm:$0xf]
      %v1568 = vld [vmem:[%s361 + $0xc] sm:$0xf]
      %v1569 = vld [vmem:[%s361 + $0x10] sm:$0xf]
      %v1570 = vld [vmem:[%s361 + $0x14] sm:$0xf]
      %v1571 = vld [vmem:[%s361 + $0x18] sm:$0xf]
      %v1572 = vld [vmem:[%s361 + $0x1c] sm:$0xf]
      %v1573 = vld [vmem:[%s361 + $0x20] sm:$0xf]
      %v1574 = vld [vmem:[%s361 + $0x24] sm:$0xf]
      %v1575 = vld [vmem:[%s361 + $0x28] sm:$0xf]
      %v1576 = vld [vmem:[%s361 + $0x2c] sm:$0xf]
      %v1577 = vld [vmem:[%s361 + $0x30] sm:$0xf]
      %v1578 = vld [vmem:[%s361 + $0x34] sm:$0xf]
      %v1579 = vld [vmem:[%s361 + $0x38] sm:$0xf]
      %v1580 = vld [vmem:[%s361 + $0x3c] sm:$0xf]
      %v1581 = vpack.c.bf16 %v1398, %v1396
      %v1582 = vpack.c.bf16 %v1496, %v1494
      %v1583 = vpack.c.bf16 %v1403, %v1401
      %v1584 = vpack.c.bf16 %v1501, %v1499
      %v1585 = vpack.c.bf16 %v1408, %v1406
      %v1586 = vpack.c.bf16 %v1506, %v1504
      %v1587 = vpack.c.bf16 %v1413, %v1411
      %v1588 = vpack.c.bf16 %v1511, %v1509
      %v1589 = vpack.c.bf16 %v1418, %v1416
      %v1590 = vpack.c.bf16 %v1516, %v1514
      %v1591 = vpack.c.bf16 %v1423, %v1421
      %v1592 = vpack.c.bf16 %v1521, %v1519
      %v1593 = vpack.c.bf16 %v1428, %v1426
      %v1594 = vpack.c.bf16 %v1526, %v1524
      %v1595 = vpack.c.bf16 %v1433, %v1431
      %v1596 = vpack.c.bf16 %v1531, %v1529
      %v1613 = vunpack.c.l.b16 %v1565
      %v1614 = vunpack.c.l.b16 %v1566
      %v1615 = vunpack.c.l.b16 %v1567
      %v1616 = vunpack.c.l.b16 %v1568
      %v1617 = vunpack.c.l.b16 %v1569
      %v1618 = vunpack.c.l.b16 %v1570
      %v1619 = vunpack.c.l.b16 %v1571
      %v1620 = vunpack.c.l.b16 %v1572
      %v1621 = vunpack.c.l.b16 %v1573
      %v1622 = vunpack.c.l.b16 %v1574
      %v1623 = vunpack.c.l.b16 %v1575
      %v1624 = vunpack.c.l.b16 %v1576
      %v1625 = vunpack.c.l.b16 %v1577
      %v1626 = vunpack.c.l.b16 %v1578
      %v1627 = vunpack.c.l.b16 %v1579
      %v1628 = vunpack.c.l.b16 %v1580
      %v1629 = vpack.c.b16 %v1614, %v1613
      %v1630 = vpack.c.b16 %v1616, %v1615
      %v1631 = vpack.c.b16 %v1618, %v1617
      %v1632 = vpack.c.b16 %v1620, %v1619
      %v1633 = vpack.c.b16 %v1622, %v1621
      %v1634 = vpack.c.b16 %v1624, %v1623
      %v1635 = vpack.c.b16 %v1626, %v1625
      %v1636 = vpack.c.b16 %v1628, %v1627
      %1645 = vmatpush.bf16.msra.mxu0 %v1595
      %1646 = vmatpush.bf16.msra.mxu0 %v1593
      %1647 = vmatpush.bf16.msra.mxu0 %v1591
      %1648 = vmatpush.bf16.msra.mxu0 %v1589
      %1649 = vmatpush.bf16.msra.mxu0 %v1587
      %1650 = vmatpush.bf16.msra.mxu0 %v1585
      %1651 = vmatpush.bf16.msra.mxu0 %v1583
      %1652 = vmatpush.bf16.msra.mxu0 %v1581
      %1653 = vmatmul.bf16.gmra.mxu0 %v1629
      %v1654 = vpop.f32.mrf.mxu0
      %v1655 = vadd.f32 0.0, %v1654
      %v1656 = vpop.f32.mrf.mxu0
      %v1657 = vadd.f32 0.0, %v1656
      %1658 = vmatmul.bf16.gmra.mxu0 %v1630
      %v1659 = vpop.f32.mrf.mxu0
      %v1660 = vadd.f32 0.0, %v1659
      %v1661 = vpop.f32.mrf.mxu0
      %v1662 = vadd.f32 0.0, %v1661
      %1663 = vmatmul.bf16.gmra.mxu0 %v1631
      %v1664 = vpop.f32.mrf.mxu0
      %v1665 = vadd.f32 0.0, %v1664
      %v1666 = vpop.f32.mrf.mxu0
      %v1667 = vadd.f32 0.0, %v1666
      %1668 = vmatmul.bf16.gmra.mxu0 %v1632
      %v1669 = vpop.f32.mrf.mxu0
      %v1670 = vadd.f32 0.0, %v1669
      %v1671 = vpop.f32.mrf.mxu0
      %v1672 = vadd.f32 0.0, %v1671
      %1673 = vmatmul.bf16.gmra.mxu0 %v1633
      %v1674 = vpop.f32.mrf.mxu0
      %v1675 = vadd.f32 0.0, %v1674
      %v1676 = vpop.f32.mrf.mxu0
      %v1677 = vadd.f32 0.0, %v1676
      %1678 = vmatmul.bf16.gmra.mxu0 %v1634
      %v1679 = vpop.f32.mrf.mxu0
      %v1680 = vadd.f32 0.0, %v1679
      %v1681 = vpop.f32.mrf.mxu0
      %v1682 = vadd.f32 0.0, %v1681
      %1683 = vmatmul.bf16.gmra.mxu0 %v1635
      %v1684 = vpop.f32.mrf.mxu0
      %v1685 = vadd.f32 0.0, %v1684
      %v1686 = vpop.f32.mrf.mxu0
      %v1687 = vadd.f32 0.0, %v1686
      %1688 = vmatmul.bf16.gmra.mxu0 %v1636
      %v1689 = vpop.f32.mrf.mxu0
      %v1690 = vadd.f32 0.0, %v1689
      %v1691 = vpop.f32.mrf.mxu0
      %v1692 = vadd.f32 0.0, %v1691
      %1693 = vdwg.mxu0
      %1694 = vmatpush.bf16.msra.mxu0 %v1596
      %1695 = vmatpush.bf16.msra.mxu0 %v1594
      %1696 = vmatpush.bf16.msra.mxu0 %v1592
      %1697 = vmatpush.bf16.msra.mxu0 %v1590
      %1698 = vmatpush.bf16.msra.mxu0 %v1588
      %1699 = vmatpush.bf16.msra.mxu0 %v1586
      %1700 = vmatpush.bf16.msra.mxu0 %v1584
      %1701 = vmatpush.bf16.msra.mxu0 %v1582
      %1702 = vmatmul.bf16.gmra.mxu0 %v1629
      %v1703 = vpop.f32.mrf.mxu0
      %v1704 = vadd.f32 0.0, %v1703
      %v1705 = vpop.f32.mrf.mxu0
      %v1706 = vadd.f32 0.0, %v1705
      %1707 = vmatmul.bf16.gmra.mxu0 %v1630
      %v1708 = vpop.f32.mrf.mxu0
      %v1709 = vadd.f32 0.0, %v1708
      %v1710 = vpop.f32.mrf.mxu0
      %v1711 = vadd.f32 0.0, %v1710
      %1712 = vmatmul.bf16.gmra.mxu0 %v1631
      %v1713 = vpop.f32.mrf.mxu0
      %v1714 = vadd.f32 0.0, %v1713
      %v1715 = vpop.f32.mrf.mxu0
      %v1716 = vadd.f32 0.0, %v1715
      %1717 = vmatmul.bf16.gmra.mxu0 %v1632
      %v1718 = vpop.f32.mrf.mxu0
      %v1719 = vadd.f32 0.0, %v1718
      %v1720 = vpop.f32.mrf.mxu0
      %v1721 = vadd.f32 0.0, %v1720
      %1722 = vmatmul.bf16.gmra.mxu0 %v1633
      %v1723 = vpop.f32.mrf.mxu0
      %v1724 = vadd.f32 0.0, %v1723
      %v1725 = vpop.f32.mrf.mxu0
      %v1726 = vadd.f32 0.0, %v1725
      %1727 = vmatmul.bf16.gmra.mxu0 %v1634
      %v1728 = vpop.f32.mrf.mxu0
      %v1729 = vadd.f32 0.0, %v1728
      %v1730 = vpop.f32.mrf.mxu0
      %v1731 = vadd.f32 0.0, %v1730
      %1732 = vmatmul.bf16.gmra.mxu0 %v1635
      %v1733 = vpop.f32.mrf.mxu0
      %v1734 = vadd.f32 0.0, %v1733
      %v1735 = vpop.f32.mrf.mxu0
      %v1736 = vadd.f32 0.0, %v1735
      %1737 = vmatmul.bf16.gmra.mxu0 %v1636
      %v1738 = vpop.f32.mrf.mxu0
      %v1739 = vadd.f32 0.0, %v1738
      %v1740 = vpop.f32.mrf.mxu0
      %v1741 = vadd.f32 0.0, %v1740
      %1742 = vdwg.mxu0
      %v1743 = vadd.f32 %v1533, %v1655
      %v1744 = vadd.f32 %v1534, %v1704
      %v1745 = vadd.f32 %v1535, %v1657
      %v1746 = vadd.f32 %v1536, %v1706
      %v1747 = vadd.f32 %v1537, %v1660
      %v1748 = vadd.f32 %v1538, %v1709
      %v1749 = vadd.f32 %v1539, %v1662
      %v1750 = vadd.f32 %v1540, %v1711
      %v1751 = vadd.f32 %v1541, %v1665
      %v1752 = vadd.f32 %v1542, %v1714
      %v1753 = vadd.f32 %v1543, %v1667
      %v1754 = vadd.f32 %v1544, %v1716
      %v1755 = vadd.f32 %v1545, %v1670
      %v1756 = vadd.f32 %v1546, %v1719
      %v1757 = vadd.f32 %v1547, %v1672
      %v1758 = vadd.f32 %v1548, %v1721
      %v1759 = vadd.f32 %v1549, %v1675
      %v1760 = vadd.f32 %v1550, %v1724
      %v1761 = vadd.f32 %v1551, %v1677
      %v1762 = vadd.f32 %v1552, %v1726
      %v1763 = vadd.f32 %v1553, %v1680
      %v1764 = vadd.f32 %v1554, %v1729
      %v1765 = vadd.f32 %v1555, %v1682
      %v1766 = vadd.f32 %v1556, %v1731
      %v1767 = vadd.f32 %v1557, %v1685
      %v1768 = vadd.f32 %v1558, %v1734
      %v1769 = vadd.f32 %v1559, %v1687
      %v1770 = vadd.f32 %v1560, %v1736
      %v1771 = vadd.f32 %v1561, %v1690
      %v1772 = vadd.f32 %v1562, %v1739
      %v1773 = vadd.f32 %v1563, %v1692
      %v1774 = vadd.f32 %v1564, %v1741
      %1775 = vst [vmem:[#allocation2] sm:$0xff] %v1743
      %1776 = vst [vmem:[#allocation2 + $0x8] sm:$0xff] %v1744
      %1777 = vst [vmem:[#allocation2 + $0x10] sm:$0xff] %v1745
      %1778 = vst [vmem:[#allocation2 + $0x18] sm:$0xff] %v1746
      %1779 = vst [vmem:[#allocation2 + $0x20] sm:$0xff] %v1747
      %1780 = vst [vmem:[#allocation2 + $0x28] sm:$0xff] %v1748
      %1781 = vst [vmem:[#allocation2 + $0x30] sm:$0xff] %v1749
      %1782 = vst [vmem:[#allocation2 + $0x38] sm:$0xff] %v1750
      %1783 = vst [vmem:[#allocation2 + $0x40] sm:$0xff] %v1751
      %1784 = vst [vmem:[#allocation2 + $0x48] sm:$0xff] %v1752
      %1785 = vst [vmem:[#allocation2 + $0x50] sm:$0xff] %v1753
      %1786 = vst [vmem:[#allocation2 + $0x58] sm:$0xff] %v1754
      %1787 = vst [vmem:[#allocation2 + $0x60] sm:$0xff] %v1755
      %1788 = vst [vmem:[#allocation2 + $0x68] sm:$0xff] %v1756
      %1789 = vst [vmem:[#allocation2 + $0x70] sm:$0xff] %v1757
      %1790 = vst [vmem:[#allocation2 + $0x78] sm:$0xff] %v1758
      %1791 = vst [vmem:[#allocation2 + $0x80] sm:$0xff] %v1759
      %1792 = vst [vmem:[#allocation2 + $0x88] sm:$0xff] %v1760
      %1793 = vst [vmem:[#allocation2 + $0x90] sm:$0xff] %v1761
      %1794 = vst [vmem:[#allocation2 + $0x98] sm:$0xff] %v1762
      %1795 = vst [vmem:[#allocation2 + $0xa0] sm:$0xff] %v1763
      %1796 = vst [vmem:[#allocation2 + $0xa8] sm:$0xff] %v1764
      %1797 = vst [vmem:[#allocation2 + $0xb0] sm:$0xff] %v1765
      %1798 = vst [vmem:[#allocation2 + $0xb8] sm:$0xff] %v1766
      %1799 = vst [vmem:[#allocation2 + $0xc0] sm:$0xff] %v1767
      %1800 = vst [vmem:[#allocation2 + $0xc8] sm:$0xff] %v1768
      %1801 = vst [vmem:[#allocation2 + $0xd0] sm:$0xff] %v1769
      %1802 = vst [vmem:[#allocation2 + $0xd8] sm:$0xff] %v1770
      %1803 = vst [vmem:[#allocation2 + $0xe0] sm:$0xff] %v1771
      %1804 = vst [vmem:[#allocation2 + $0xe8] sm:$0xff] %v1772
      %1805 = vst [vmem:[#allocation2 + $0xf0] sm:$0xff] %v1773
      %1806 = vst [vmem:[#allocation2 + $0xf8] sm:$0xff] %v1774
      %p1807 = scmp.eq.s32.totalorder %s23, 8
      // Predicated region
      $region41: #{double_deform_conv_forward.7} parent=35 // pred_check
        %p1808 = pneg %p1807
      $region42: #{double_deform_conv_forward.7} parent=35 // pred_check_branch
        %1810 = sbr.rel (%p1808) target = $region44
      $region43: #{double_deform_conv_forward.7} parent=35 // pred_region
        %v1811 = vld [vmem:[#allocation2] sm:$0xff]
        %v1812 = vld [vmem:[#allocation2 + $0x8] sm:$0xff]
        %v1813 = vld [vmem:[#allocation2 + $0x10] sm:$0xff]
        %v1814 = vld [vmem:[#allocation2 + $0x18] sm:$0xff]
        %v1815 = vld [vmem:[#allocation2 + $0x20] sm:$0xff]
        %v1816 = vld [vmem:[#allocation2 + $0x28] sm:$0xff]
        %v1817 = vld [vmem:[#allocation2 + $0x30] sm:$0xff]
        %v1818 = vld [vmem:[#allocation2 + $0x38] sm:$0xff]
        %v1819 = vld [vmem:[#allocation2 + $0x40] sm:$0xff]
        %v1820 = vld [vmem:[#allocation2 + $0x48] sm:$0xff]
        %v1821 = vld [vmem:[#allocation2 + $0x50] sm:$0xff]
        %v1822 = vld [vmem:[#allocation2 + $0x58] sm:$0xff]
        %v1823 = vld [vmem:[#allocation2 + $0x60] sm:$0xff]
        %v1824 = vld [vmem:[#allocation2 + $0x68] sm:$0xff]
        %v1825 = vld [vmem:[#allocation2 + $0x70] sm:$0xff]
        %v1826 = vld [vmem:[#allocation2 + $0x78] sm:$0xff]
        %v1827 = vld [vmem:[#allocation2 + $0x80] sm:$0xff]
        %v1828 = vld [vmem:[#allocation2 + $0x88] sm:$0xff]
        %v1829 = vld [vmem:[#allocation2 + $0x90] sm:$0xff]
        %v1830 = vld [vmem:[#allocation2 + $0x98] sm:$0xff]
        %v1831 = vld [vmem:[#allocation2 + $0xa0] sm:$0xff]
        %v1832 = vld [vmem:[#allocation2 + $0xa8] sm:$0xff]
        %v1833 = vld [vmem:[#allocation2 + $0xb0] sm:$0xff]
        %v1834 = vld [vmem:[#allocation2 + $0xb8] sm:$0xff]
        %v1835 = vld [vmem:[#allocation2 + $0xc0] sm:$0xff]
        %v1836 = vld [vmem:[#allocation2 + $0xc8] sm:$0xff]
        %v1837 = vld [vmem:[#allocation2 + $0xd0] sm:$0xff]
        %v1838 = vld [vmem:[#allocation2 + $0xd8] sm:$0xff]
        %v1839 = vld [vmem:[#allocation2 + $0xe0] sm:$0xff]
        %v1840 = vld [vmem:[#allocation2 + $0xe8] sm:$0xff]
        %v1841 = vld [vmem:[#allocation2 + $0xf0] sm:$0xff]
        %v1842 = vld [vmem:[#allocation2 + $0xf8] sm:$0xff]
        %1843 = vst [vmem:[%s366] sm:$0xff] %v1811
        %1844 = vst [vmem:[%s366 + $0x8] sm:$0xff] %v1812
        %1845 = vst [vmem:[%s366 + $0x10] sm:$0xff] %v1813
        %1846 = vst [vmem:[%s366 + $0x18] sm:$0xff] %v1814
        %1847 = vst [vmem:[%s366 + $0x20] sm:$0xff] %v1815
        %1848 = vst [vmem:[%s366 + $0x28] sm:$0xff] %v1816
        %1849 = vst [vmem:[%s366 + $0x30] sm:$0xff] %v1817
        %1850 = vst [vmem:[%s366 + $0x38] sm:$0xff] %v1818
        %1851 = vst [vmem:[%s366 + $0x40] sm:$0xff] %v1819
        %1852 = vst [vmem:[%s366 + $0x48] sm:$0xff] %v1820
        %1853 = vst [vmem:[%s366 + $0x50] sm:$0xff] %v1821
        %1854 = vst [vmem:[%s366 + $0x58] sm:$0xff] %v1822
        %1855 = vst [vmem:[%s366 + $0x60] sm:$0xff] %v1823
        %1856 = vst [vmem:[%s366 + $0x68] sm:$0xff] %v1824
        %1857 = vst [vmem:[%s366 + $0x70] sm:$0xff] %v1825
        %1858 = vst [vmem:[%s366 + $0x78] sm:$0xff] %v1826
        %1859 = vst [vmem:[%s366 + $0x80] sm:$0xff] %v1827
        %1860 = vst [vmem:[%s366 + $0x88] sm:$0xff] %v1828
        %1861 = vst [vmem:[%s366 + $0x90] sm:$0xff] %v1829
        %1862 = vst [vmem:[%s366 + $0x98] sm:$0xff] %v1830
        %1863 = vst [vmem:[%s366 + $0xa0] sm:$0xff] %v1831
        %1864 = vst [vmem:[%s366 + $0xa8] sm:$0xff] %v1832
        %1865 = vst [vmem:[%s366 + $0xb0] sm:$0xff] %v1833
        %1866 = vst [vmem:[%s366 + $0xb8] sm:$0xff] %v1834
        %1867 = vst [vmem:[%s366 + $0xc0] sm:$0xff] %v1835
        %1868 = vst [vmem:[%s366 + $0xc8] sm:$0xff] %v1836
        %1869 = vst [vmem:[%s366 + $0xd0] sm:$0xff] %v1837
        %1870 = vst [vmem:[%s366 + $0xd8] sm:$0xff] %v1838
        %1871 = vst [vmem:[%s366 + $0xe0] sm:$0xff] %v1839
        %1872 = vst [vmem:[%s366 + $0xe8] sm:$0xff] %v1840
        %1873 = vst [vmem:[%s366 + $0xf0] sm:$0xff] %v1841
        %1874 = vst [vmem:[%s366 + $0xf8] sm:$0xff] %v1842
        %v1875 = vadd.f32 %v1811, %v1812
        %1876 = vadd.xlane.f32.xlu0 %v1875
        %v1877 = vpop.xlane.xlu0 %1876
        %v1878 = vadd.f32 %v1813, %v1814
        %1879 = vadd.xlane.f32.xlu0 %v1878
        %v1880 = vpop.xlane.xlu0 %1879
        %v1881 = vadd.f32 %v1815, %v1816
        %1882 = vadd.xlane.f32.xlu0 %v1881
        %v1883 = vpop.xlane.xlu0 %1882
        %v1884 = vadd.f32 %v1817, %v1818
        %1885 = vadd.xlane.f32.xlu0 %v1884
        %v1886 = vpop.xlane.xlu0 %1885
        %v1887 = vadd.f32 %v1819, %v1820
        %1888 = vadd.xlane.f32.xlu0 %v1887
        %v1889 = vpop.xlane.xlu0 %1888
        %v1890 = vadd.f32 %v1821, %v1822
        %1891 = vadd.xlane.f32.xlu0 %v1890
        %v1892 = vpop.xlane.xlu0 %1891
        %v1893 = vadd.f32 %v1823, %v1824
        %1894 = vadd.xlane.f32.xlu0 %v1893
        %v1895 = vpop.xlane.xlu0 %1894
        %v1896 = vadd.f32 %v1825, %v1826
        %1897 = vadd.xlane.f32.xlu0 %v1896
        %v1898 = vpop.xlane.xlu0 %1897
        %v1899 = vadd.f32 %v1827, %v1828
        %1900 = vadd.xlane.f32.xlu0 %v1899
        %v1901 = vpop.xlane.xlu0 %1900
        %v1902 = vadd.f32 %v1829, %v1830
        %1903 = vadd.xlane.f32.xlu0 %v1902
        %v1904 = vpop.xlane.xlu0 %1903
        %v1905 = vadd.f32 %v1831, %v1832
        %1906 = vadd.xlane.f32.xlu0 %v1905
        %v1907 = vpop.xlane.xlu0 %1906
        %v1908 = vadd.f32 %v1833, %v1834
        %1909 = vadd.xlane.f32.xlu0 %v1908
        %v1910 = vpop.xlane.xlu0 %1909
        %v1911 = vadd.f32 %v1835, %v1836
        %1912 = vadd.xlane.f32.xlu0 %v1911
        %v1913 = vpop.xlane.xlu0 %1912
        %v1914 = vadd.f32 %v1837, %v1838
        %1915 = vadd.xlane.f32.xlu0 %v1914
        %v1916 = vpop.xlane.xlu0 %1915
        %v1917 = vadd.f32 %v1839, %v1840
        %1918 = vadd.xlane.f32.xlu0 %v1917
        %v1919 = vpop.xlane.xlu0 %1918
        %v1920 = vadd.f32 %v1841, %v1842
        %1921 = vadd.xlane.f32.xlu0 %v1920
        %v1922 = vpop.xlane.xlu0 %1921
        %vm1923 = vcmask 7168
        %1924 = vst.msk [vmem:[%s371] sm:$0xff] %vm1923, %v1877
        %1925 = vst.msk [vmem:[%s371 + $0x8] sm:$0xff] %vm1923, %v1880
        %1926 = vst.msk [vmem:[%s371 + $0x10] sm:$0xff] %vm1923, %v1883
        %1927 = vst.msk [vmem:[%s371 + $0x18] sm:$0xff] %vm1923, %v1886
        %1928 = vst.msk [vmem:[%s371 + $0x20] sm:$0xff] %vm1923, %v1889
        %1929 = vst.msk [vmem:[%s371 + $0x28] sm:$0xff] %vm1923, %v1892
        %1930 = vst.msk [vmem:[%s371 + $0x30] sm:$0xff] %vm1923, %v1895
        %1931 = vst.msk [vmem:[%s371 + $0x38] sm:$0xff] %vm1923, %v1898
        %1932 = vst.msk [vmem:[%s371 + $0x40] sm:$0xff] %vm1923, %v1901
        %1933 = vst.msk [vmem:[%s371 + $0x48] sm:$0xff] %vm1923, %v1904
        %1934 = vst.msk [vmem:[%s371 + $0x50] sm:$0xff] %vm1923, %v1907
        %1935 = vst.msk [vmem:[%s371 + $0x58] sm:$0xff] %vm1923, %v1910
        %1936 = vst.msk [vmem:[%s371 + $0x60] sm:$0xff] %vm1923, %v1913
        %1937 = vst.msk [vmem:[%s371 + $0x68] sm:$0xff] %vm1923, %v1916
        %1938 = vst.msk [vmem:[%s371 + $0x70] sm:$0xff] %vm1923, %v1919
        %1939 = vst.msk [vmem:[%s371 + $0x78] sm:$0xff] %vm1923, %v1922
        %v1940 = vmul.f32 %v1811, %v1811
        %v1941 = vmul.f32 %v1812, %v1812
        %v1942 = vmul.f32 %v1813, %v1813
        %v1943 = vmul.f32 %v1814, %v1814
        %v1944 = vmul.f32 %v1815, %v1815
        %v1945 = vmul.f32 %v1816, %v1816
        %v1946 = vmul.f32 %v1817, %v1817
        %v1947 = vmul.f32 %v1818, %v1818
        %v1948 = vmul.f32 %v1819, %v1819
        %v1949 = vmul.f32 %v1820, %v1820
        %v1950 = vmul.f32 %v1821, %v1821
        %v1951 = vmul.f32 %v1822, %v1822
        %v1952 = vmul.f32 %v1823, %v1823
        %v1953 = vmul.f32 %v1824, %v1824
        %v1954 = vmul.f32 %v1825, %v1825
        %v1955 = vmul.f32 %v1826, %v1826
        %v1956 = vmul.f32 %v1827, %v1827
        %v1957 = vmul.f32 %v1828, %v1828
        %v1958 = vmul.f32 %v1829, %v1829
        %v1959 = vmul.f32 %v1830, %v1830
        %v1960 = vmul.f32 %v1831, %v1831
        %v1961 = vmul.f32 %v1832, %v1832
        %v1962 = vmul.f32 %v1833, %v1833
        %v1963 = vmul.f32 %v1834, %v1834
        %v1964 = vmul.f32 %v1835, %v1835
        %v1965 = vmul.f32 %v1836, %v1836
        %v1966 = vmul.f32 %v1837, %v1837
        %v1967 = vmul.f32 %v1838, %v1838
        %v1968 = vmul.f32 %v1839, %v1839
        %v1969 = vmul.f32 %v1840, %v1840
        %v1970 = vmul.f32 %v1841, %v1841
        %v1971 = vmul.f32 %v1842, %v1842
        %v1972 = vadd.f32 %v1940, %v1941
        %1973 = vadd.xlane.f32.xlu0 %v1972
        %v1974 = vpop.xlane.xlu0 %1973
        %v1975 = vadd.f32 %v1942, %v1943
        %1976 = vadd.xlane.f32.xlu0 %v1975
        %v1977 = vpop.xlane.xlu0 %1976
        %v1978 = vadd.f32 %v1944, %v1945
        %1979 = vadd.xlane.f32.xlu0 %v1978
        %v1980 = vpop.xlane.xlu0 %1979
        %v1981 = vadd.f32 %v1946, %v1947
        %1982 = vadd.xlane.f32.xlu0 %v1981
        %v1983 = vpop.xlane.xlu0 %1982
        %v1984 = vadd.f32 %v1948, %v1949
        %1985 = vadd.xlane.f32.xlu0 %v1984
        %v1986 = vpop.xlane.xlu0 %1985
        %v1987 = vadd.f32 %v1950, %v1951
        %1988 = vadd.xlane.f32.xlu0 %v1987
        %v1989 = vpop.xlane.xlu0 %1988
        %v1990 = vadd.f32 %v1952, %v1953
        %1991 = vadd.xlane.f32.xlu0 %v1990
        %v1992 = vpop.xlane.xlu0 %1991
        %v1993 = vadd.f32 %v1954, %v1955
        %1994 = vadd.xlane.f32.xlu0 %v1993
        %v1995 = vpop.xlane.xlu0 %1994
        %v1996 = vadd.f32 %v1956, %v1957
        %1997 = vadd.xlane.f32.xlu0 %v1996
        %v1998 = vpop.xlane.xlu0 %1997
        %v1999 = vadd.f32 %v1958, %v1959
        %2000 = vadd.xlane.f32.xlu0 %v1999
        %v2001 = vpop.xlane.xlu0 %2000
        %v2002 = vadd.f32 %v1960, %v1961
        %2003 = vadd.xlane.f32.xlu0 %v2002
        %v2004 = vpop.xlane.xlu0 %2003
        %v2005 = vadd.f32 %v1962, %v1963
        %2006 = vadd.xlane.f32.xlu0 %v2005
        %v2007 = vpop.xlane.xlu0 %2006
        %v2008 = vadd.f32 %v1964, %v1965
        %2009 = vadd.xlane.f32.xlu0 %v2008
        %v2010 = vpop.xlane.xlu0 %2009
        %v2011 = vadd.f32 %v1966, %v1967
        %2012 = vadd.xlane.f32.xlu0 %v2011
        %v2013 = vpop.xlane.xlu0 %2012
        %v2014 = vadd.f32 %v1968, %v1969
        %2015 = vadd.xlane.f32.xlu0 %v2014
        %v2016 = vpop.xlane.xlu0 %2015
        %v2017 = vadd.f32 %v1970, %v1971
        %2018 = vadd.xlane.f32.xlu0 %v2017
        %v2019 = vpop.xlane.xlu0 %2018
        %2020 = vst.msk [vmem:[%s376] sm:$0xff] %vm1923, %v1974
        %2021 = vst.msk [vmem:[%s376 + $0x8] sm:$0xff] %vm1923, %v1977
        %2022 = vst.msk [vmem:[%s376 + $0x10] sm:$0xff] %vm1923, %v1980
        %2023 = vst.msk [vmem:[%s376 + $0x18] sm:$0xff] %vm1923, %v1983
        %2024 = vst.msk [vmem:[%s376 + $0x20] sm:$0xff] %vm1923, %v1986
        %2025 = vst.msk [vmem:[%s376 + $0x28] sm:$0xff] %vm1923, %v1989
        %2026 = vst.msk [vmem:[%s376 + $0x30] sm:$0xff] %vm1923, %v1992
        %2027 = vst.msk [vmem:[%s376 + $0x38] sm:$0xff] %vm1923, %v1995
        %2028 = vst.msk [vmem:[%s376 + $0x40] sm:$0xff] %vm1923, %v1998
        %2029 = vst.msk [vmem:[%s376 + $0x48] sm:$0xff] %vm1923, %v2001
        %2030 = vst.msk [vmem:[%s376 + $0x50] sm:$0xff] %vm1923, %v2004
        %2031 = vst.msk [vmem:[%s376 + $0x58] sm:$0xff] %vm1923, %v2007
        %2032 = vst.msk [vmem:[%s376 + $0x60] sm:$0xff] %vm1923, %v2010
        %2033 = vst.msk [vmem:[%s376 + $0x68] sm:$0xff] %vm1923, %v2013
        %2034 = vst.msk [vmem:[%s376 + $0x70] sm:$0xff] %vm1923, %v2016
        %2035 = vst.msk [vmem:[%s376 + $0x78] sm:$0xff] %vm1923, %v2019
      $region44: #{double_deform_conv_forward.7} parent=35 // pred_fallthru
        _
      %p2036 = scmp.lt.s32.totalorder %s22, 1
      %s2037 = scalar_select %p2036, %s22, 1
      %s2038 = smul.addr %s2037, 32
      %s2039 = smul.addr %s2038, 8
      %s2040 = scalar_lea.vmem %s4, %s2039
      %p2041 = scmp.lt.s32.totalorder %s22, 1
      %s2042 = scalar_select %p2041, %s22, 1
      %s2043 = smul.addr %s2042, 16
      %s2044 = smul.addr %s2043, 8
      %s2045 = scalar_lea.vmem %s5, %s2044
      %p2046 = scmp.lt.s32.totalorder %s22, 1
      %s2047 = scalar_select %p2046, %s22, 1
      %s2048 = smul.addr %s2047, 16
      %s2049 = smul.addr %s2048, 8
      %s2050 = scalar_lea.vmem %s6, %s2049
      // Predicated region
      $region45: #{double_deform_conv_forward.7} parent=35 // pred_check
        %p2051 = pneg %p156
      $region46: #{double_deform_conv_forward.7} parent=35 // pred_check_branch
        %2053 = sbr.rel (%p2051) target = $region48
      $region47: #{double_deform_conv_forward.7} parent=35 // pred_region
        _
      $region48: #{double_deform_conv_forward.7} parent=35 // pred_fallthru
        _
      // Predicated region
      $region49: #{double_deform_conv_forward.7} parent=35 // pred_check
        %p2054 = pneg %p182
      $region50: #{double_deform_conv_forward.7} parent=35 // pred_check_branch
        %2056 = sbr.rel (%p2054) target = $region52
      $region51: #{double_deform_conv_forward.7} parent=35 // pred_region
        _
      $region52: #{double_deform_conv_forward.7} parent=35 // pred_fallthru
        _
      // Predicated region
      $region53: #{double_deform_conv_forward.7} parent=35 // pred_check
        %p2057 = pneg %p208
      $region54: #{double_deform_conv_forward.7} parent=35 // pred_check_branch
        %2059 = sbr.rel (%p2057) target = $region56
      $region55: #{double_deform_conv_forward.7} parent=35 // pred_region
        _
      $region56: #{double_deform_conv_forward.7} parent=35 // pred_fallthru
        _
    $region36: #{double_deform_conv_forward.7} parent=5 // pred_fallthru
      _
    %p2060 = scmp.le.s32.totalorder 2, %s13
    // Predicated region
    $region57: #{double_deform_conv_forward.7} parent=5 // pred_check
      %p2061 = pneg %p2060
    $region58: #{double_deform_conv_forward.7} parent=5 // pred_check_branch
      %2063 = sbr.rel (%p2061) target = $region60
    $region59: #{double_deform_conv_forward.7} parent=5 // pred_region
      %s2064 = ssub.s32 %s13, 2
      // Predicated region
      $region61: #{double_deform_conv_forward.7} parent=59 // pred_check
        %p2065 = pneg %p162
      $region62: #{double_deform_conv_forward.7} parent=59 // pred_check_branch
        %2067 = sbr.rel (%p2065) target = $region64
      $region63: #{double_deform_conv_forward.7} parent=59 // pred_region
        %p2068 = scmp.lt.s32.totalorder %s24, 1
        %s2069 = scalar_select %p2068, %s24, 1
        %s2070 = smul.addr %s2069, 32
        %s2071 = smul.addr %s2070, 8
        %s2072 = scalar_lea.vmem %s4, %s2071
      $region64: #{double_deform_conv_forward.7} parent=59 // pred_fallthru
        _
      // Predicated region
      $region65: #{double_deform_conv_forward.7} parent=59 // pred_check
        %p2073 = pneg %p188
      $region66: #{double_deform_conv_forward.7} parent=59 // pred_check_branch
        %2075 = sbr.rel (%p2073) target = $region68
      $region67: #{double_deform_conv_forward.7} parent=59 // pred_region
        %p2076 = scmp.lt.s32.totalorder %s24, 1
        %s2077 = scalar_select %p2076, %s24, 1
        %s2078 = smul.addr %s2077, 16
        %s2079 = smul.addr %s2078, 8
        %s2080 = scalar_lea.vmem %s5, %s2079
      $region68: #{double_deform_conv_forward.7} parent=59 // pred_fallthru
        _
      // Predicated region
      $region69: #{double_deform_conv_forward.7} parent=59 // pred_check
        %p2081 = pneg %p214
      $region70: #{double_deform_conv_forward.7} parent=59 // pred_check_branch
        %2083 = sbr.rel (%p2081) target = $region72
      $region71: #{double_deform_conv_forward.7} parent=59 // pred_region
        %p2084 = scmp.lt.s32.totalorder %s24, 1
        %s2085 = scalar_select %p2084, %s24, 1
        %s2086 = smul.addr %s2085, 16
        %s2087 = smul.addr %s2086, 8
        %s2088 = scalar_lea.vmem %s6, %s2087
      $region72: #{double_deform_conv_forward.7} parent=59 // pred_fallthru
        _
    $region60: #{double_deform_conv_forward.7} parent=5 // pred_fallthru
      _
  $region6: #{double_deform_conv_forward.7} parent=0 // loop_footer
    %s17 = sadd.s32 1, %s13
  $region7: #{double_deform_conv_forward.7} parent=0 // loop_footer_branch
    %12 = sbr.rel target = $region3
  $region8: #{double_deform_conv_forward.7} parent=0 // loop_exit
    _

</llo_original>
